<compile_context>
chip_gen: v6e
topology: v6e:2x2x1
jax: 0.10.0
libtpu: 0.0.40
codegen_flags: <defaults>
</compile_context>

<pallas_src>
import functools

import jax
import jax.numpy as jnp
from jax.experimental import pallas as pl
from jax.experimental.pallas import tpu as pltpu

BN_EPS = 1e-5
_WEIGHT_KEYS = ('wq', 'wk', 'wv', 'wo', 'w1', 'w2')
_PARAM_ORDER = ('wq', 'bq', 'wk', 'bk', 'wv', 'bv', 'wo', 'bo',
                'w1', 'b1', 'w2', 'b2', 'g1', 'be1', 'g2', 'be2')


def _gelu(x):
    # TODO(synk): torch nn.GELU() default is erf-exact; tanh-approx is used because erf lowering
    # on Mosaic is not guaranteed -> ~1e-3 max drift vs torch.
    return jax.nn.gelu(x, approximate=True)


def _batchnorm_train(x, gamma, beta):
    # BatchNorm1d(d_model) in training mode on (samples=B*L, features=D), computed in ONE pass:
    # sum and sum-of-squares together, var = E[x^2] - E[x]^2 (biased), eps=1e-5.
    n = x.shape[0]
    s1 = jnp.sum(x, axis=0, keepdims=True)
    s2 = jnp.sum(x * x, axis=0, keepdims=True)
    mu = s1 * (1.0 / n)
    var = jnp.maximum(s2 * (1.0 / n) - mu * mu, 0.0)
    return (x - mu) * jax.lax.rsqrt(var + BN_EPS) * gamma + beta


def encoder_kernel(src_ref,
                   wq_ref, bq_ref, wk_ref, bk_ref, wv_ref, bv_ref,
                   wo_ref, bo_ref, w1_ref, b1_ref, w2_ref, b2_ref,
                   g1_ref, be1_ref, g2_ref, be2_ref,
                   out_ref, o_scr, *, n_heads, n_layers):
    B, L, D = src_ref.shape
    dk = D // n_heads
    scale = float(dk) ** -0.5
    bf16 = jnp.bfloat16

    # Activations live in f32; cast only at the MXU boundary.
    x = src_ref[...].reshape(B * L, D)

    for layer in range(n_layers):          # all layers fused: weights are VMEM-resident
        wq, wk, wv, wo = wq_ref[layer], wk_ref[layer], wv_ref[layer], wo_ref[layer]
        w1, w2 = w1_ref[layer], w2_ref[layer]
        bq, bk, bv, bo = bq_ref[layer], bk_ref[layer], bv_ref[layer], bo_ref[layer]
        b1, b2 = b1_ref[layer], b2_ref[layer]
        g1, be1 = g1_ref[layer], be1_ref[layer]
        g2, be2 = g2_ref[layer], be2_ref[layer]

        # --- QKV projections: bf16 operands on the MXU, f32 accumulation ---
        xb = x.astype(bf16)
        q = jnp.dot(xb, wq, preferred_element_type=jnp.float32) + bq
        k = jnp.dot(xb, wk, preferred_element_type=jnp.float32) + bk
        v = jnp.dot(xb, wv, preferred_element_type=jnp.float32) + bv

        # --- per-head scaled dot-product attention ---
        # Head outputs are stored into a VMEM scratch at their natural lane offsets, so the
        # output projection is ONE dense (B*L,D)@(D,D) matmul with the bias added once.
        # Rank-3 einsums (batch = B) are used on purpose: they are Mosaic-safe and avoid a
        # head-major relayout of the (B,L,H,dk) tensor.
        for h in range(n_heads):
            sl = slice(h * dk, (h + 1) * dk)
            qh = q[:, sl].reshape(B, L, dk).astype(bf16)
            kh = k[:, sl].reshape(B, L, dk).astype(bf16)
            vh = v[:, sl].reshape(B, L, dk).astype(bf16)
            s = jnp.einsum('bld,bmd->blm', qh, kh,
                           preferred_element_type=jnp.float32) * scale      # (B, L, L)
            s = s - jnp.max(s, axis=-1, keepdims=True)
            e = jnp.exp(s)
            # divide -> EUP reciprocal, off the VALU critical path
            a = e * pl.reciprocal(jnp.sum(e, axis=-1, keepdims=True), approx=True)
            oh = jnp.einsum('blm,bmd->bld', a.astype(bf16), vh,
                            preferred_element_type=jnp.float32)             # (B, L, dk)
            o_scr[:, sl] = oh.reshape(B * L, dk)

        attn = jnp.dot(o_scr[...].astype(bf16), wo,
                       preferred_element_type=jnp.float32) + bo

        # --- residual + BatchNorm (attn), f32 elementwise ---
        y = _batchnorm_train(x + attn, g1, be1)

        # --- feed-forward: Linear -> GELU -> Linear ---
        h1 = _gelu(jnp.dot(y.astype(bf16), w1, preferred_element_type=jnp.float32) + b1)
        ff = jnp.dot(h1.astype(bf16), w2, preferred_element_type=jnp.float32) + b2

        # --- residual + BatchNorm (ffn) ---
        x = _batchnorm_train(y + ff, g2, be2)

    out_ref[...] = x.reshape(B, L, D)


def encoder_pallas(x, layer_params, n_heads):
    B, L, D = x.shape
    n_layers = len(layer_params)

    # Stack per-layer params along a leading n_layers axis; matmul weights pre-cast to bf16
    # (MXU-native on v5e/v6e/v7x, halves weight VMEM/HBM traffic); biases & BN affine stay f32.
    stacked = {k: jnp.stack([p[k] for p in layer_params], axis=0) for k in layer_params[0]}
    for k in _WEIGHT_KEYS:
        stacked[k] = stacked[k].astype(jnp.bfloat16)
    args = (x,) + tuple(stacked[k] for k in _PARAM_ORDER)

    # TODO(synk): for large B*L / long L, grid over row tiles (parallel, for v7x's 2 TCs and
    # DMA pipelining) with flash-style key blocking and a two-pass BatchNorm (stats kernel +
    # apply kernel) — BatchNorm statistics span all B*L rows, so a naive row grid would change
    # results. At these small shapes everything fits comfortably in VMEM as a single call.
    return pl.pallas_call(
        functools.partial(encoder_kernel, n_heads=n_heads, n_layers=n_layers),
        out_shape=jax.ShapeDtypeStruct((B, L, D), jnp.float32),
        in_specs=[pl.BlockSpec(memory_space=pltpu.MemorySpace.VMEM)] * len(args),
        out_specs=pl.BlockSpec(memory_space=pltpu.MemorySpace.VMEM),
        scratch_shapes=[pltpu.VMEM((B * L, D), jnp.float32)],
    )(*args)


# ----------------------- pure-JAX reference -----------------------
def _mm(a, b, dt):
    return jnp.dot(a.astype(dt), b.astype(dt), preferred_element_type=jnp.float32)


def encoder_layer_ref(x, p, n_heads, mm_dtype=jnp.float32):
    B, L, D = x.shape
    dk = D // n_heads
    x2 = x.reshape(B * L, D)
    q = _mm(x2, p['wq'], mm_dtype) + p['bq']
    k = _mm(x2, p['wk'], mm_dtype) + p['bk']
    v = _mm(x2, p['wv'], mm_dtype) + p['bv']
    qh = q.reshape(B, L, n_heads, dk).transpose(0, 2, 1, 3)
    kh = k.reshape(B, L, n_heads, dk).transpose(0, 2, 1, 3)
    vh = v.reshape(B, L, n_heads, dk).transpose(0, 2, 1, 3)
    s = jnp.einsum('bhld,bhmd->bhlm', qh.astype(mm_dtype), kh.astype(mm_dtype),
                   preferred_element_type=jnp.float32) * (dk ** -0.5)
    a = jax.nn.softmax(s, axis=-1)
    o = jnp.einsum('bhlm,bhmd->bhld', a.astype(mm_dtype), vh.astype(mm_dtype),
                   preferred_element_type=jnp.float32)
    o = o.transpose(0, 2, 1, 3).reshape(B * L, D)
    o = _mm(o, p['wo'], mm_dtype) + p['bo']
    y = _batchnorm_train(x2 + o, p['g1'], p['be1'])
    h1 = _gelu(_mm(y, p['w1'], mm_dtype) + p['b1'])
    ff = _mm(h1, p['w2'], mm_dtype) + p['b2']
    z = _batchnorm_train(y + ff, p['g2'], p['be2'])
    return z.reshape(B, L, D)


def encoder_ref(x, layer_params, n_heads, mm_dtype=jnp.float32):
    out = x
    for p in layer_params:
        out = encoder_layer_ref(out, p, n_heads, mm_dtype)
    return out


# ----------------------- deterministic parameter init -----------------------
def init_layer_params(key, d_model, d_ff):
    ks = jax.random.split(key, 12)

    def linear(kw, kb, fan_in, fan_out):
        lim = 1.0 / (fan_in ** 0.5)
        w = jax.random.uniform(kw, (fan_in, fan_out), jnp.float32, -lim, lim)
        b = jax.random.uniform(kb, (1, fan_out), jnp.float32, -lim, lim)
        return w, b

    wq, bq = linear(ks[0], ks[1], d_model, d_model)
    wk, bk = linear(ks[2], ks[3], d_model, d_model)
    wv, bv = linear(ks[4], ks[5], d_model, d_model)
    wo, bo = linear(ks[6], ks[7], d_model, d_model)
    w1, b1 = linear(ks[8], ks[9], d_model, d_ff)
    w2, b2 = linear(ks[10], ks[11], d_ff, d_model)
    return dict(
        wq=wq, bq=bq, wk=wk, bk=bk, wv=wv, bv=bv, wo=wo, bo=bo,
        w1=w1, b1=b1, w2=w2, b2=b2,
        # BatchNorm affine params: PyTorch default init (weight=1, bias=0)
        g1=jnp.ones((1, d_model), jnp.float32), be1=jnp.zeros((1, d_model), jnp.float32),
        g2=jnp.ones((1, d_model), jnp.float32), be2=jnp.zeros((1, d_model), jnp.float32),
    )


if __name__ == "__main__":
    B, L, D = 2, 8, 32          # bs, q_len, d_model
    n_heads = 4
    d_ff = 64
    n_layers = 2

    root = jax.random.PRNGKey(0)
    k_x, *k_layers = jax.random.split(root, 1 + n_layers)
    x = jax.random.normal(k_x, (B, L, D), jnp.float32)
    layer_params = [init_layer_params(k, D, d_ff) for k in k_layers]

    out = jax.block_until_ready(encoder_pallas(x, layer_params, n_heads))

    # (a) reference using the same bf16-operand / f32-accumulation matmul contract -> kernel-logic check
    ref_bf16 = encoder_ref(x, layer_params, n_heads, mm_dtype=jnp.bfloat16)
    # (b) exact f32 reference (= PyTorch forward semantics) -> bound on bf16 MXU drift
    ref_f32 = encoder_ref(x, layer_params, n_heads, mm_dtype=jnp.float32)

    assert out.shape == (B, L, D), out.shape
    assert bool(jnp.all(jnp.isfinite(out)))
    err_bf16 = float(jnp.max(jnp.abs(out - ref_bf16)))
    err_f32 = float(jnp.max(jnp.abs(out - ref_f32)))
    # bf16 matmul operands (f32 accumulation) shift numerics at the ~1e-2 level vs the f32
    # reference; vs a bf16-consistent reference the kernel matches tightly.
    assert err_bf16 < 3e-2, err_bf16
    assert err_f32 < 1.5e-1, err_f32
    print("KERNEL_OK")
</pallas_src>

<mosaic_0001>
module attributes {stable_mosaic.version = 11 : i64} {
  func.func @encoder_kernel(%arg0: memref<2x8x32xf32, #tpu.memory_space<vmem>>, %arg1: memref<2x32x32xbf16, #tpu.memory_space<vmem>>, %arg2: memref<2x1x32xf32, #tpu.memory_space<vmem>>, %arg3: memref<2x32x32xbf16, #tpu.memory_space<vmem>>, %arg4: memref<2x1x32xf32, #tpu.memory_space<vmem>>, %arg5: memref<2x32x32xbf16, #tpu.memory_space<vmem>>, %arg6: memref<2x1x32xf32, #tpu.memory_space<vmem>>, %arg7: memref<2x32x32xbf16, #tpu.memory_space<vmem>>, %arg8: memref<2x1x32xf32, #tpu.memory_space<vmem>>, %arg9: memref<2x32x64xbf16, #tpu.memory_space<vmem>>, %arg10: memref<2x1x64xf32, #tpu.memory_space<vmem>>, %arg11: memref<2x64x32xbf16, #tpu.memory_space<vmem>>, %arg12: memref<2x1x32xf32, #tpu.memory_space<vmem>>, %arg13: memref<2x1x32xf32, #tpu.memory_space<vmem>>, %arg14: memref<2x1x32xf32, #tpu.memory_space<vmem>>, %arg15: memref<2x1x32xf32, #tpu.memory_space<vmem>>, %arg16: memref<2x1x32xf32, #tpu.memory_space<vmem>>, %arg17: memref<2x8x32xf32, #tpu.memory_space<vmem>>, %arg18: memref<16x32xf32, #tpu.memory_space<vmem>>) attributes {dimension_semantics = [], scalar_prefetch = 0 : i64, scratch_operands = 1 : i64, tpu.core_type = #tpu.core_type<tc>} {
    %c0 = arith.constant 0 : index
    %c0_0 = arith.constant 0 : index
    %c0_1 = arith.constant 0 : index
    %0 = vector.load %arg0[%c0, %c0_0, %c0_1] : memref<2x8x32xf32, #tpu.memory_space<vmem>>, vector<2x8x32xf32>
    %1 = vector.shape_cast %0 : vector<2x8x32xf32> to vector<16x32xf32>
    %c0_2 = arith.constant 0 : index
    %c0_3 = arith.constant 0 : index
    %c0_4 = arith.constant 0 : index
    %2 = vector.load %arg1[%c0_2, %c0_3, %c0_4] : memref<2x32x32xbf16, #tpu.memory_space<vmem>>, vector<1x32x32xbf16>
    %3 = vector.shape_cast %2 : vector<1x32x32xbf16> to vector<32x32xbf16>
    %c0_5 = arith.constant 0 : index
    %c0_6 = arith.constant 0 : index
    %c0_7 = arith.constant 0 : index
    %4 = vector.load %arg3[%c0_5, %c0_6, %c0_7] : memref<2x32x32xbf16, #tpu.memory_space<vmem>>, vector<1x32x32xbf16>
    %5 = vector.shape_cast %4 : vector<1x32x32xbf16> to vector<32x32xbf16>
    %c0_8 = arith.constant 0 : index
    %c0_9 = arith.constant 0 : index
    %c0_10 = arith.constant 0 : index
    %6 = vector.load %arg5[%c0_8, %c0_9, %c0_10] : memref<2x32x32xbf16, #tpu.memory_space<vmem>>, vector<1x32x32xbf16>
    %7 = vector.shape_cast %6 : vector<1x32x32xbf16> to vector<32x32xbf16>
    %c0_11 = arith.constant 0 : index
    %c0_12 = arith.constant 0 : index
    %c0_13 = arith.constant 0 : index
    %8 = vector.load %arg7[%c0_11, %c0_12, %c0_13] : memref<2x32x32xbf16, #tpu.memory_space<vmem>>, vector<1x32x32xbf16>
    %9 = vector.shape_cast %8 : vector<1x32x32xbf16> to vector<32x32xbf16>
    %c0_14 = arith.constant 0 : index
    %c0_15 = arith.constant 0 : index
    %c0_16 = arith.constant 0 : index
    %10 = vector.load %arg9[%c0_14, %c0_15, %c0_16] : memref<2x32x64xbf16, #tpu.memory_space<vmem>>, vector<1x32x64xbf16>
    %11 = vector.shape_cast %10 : vector<1x32x64xbf16> to vector<32x64xbf16>
    %c0_17 = arith.constant 0 : index
    %c0_18 = arith.constant 0 : index
    %c0_19 = arith.constant 0 : index
    %12 = vector.load %arg11[%c0_17, %c0_18, %c0_19] : memref<2x64x32xbf16, #tpu.memory_space<vmem>>, vector<1x64x32xbf16>
    %13 = vector.shape_cast %12 : vector<1x64x32xbf16> to vector<64x32xbf16>
    %c0_20 = arith.constant 0 : index
    %c0_21 = arith.constant 0 : index
    %c0_22 = arith.constant 0 : index
    %14 = vector.load %arg2[%c0_20, %c0_21, %c0_22] : memref<2x1x32xf32, #tpu.memory_space<vmem>>, vector<1x1x32xf32>
    %15 = vector.shape_cast %14 : vector<1x1x32xf32> to vector<1x32xf32>
    %c0_23 = arith.constant 0 : index
    %c0_24 = arith.constant 0 : index
    %c0_25 = arith.constant 0 : index
    %16 = vector.load %arg4[%c0_23, %c0_24, %c0_25] : memref<2x1x32xf32, #tpu.memory_space<vmem>>, vector<1x1x32xf32>
    %17 = vector.shape_cast %16 : vector<1x1x32xf32> to vector<1x32xf32>
    %c0_26 = arith.constant 0 : index
    %c0_27 = arith.constant 0 : index
    %c0_28 = arith.constant 0 : index
    %18 = vector.load %arg6[%c0_26, %c0_27, %c0_28] : memref<2x1x32xf32, #tpu.memory_space<vmem>>, vector<1x1x32xf32>
    %19 = vector.shape_cast %18 : vector<1x1x32xf32> to vector<1x32xf32>
    %c0_29 = arith.constant 0 : index
    %c0_30 = arith.constant 0 : index
    %c0_31 = arith.constant 0 : index
    %20 = vector.load %arg8[%c0_29, %c0_30, %c0_31] : memref<2x1x32xf32, #tpu.memory_space<vmem>>, vector<1x1x32xf32>
    %21 = vector.shape_cast %20 : vector<1x1x32xf32> to vector<1x32xf32>
    %c0_32 = arith.constant 0 : index
    %c0_33 = arith.constant 0 : index
    %c0_34 = arith.constant 0 : index
    %22 = vector.load %arg10[%c0_32, %c0_33, %c0_34] : memref<2x1x64xf32, #tpu.memory_space<vmem>>, vector<1x1x64xf32>
    %23 = vector.shape_cast %22 : vector<1x1x64xf32> to vector<1x64xf32>
    %c0_35 = arith.constant 0 : index
    %c0_36 = arith.constant 0 : index
    %c0_37 = arith.constant 0 : index
    %24 = vector.load %arg12[%c0_35, %c0_36, %c0_37] : memref<2x1x32xf32, #tpu.memory_space<vmem>>, vector<1x1x32xf32>
    %25 = vector.shape_cast %24 : vector<1x1x32xf32> to vector<1x32xf32>
    %c0_38 = arith.constant 0 : index
    %c0_39 = arith.constant 0 : index
    %c0_40 = arith.constant 0 : index
    %26 = vector.load %arg13[%c0_38, %c0_39, %c0_40] : memref<2x1x32xf32, #tpu.memory_space<vmem>>, vector<1x1x32xf32>
    %27 = vector.shape_cast %26 : vector<1x1x32xf32> to vector<1x32xf32>
    %c0_41 = arith.constant 0 : index
    %c0_42 = arith.constant 0 : index
    %c0_43 = arith.constant 0 : index
    %28 = vector.load %arg14[%c0_41, %c0_42, %c0_43] : memref<2x1x32xf32, #tpu.memory_space<vmem>>, vector<1x1x32xf32>
    %29 = vector.shape_cast %28 : vector<1x1x32xf32> to vector<1x32xf32>
    %c0_44 = arith.constant 0 : index
    %c0_45 = arith.constant 0 : index
    %c0_46 = arith.constant 0 : index
    %30 = vector.load %arg15[%c0_44, %c0_45, %c0_46] : memref<2x1x32xf32, #tpu.memory_space<vmem>>, vector<1x1x32xf32>
    %31 = vector.shape_cast %30 : vector<1x1x32xf32> to vector<1x32xf32>
    %c0_47 = arith.constant 0 : index
    %c0_48 = arith.constant 0 : index
    %c0_49 = arith.constant 0 : index
    %32 = vector.load %arg16[%c0_47, %c0_48, %c0_49] : memref<2x1x32xf32, #tpu.memory_space<vmem>>, vector<1x1x32xf32>
    %33 = vector.shape_cast %32 : vector<1x1x32xf32> to vector<1x32xf32>
    %34 = arith.truncf %1 : vector<16x32xf32> to vector<16x32xbf16>
    %cst = arith.constant dense<0.000000e+00> : vector<16x32xf32>
    %35 = tpu.matmul %34, %3, %cst {dimension_numbers = #tpu.dot_dimension_numbers<[1], [0], [0], [1], [0, 0, 1, 1], [], []>} : vector<16x32xbf16>, vector<32x32xbf16>, vector<16x32xf32> -> vector<16x32xf32>
    %36 = vector.broadcast %15 : vector<1x32xf32> to vector<16x32xf32>
    %37 = arith.addf %35, %36 : vector<16x32xf32>
    %cst_50 = arith.constant dense<0.000000e+00> : vector<16x32xf32>
    %38 = tpu.matmul %34, %5, %cst_50 {dimension_numbers = #tpu.dot_dimension_numbers<[1], [0], [0], [1], [0, 0, 1, 1], [], []>} : vector<16x32xbf16>, vector<32x32xbf16>, vector<16x32xf32> -> vector<16x32xf32>
    %39 = vector.broadcast %17 : vector<1x32xf32> to vector<16x32xf32>
    %40 = arith.addf %38, %39 : vector<16x32xf32>
    %cst_51 = arith.constant dense<0.000000e+00> : vector<16x32xf32>
    %41 = tpu.matmul %34, %7, %cst_51 {dimension_numbers = #tpu.dot_dimension_numbers<[1], [0], [0], [1], [0, 0, 1, 1], [], []>} : vector<16x32xbf16>, vector<32x32xbf16>, vector<16x32xf32> -> vector<16x32xf32>
    %42 = vector.broadcast %19 : vector<1x32xf32> to vector<16x32xf32>
    %43 = arith.addf %41, %42 : vector<16x32xf32>
    %44 = vector.extract_strided_slice %37 {offsets = [0, 0], sizes = [16, 8], strides = [1, 1]} : vector<16x32xf32> to vector<16x8xf32>
    %45 = vector.shape_cast %44 : vector<16x8xf32> to vector<2x8x8xf32>
    %46 = arith.truncf %45 : vector<2x8x8xf32> to vector<2x8x8xbf16>
    %47 = vector.extract_strided_slice %40 {offsets = [0, 0], sizes = [16, 8], strides = [1, 1]} : vector<16x32xf32> to vector<16x8xf32>
    %48 = vector.shape_cast %47 : vector<16x8xf32> to vector<2x8x8xf32>
    %49 = arith.truncf %48 : vector<2x8x8xf32> to vector<2x8x8xbf16>
    %50 = vector.extract_strided_slice %43 {offsets = [0, 0], sizes = [16, 8], strides = [1, 1]} : vector<16x32xf32> to vector<16x8xf32>
    %51 = vector.shape_cast %50 : vector<16x8xf32> to vector<2x8x8xf32>
    %52 = arith.truncf %51 : vector<2x8x8xf32> to vector<2x8x8xbf16>
    "tpu.trace_start"() <{level = 10 : i32, message = "bld,bmd->blm"}> : () -> ()
    %cst_52 = arith.constant dense<0.000000e+00> : vector<2x8x8xf32>
    %53 = tpu.matmul %46, %49, %cst_52 {dimension_numbers = #tpu.dot_dimension_numbers<[2], [2], [1], [1], [0, 0, 0, 1, 1, 1], [0], [0]>} : vector<2x8x8xbf16>, vector<2x8x8xbf16>, vector<2x8x8xf32> -> vector<2x8x8xf32>
    "tpu.trace_stop"() : () -> ()
    %cst_53 = arith.constant 0.353553385 : f32
    %54 = vector.broadcast %cst_53 : f32 to vector<2x8x8xf32>
    %55 = arith.mulf %53, %54 : vector<2x8x8xf32>
    %cst_54 = arith.constant dense<0xFF800000> : vector<2x8xf32>
    %56 = vector.multi_reduction <maximumf>, %55, %cst_54 [2] : vector<2x8x8xf32> to vector<2x8xf32>
    %57 = vector.shape_cast %56 : vector<2x8xf32> to vector<2x8x1xf32>
    %58 = vector.broadcast %57 : vector<2x8x1xf32> to vector<2x8x8xf32>
    %59 = arith.subf %55, %58 : vector<2x8x8xf32>
    %60 = math.exp %59 : vector<2x8x8xf32>
    %cst_55 = arith.constant dense<0.000000e+00> : vector<2x8xf32>
    %61 = vector.multi_reduction <add>, %60, %cst_55 [2] : vector<2x8x8xf32> to vector<2x8xf32>
    %62 = vector.shape_cast %61 : vector<2x8xf32> to vector<2x8x1xf32>
    %63 = tpu.reciprocal %62 {approx = true} : vector<2x8x1xf32> -> vector<2x8x1xf32>
    %64 = vector.broadcast %63 : vector<2x8x1xf32> to vector<2x8x8xf32>
    %65 = arith.mulf %60, %64 : vector<2x8x8xf32>
    %66 = arith.truncf %65 : vector<2x8x8xf32> to vector<2x8x8xbf16>
    "tpu.trace_start"() <{level = 10 : i32, message = "blm,bmd->bld"}> : () -> ()
    %cst_56 = arith.constant dense<0.000000e+00> : vector<2x8x8xf32>
    %67 = tpu.matmul %66, %52, %cst_56 {dimension_numbers = #tpu.dot_dimension_numbers<[2], [1], [1], [2], [0, 0, 0, 1, 1, 2], [0], [0]>} : vector<2x8x8xbf16>, vector<2x8x8xbf16>, vector<2x8x8xf32> -> vector<2x8x8xf32>
    "tpu.trace_stop"() : () -> ()
    %68 = vector.shape_cast %67 : vector<2x8x8xf32> to vector<16x8xf32>
    %c0_57 = arith.constant 0 : index
    %c0_58 = arith.constant 0 : index
    %69 = vector.load %arg18[%c0_57, %c0_58] : memref<16x32xf32, #tpu.memory_space<vmem>>, vector<16x8xf32>
    tpu.vector_store %arg18[%c0_57, %c0_58], %68 {strides = array<i32>} : memref<16x32xf32, #tpu.memory_space<vmem>>, vector<16x8xf32>,
    %70 = vector.extract_strided_slice %37 {offsets = [0, 8], sizes = [16, 8], strides = [1, 1]} : vector<16x32xf32> to vector<16x8xf32>
    %71 = vector.shape_cast %70 : vector<16x8xf32> to vector<2x8x8xf32>
    %72 = arith.truncf %71 : vector<2x8x8xf32> to vector<2x8x8xbf16>
    %73 = vector.extract_strided_slice %40 {offsets = [0, 8], sizes = [16, 8], strides = [1, 1]} : vector<16x32xf32> to vector<16x8xf32>
    %74 = vector.shape_cast %73 : vector<16x8xf32> to vector<2x8x8xf32>
    %75 = arith.truncf %74 : vector<2x8x8xf32> to vector<2x8x8xbf16>
    %76 = vector.extract_strided_slice %43 {offsets = [0, 8], sizes = [16, 8], strides = [1, 1]} : vector<16x32xf32> to vector<16x8xf32>
    %77 = vector.shape_cast %76 : vector<16x8xf32> to vector<2x8x8xf32>
    %78 = arith.truncf %77 : vector<2x8x8xf32> to vector<2x8x8xbf16>
    "tpu.trace_start"() <{level = 10 : i32, message = "bld,bmd->blm"}> : () -> ()
    %cst_59 = arith.constant dense<0.000000e+00> : vector<2x8x8xf32>
    %79 = tpu.matmul %72, %75, %cst_59 {dimension_numbers = #tpu.dot_dimension_numbers<[2], [2], [1], [1], [0, 0, 0, 1, 1, 1], [0], [0]>} : vector<2x8x8xbf16>, vector<2x8x8xbf16>, vector<2x8x8xf32> -> vector<2x8x8xf32>
    "tpu.trace_stop"() : () -> ()
    %cst_60 = arith.constant 0.353553385 : f32
    %80 = vector.broadcast %cst_60 : f32 to vector<2x8x8xf32>
    %81 = arith.mulf %79, %80 : vector<2x8x8xf32>
    %cst_61 = arith.constant dense<0xFF800000> : vector<2x8xf32>
    %82 = vector.multi_reduction <maximumf>, %81, %cst_61 [2] : vector<2x8x8xf32> to vector<2x8xf32>
    %83 = vector.shape_cast %82 : vector<2x8xf32> to vector<2x8x1xf32>
    %84 = vector.broadcast %83 : vector<2x8x1xf32> to vector<2x8x8xf32>
    %85 = arith.subf %81, %84 : vector<2x8x8xf32>
    %86 = math.exp %85 : vector<2x8x8xf32>
    %cst_62 = arith.constant dense<0.000000e+00> : vector<2x8xf32>
    %87 = vector.multi_reduction <add>, %86, %cst_62 [2] : vector<2x8x8xf32> to vector<2x8xf32>
    %88 = vector.shape_cast %87 : vector<2x8xf32> to vector<2x8x1xf32>
    %89 = tpu.reciprocal %88 {approx = true} : vector<2x8x1xf32> -> vector<2x8x1xf32>
    %90 = vector.broadcast %89 : vector<2x8x1xf32> to vector<2x8x8xf32>
    %91 = arith.mulf %86, %90 : vector<2x8x8xf32>
    %92 = arith.truncf %91 : vector<2x8x8xf32> to vector<2x8x8xbf16>
    "tpu.trace_start"() <{level = 10 : i32, message = "blm,bmd->bld"}> : () -> ()
    %cst_63 = arith.constant dense<0.000000e+00> : vector<2x8x8xf32>
    %93 = tpu.matmul %92, %78, %cst_63 {dimension_numbers = #tpu.dot_dimension_numbers<[2], [1], [1], [2], [0, 0, 0, 1, 1, 2], [0], [0]>} : vector<2x8x8xbf16>, vector<2x8x8xbf16>, vector<2x8x8xf32> -> vector<2x8x8xf32>
    "tpu.trace_stop"() : () -> ()
    %94 = vector.shape_cast %93 : vector<2x8x8xf32> to vector<16x8xf32>
    %c0_64 = arith.constant 0 : index
    %c8 = arith.constant 8 : index
    %95 = vector.load %arg18[%c0_64, %c8] : memref<16x32xf32, #tpu.memory_space<vmem>>, vector<16x8xf32>
    tpu.vector_store %arg18[%c0_64, %c8], %94 {strides = array<i32>} : memref<16x32xf32, #tpu.memory_space<vmem>>, vector<16x8xf32>,
    %96 = vector.extract_strided_slice %37 {offsets = [0, 16], sizes = [16, 8], strides = [1, 1]} : vector<16x32xf32> to vector<16x8xf32>
    %97 = vector.shape_cast %96 : vector<16x8xf32> to vector<2x8x8xf32>
    %98 = arith.truncf %97 : vector<2x8x8xf32> to vector<2x8x8xbf16>
    %99 = vector.extract_strided_slice %40 {offsets = [0, 16], sizes = [16, 8], strides = [1, 1]} : vector<16x32xf32> to vector<16x8xf32>
    %100 = vector.shape_cast %99 : vector<16x8xf32> to vector<2x8x8xf32>
    %101 = arith.truncf %100 : vector<2x8x8xf32> to vector<2x8x8xbf16>
    %102 = vector.extract_strided_slice %43 {offsets = [0, 16], sizes = [16, 8], strides = [1, 1]} : vector<16x32xf32> to vector<16x8xf32>
    %103 = vector.shape_cast %102 : vector<16x8xf32> to vector<2x8x8xf32>
    %104 = arith.truncf %103 : vector<2x8x8xf32> to vector<2x8x8xbf16>
    "tpu.trace_start"() <{level = 10 : i32, message = "bld,bmd->blm"}> : () -> ()
    %cst_65 = arith.constant dense<0.000000e+00> : vector<2x8x8xf32>
    %105 = tpu.matmul %98, %101, %cst_65 {dimension_numbers = #tpu.dot_dimension_numbers<[2], [2], [1], [1], [0, 0, 0, 1, 1, 1], [0], [0]>} : vector<2x8x8xbf16>, vector<2x8x8xbf16>, vector<2x8x8xf32> -> vector<2x8x8xf32>
    "tpu.trace_stop"() : () -> ()
    %cst_66 = arith.constant 0.353553385 : f32
    %106 = vector.broadcast %cst_66 : f32 to vector<2x8x8xf32>
    %107 = arith.mulf %105, %106 : vector<2x8x8xf32>
    %cst_67 = arith.constant dense<0xFF800000> : vector<2x8xf32>
    %108 = vector.multi_reduction <maximumf>, %107, %cst_67 [2] : vector<2x8x8xf32> to vector<2x8xf32>
    %109 = vector.shape_cast %108 : vector<2x8xf32> to vector<2x8x1xf32>
    %110 = vector.broadcast %109 : vector<2x8x1xf32> to vector<2x8x8xf32>
    %111 = arith.subf %107, %110 : vector<2x8x8xf32>
    %112 = math.exp %111 : vector<2x8x8xf32>
    %cst_68 = arith.constant dense<0.000000e+00> : vector<2x8xf32>
    %113 = vector.multi_reduction <add>, %112, %cst_68 [2] : vector<2x8x8xf32> to vector<2x8xf32>
    %114 = vector.shape_cast %113 : vector<2x8xf32> to vector<2x8x1xf32>
    %115 = tpu.reciprocal %114 {approx = true} : vector<2x8x1xf32> -> vector<2x8x1xf32>
    %116 = vector.broadcast %115 : vector<2x8x1xf32> to vector<2x8x8xf32>
    %117 = arith.mulf %112, %116 : vector<2x8x8xf32>
    %118 = arith.truncf %117 : vector<2x8x8xf32> to vector<2x8x8xbf16>
    "tpu.trace_start"() <{level = 10 : i32, message = "blm,bmd->bld"}> : () -> ()
    %cst_69 = arith.constant dense<0.000000e+00> : vector<2x8x8xf32>
    %119 = tpu.matmul %118, %104, %cst_69 {dimension_numbers = #tpu.dot_dimension_numbers<[2], [1], [1], [2], [0, 0, 0, 1, 1, 2], [0], [0]>} : vector<2x8x8xbf16>, vector<2x8x8xbf16>, vector<2x8x8xf32> -> vector<2x8x8xf32>
    "tpu.trace_stop"() : () -> ()
    %120 = vector.shape_cast %119 : vector<2x8x8xf32> to vector<16x8xf32>
    %c0_70 = arith.constant 0 : index
    %c16 = arith.constant 16 : index
    %121 = vector.load %arg18[%c0_70, %c16] : memref<16x32xf32, #tpu.memory_space<vmem>>, vector<16x8xf32>
    tpu.vector_store %arg18[%c0_70, %c16], %120 {strides = array<i32>} : memref<16x32xf32, #tpu.memory_space<vmem>>, vector<16x8xf32>,
    %122 = vector.extract_strided_slice %37 {offsets = [0, 24], sizes = [16, 8], strides = [1, 1]} : vector<16x32xf32> to vector<16x8xf32>
    %123 = vector.shape_cast %122 : vector<16x8xf32> to vector<2x8x8xf32>
    %124 = arith.truncf %123 : vector<2x8x8xf32> to vector<2x8x8xbf16>
    %125 = vector.extract_strided_slice %40 {offsets = [0, 24], sizes = [16, 8], strides = [1, 1]} : vector<16x32xf32> to vector<16x8xf32>
    %126 = vector.shape_cast %125 : vector<16x8xf32> to vector<2x8x8xf32>
    %127 = arith.truncf %126 : vector<2x8x8xf32> to vector<2x8x8xbf16>
    %128 = vector.extract_strided_slice %43 {offsets = [0, 24], sizes = [16, 8], strides = [1, 1]} : vector<16x32xf32> to vector<16x8xf32>
    %129 = vector.shape_cast %128 : vector<16x8xf32> to vector<2x8x8xf32>
    %130 = arith.truncf %129 : vector<2x8x8xf32> to vector<2x8x8xbf16>
    "tpu.trace_start"() <{level = 10 : i32, message = "bld,bmd->blm"}> : () -> ()
    %cst_71 = arith.constant dense<0.000000e+00> : vector<2x8x8xf32>
    %131 = tpu.matmul %124, %127, %cst_71 {dimension_numbers = #tpu.dot_dimension_numbers<[2], [2], [1], [1], [0, 0, 0, 1, 1, 1], [0], [0]>} : vector<2x8x8xbf16>, vector<2x8x8xbf16>, vector<2x8x8xf32> -> vector<2x8x8xf32>
    "tpu.trace_stop"() : () -> ()
    %cst_72 = arith.constant 0.353553385 : f32
    %132 = vector.broadcast %cst_72 : f32 to vector<2x8x8xf32>
    %133 = arith.mulf %131, %132 : vector<2x8x8xf32>
    %cst_73 = arith.constant dense<0xFF800000> : vector<2x8xf32>
    %134 = vector.multi_reduction <maximumf>, %133, %cst_73 [2] : vector<2x8x8xf32> to vector<2x8xf32>
    %135 = vector.shape_cast %134 : vector<2x8xf32> to vector<2x8x1xf32>
    %136 = vector.broadcast %135 : vector<2x8x1xf32> to vector<2x8x8xf32>
    %137 = arith.subf %133, %136 : vector<2x8x8xf32>
    %138 = math.exp %137 : vector<2x8x8xf32>
    %cst_74 = arith.constant dense<0.000000e+00> : vector<2x8xf32>
    %139 = vector.multi_reduction <add>, %138, %cst_74 [2] : vector<2x8x8xf32> to vector<2x8xf32>
    %140 = vector.shape_cast %139 : vector<2x8xf32> to vector<2x8x1xf32>
    %141 = tpu.reciprocal %140 {approx = true} : vector<2x8x1xf32> -> vector<2x8x1xf32>
    %142 = vector.broadcast %141 : vector<2x8x1xf32> to vector<2x8x8xf32>
    %143 = arith.mulf %138, %142 : vector<2x8x8xf32>
    %144 = arith.truncf %143 : vector<2x8x8xf32> to vector<2x8x8xbf16>
    "tpu.trace_start"() <{level = 10 : i32, message = "blm,bmd->bld"}> : () -> ()
    %cst_75 = arith.constant dense<0.000000e+00> : vector<2x8x8xf32>
    %145 = tpu.matmul %144, %130, %cst_75 {dimension_numbers = #tpu.dot_dimension_numbers<[2], [1], [1], [2], [0, 0, 0, 1, 1, 2], [0], [0]>} : vector<2x8x8xbf16>, vector<2x8x8xbf16>, vector<2x8x8xf32> -> vector<2x8x8xf32>
    "tpu.trace_stop"() : () -> ()
    %146 = vector.shape_cast %145 : vector<2x8x8xf32> to vector<16x8xf32>
    %c0_76 = arith.constant 0 : index
    %c24 = arith.constant 24 : index
    %147 = vector.load %arg18[%c0_76, %c24] : memref<16x32xf32, #tpu.memory_space<vmem>>, vector<16x8xf32>
    tpu.vector_store %arg18[%c0_76, %c24], %146 {strides = array<i32>} : memref<16x32xf32, #tpu.memory_space<vmem>>, vector<16x8xf32>,
    %c0_77 = arith.constant 0 : index
    %c0_78 = arith.constant 0 : index
    %148 = vector.load %arg18[%c0_77, %c0_78] : memref<16x32xf32, #tpu.memory_space<vmem>>, vector<16x32xf32>
    %149 = arith.truncf %148 : vector<16x32xf32> to vector<16x32xbf16>
    %cst_79 = arith.constant dense<0.000000e+00> : vector<16x32xf32>
    %150 = tpu.matmul %149, %9, %cst_79 {dimension_numbers = #tpu.dot_dimension_numbers<[1], [0], [0], [1], [0, 0, 1, 1], [], []>} : vector<16x32xbf16>, vector<32x32xbf16>, vector<16x32xf32> -> vector<16x32xf32>
    %151 = vector.broadcast %21 : vector<1x32xf32> to vector<16x32xf32>
    %152 = arith.addf %150, %151 : vector<16x32xf32>
    %153 = arith.addf %1, %152 : vector<16x32xf32>
    %cst_80 = arith.constant dense<0.000000e+00> : vector<32xf32>
    %154 = vector.multi_reduction <add>, %153, %cst_80 [0] : vector<16x32xf32> to vector<32xf32>
    %155 = vector.shape_cast %154 : vector<32xf32> to vector<1x32xf32>
    %156 = arith.mulf %153, %153 : vector<16x32xf32>
    %cst_81 = arith.constant dense<0.000000e+00> : vector<32xf32>
    %157 = vector.multi_reduction <add>, %156, %cst_81 [0] : vector<16x32xf32> to vector<32xf32>
    %158 = vector.shape_cast %157 : vector<32xf32> to vector<1x32xf32>
    %cst_82 = arith.constant 6.250000e-02 : f32
    %159 = vector.broadcast %cst_82 : f32 to vector<1x32xf32>
    %160 = arith.mulf %155, %159 : vector<1x32xf32>
    %cst_83 = arith.constant 6.250000e-02 : f32
    %161 = vector.broadcast %cst_83 : f32 to vector<1x32xf32>
    %162 = arith.mulf %158, %161 : vector<1x32xf32>
    %163 = arith.mulf %160, %160 : vector<1x32xf32>
    %164 = arith.subf %162, %163 : vector<1x32xf32>
    %cst_84 = arith.constant 0.000000e+00 : f32
    %165 = vector.broadcast %cst_84 : f32 to vector<1x32xf32>
    %166 = arith.maximumf %164, %165 : vector<1x32xf32>
    %167 = vector.broadcast %160 : vector<1x32xf32> to vector<16x32xf32>
    %168 = arith.subf %153, %167 : vector<16x32xf32>
    %cst_85 = arith.constant 9.99999974E-6 : f32
    %169 = vector.broadcast %cst_85 : f32 to vector<1x32xf32>
    %170 = arith.addf %166, %169 : vector<1x32xf32>
    %171 = math.rsqrt %170 : vector<1x32xf32>
    %172 = vector.broadcast %171 : vector<1x32xf32> to vector<16x32xf32>
    %173 = arith.mulf %168, %172 : vector<16x32xf32>
    %174 = vector.broadcast %27 : vector<1x32xf32> to vector<16x32xf32>
    %175 = arith.mulf %173, %174 : vector<16x32xf32>
    %176 = vector.broadcast %29 : vector<1x32xf32> to vector<16x32xf32>
    %177 = arith.addf %175, %176 : vector<16x32xf32>
    %178 = arith.truncf %177 : vector<16x32xf32> to vector<16x32xbf16>
    %cst_86 = arith.constant dense<0.000000e+00> : vector<16x64xf32>
    %179 = tpu.matmul %178, %11, %cst_86 {dimension_numbers = #tpu.dot_dimension_numbers<[1], [0], [0], [1], [0, 0, 1, 1], [], []>} : vector<16x32xbf16>, vector<32x64xbf16>, vector<16x64xf32> -> vector<16x64xf32>
    %180 = vector.broadcast %23 : vector<1x64xf32> to vector<16x64xf32>
    %181 = arith.addf %179, %180 : vector<16x64xf32>
    %182 = arith.mulf %181, %181 : vector<16x64xf32>
    %183 = arith.mulf %181, %182 : vector<16x64xf32>
    %cst_87 = arith.constant 4.471500e-02 : f32
    %184 = vector.broadcast %cst_87 : f32 to vector<16x64xf32>
    %185 = arith.mulf %184, %183 : vector<16x64xf32>
    %186 = arith.addf %181, %185 : vector<16x64xf32>
    %cst_88 = arith.constant 0.797884583 : f32
    %187 = vector.broadcast %cst_88 : f32 to vector<16x64xf32>
    %188 = arith.mulf %187, %186 : vector<16x64xf32>
    %189 = math.tanh %188 : vector<16x64xf32>
    %cst_89 = arith.constant 1.000000e+00 : f32
    %190 = vector.broadcast %cst_89 : f32 to vector<16x64xf32>
    %191 = arith.addf %190, %189 : vector<16x64xf32>
    %cst_90 = arith.constant 5.000000e-01 : f32
    %192 = vector.broadcast %cst_90 : f32 to vector<16x64xf32>
    %193 = arith.mulf %192, %191 : vector<16x64xf32>
    %194 = arith.mulf %181, %193 : vector<16x64xf32>
    %195 = arith.truncf %194 : vector<16x64xf32> to vector<16x64xbf16>
    %cst_91 = arith.constant dense<0.000000e+00> : vector<16x32xf32>
    %196 = tpu.matmul %195, %13, %cst_91 {dimension_numbers = #tpu.dot_dimension_numbers<[1], [0], [0], [1], [0, 0, 1, 1], [], []>} : vector<16x64xbf16>, vector<64x32xbf16>, vector<16x32xf32> -> vector<16x32xf32>
    %197 = vector.broadcast %25 : vector<1x32xf32> to vector<16x32xf32>
    %198 = arith.addf %196, %197 : vector<16x32xf32>
    %199 = arith.addf %177, %198 : vector<16x32xf32>
    %cst_92 = arith.constant dense<0.000000e+00> : vector<32xf32>
    %200 = vector.multi_reduction <add>, %199, %cst_92 [0] : vector<16x32xf32> to vector<32xf32>
    %201 = vector.shape_cast %200 : vector<32xf32> to vector<1x32xf32>
    %202 = arith.mulf %199, %199 : vector<16x32xf32>
    %cst_93 = arith.constant dense<0.000000e+00> : vector<32xf32>
    %203 = vector.multi_reduction <add>, %202, %cst_93 [0] : vector<16x32xf32> to vector<32xf32>
    %204 = vector.shape_cast %203 : vector<32xf32> to vector<1x32xf32>
    %cst_94 = arith.constant 6.250000e-02 : f32
    %205 = vector.broadcast %cst_94 : f32 to vector<1x32xf32>
    %206 = arith.mulf %201, %205 : vector<1x32xf32>
    %cst_95 = arith.constant 6.250000e-02 : f32
    %207 = vector.broadcast %cst_95 : f32 to vector<1x32xf32>
    %208 = arith.mulf %204, %207 : vector<1x32xf32>
    %209 = arith.mulf %206, %206 : vector<1x32xf32>
    %210 = arith.subf %208, %209 : vector<1x32xf32>
    %cst_96 = arith.constant 0.000000e+00 : f32
    %211 = vector.broadcast %cst_96 : f32 to vector<1x32xf32>
    %212 = arith.maximumf %210, %211 : vector<1x32xf32>
    %213 = vector.broadcast %206 : vector<1x32xf32> to vector<16x32xf32>
    %214 = arith.subf %199, %213 : vector<16x32xf32>
    %cst_97 = arith.constant 9.99999974E-6 : f32
    %215 = vector.broadcast %cst_97 : f32 to vector<1x32xf32>
    %216 = arith.addf %212, %215 : vector<1x32xf32>
    %217 = math.rsqrt %216 : vector<1x32xf32>
    %218 = vector.broadcast %217 : vector<1x32xf32> to vector<16x32xf32>
    %219 = arith.mulf %214, %218 : vector<16x32xf32>
    %220 = vector.broadcast %31 : vector<1x32xf32> to vector<16x32xf32>
    %221 = arith.mulf %219, %220 : vector<16x32xf32>
    %222 = vector.broadcast %33 : vector<1x32xf32> to vector<16x32xf32>
    %223 = arith.addf %221, %222 : vector<16x32xf32>
    %c1 = arith.constant 1 : index
    %c0_98 = arith.constant 0 : index
    %c0_99 = arith.constant 0 : index
    %224 = vector.load %arg1[%c1, %c0_98, %c0_99] : memref<2x32x32xbf16, #tpu.memory_space<vmem>>, vector<1x32x32xbf16>
    %225 = vector.shape_cast %224 : vector<1x32x32xbf16> to vector<32x32xbf16>
    %c1_100 = arith.constant 1 : index
    %c0_101 = arith.constant 0 : index
    %c0_102 = arith.constant 0 : index
    %226 = vector.load %arg3[%c1_100, %c0_101, %c0_102] : memref<2x32x32xbf16, #tpu.memory_space<vmem>>, vector<1x32x32xbf16>
    %227 = vector.shape_cast %226 : vector<1x32x32xbf16> to vector<32x32xbf16>
    %c1_103 = arith.constant 1 : index
    %c0_104 = arith.constant 0 : index
    %c0_105 = arith.constant 0 : index
    %228 = vector.load %arg5[%c1_103, %c0_104, %c0_105] : memref<2x32x32xbf16, #tpu.memory_space<vmem>>, vector<1x32x32xbf16>
    %229 = vector.shape_cast %228 : vector<1x32x32xbf16> to vector<32x32xbf16>
    %c1_106 = arith.constant 1 : index
    %c0_107 = arith.constant 0 : index
    %c0_108 = arith.constant 0 : index
    %230 = vector.load %arg7[%c1_106, %c0_107, %c0_108] : memref<2x32x32xbf16, #tpu.memory_space<vmem>>, vector<1x32x32xbf16>
    %231 = vector.shape_cast %230 : vector<1x32x32xbf16> to vector<32x32xbf16>
    %c1_109 = arith.constant 1 : index
    %c0_110 = arith.constant 0 : index
    %c0_111 = arith.constant 0 : index
    %232 = vector.load %arg9[%c1_109, %c0_110, %c0_111] : memref<2x32x64xbf16, #tpu.memory_space<vmem>>, vector<1x32x64xbf16>
    %233 = vector.shape_cast %232 : vector<1x32x64xbf16> to vector<32x64xbf16>
    %c1_112 = arith.constant 1 : index
    %c0_113 = arith.constant 0 : index
    %c0_114 = arith.constant 0 : index
    %234 = vector.load %arg11[%c1_112, %c0_113, %c0_114] : memref<2x64x32xbf16, #tpu.memory_space<vmem>>, vector<1x64x32xbf16>
    %235 = vector.shape_cast %234 : vector<1x64x32xbf16> to vector<64x32xbf16>
    %c1_115 = arith.constant 1 : index
    %c0_116 = arith.constant 0 : index
    %c0_117 = arith.constant 0 : index
    %236 = vector.load %arg2[%c1_115, %c0_116, %c0_117] : memref<2x1x32xf32, #tpu.memory_space<vmem>>, vector<1x1x32xf32>
    %237 = vector.shape_cast %236 : vector<1x1x32xf32> to vector<1x32xf32>
    %c1_118 = arith.constant 1 : index
    %c0_119 = arith.constant 0 : index
    %c0_120 = arith.constant 0 : index
    %238 = vector.load %arg4[%c1_118, %c0_119, %c0_120] : memref<2x1x32xf32, #tpu.memory_space<vmem>>, vector<1x1x32xf32>
    %239 = vector.shape_cast %238 : vector<1x1x32xf32> to vector<1x32xf32>
    %c1_121 = arith.constant 1 : index
    %c0_122 = arith.constant 0 : index
    %c0_123 = arith.constant 0 : index
    %240 = vector.load %arg6[%c1_121, %c0_122, %c0_123] : memref<2x1x32xf32, #tpu.memory_space<vmem>>, vector<1x1x32xf32>
    %241 = vector.shape_cast %240 : vector<1x1x32xf32> to vector<1x32xf32>
    %c1_124 = arith.constant 1 : index
    %c0_125 = arith.constant 0 : index
    %c0_126 = arith.constant 0 : index
    %242 = vector.load %arg8[%c1_124, %c0_125, %c0_126] : memref<2x1x32xf32, #tpu.memory_space<vmem>>, vector<1x1x32xf32>
    %243 = vector.shape_cast %242 : vector<1x1x32xf32> to vector<1x32xf32>
    %c1_127 = arith.constant 1 : index
    %c0_128 = arith.constant 0 : index
    %c0_129 = arith.constant 0 : index
    %244 = vector.load %arg10[%c1_127, %c0_128, %c0_129] : memref<2x1x64xf32, #tpu.memory_space<vmem>>, vector<1x1x64xf32>
    %245 = vector.shape_cast %244 : vector<1x1x64xf32> to vector<1x64xf32>
    %c1_130 = arith.constant 1 : index
    %c0_131 = arith.constant 0 : index
    %c0_132 = arith.constant 0 : index
    %246 = vector.load %arg12[%c1_130, %c0_131, %c0_132] : memref<2x1x32xf32, #tpu.memory_space<vmem>>, vector<1x1x32xf32>
    %247 = vector.shape_cast %246 : vector<1x1x32xf32> to vector<1x32xf32>
    %c1_133 = arith.constant 1 : index
    %c0_134 = arith.constant 0 : index
    %c0_135 = arith.constant 0 : index
    %248 = vector.load %arg13[%c1_133, %c0_134, %c0_135] : memref<2x1x32xf32, #tpu.memory_space<vmem>>, vector<1x1x32xf32>
    %249 = vector.shape_cast %248 : vector<1x1x32xf32> to vector<1x32xf32>
    %c1_136 = arith.constant 1 : index
    %c0_137 = arith.constant 0 : index
    %c0_138 = arith.constant 0 : index
    %250 = vector.load %arg14[%c1_136, %c0_137, %c0_138] : memref<2x1x32xf32, #tpu.memory_space<vmem>>, vector<1x1x32xf32>
    %251 = vector.shape_cast %250 : vector<1x1x32xf32> to vector<1x32xf32>
    %c1_139 = arith.constant 1 : index
    %c0_140 = arith.constant 0 : index
    %c0_141 = arith.constant 0 : index
    %252 = vector.load %arg15[%c1_139, %c0_140, %c0_141] : memref<2x1x32xf32, #tpu.memory_space<vmem>>, vector<1x1x32xf32>
    %253 = vector.shape_cast %252 : vector<1x1x32xf32> to vector<1x32xf32>
    %c1_142 = arith.constant 1 : index
    %c0_143 = arith.constant 0 : index
    %c0_144 = arith.constant 0 : index
    %254 = vector.load %arg16[%c1_142, %c0_143, %c0_144] : memref<2x1x32xf32, #tpu.memory_space<vmem>>, vector<1x1x32xf32>
    %255 = vector.shape_cast %254 : vector<1x1x32xf32> to vector<1x32xf32>
    %256 = arith.truncf %223 : vector<16x32xf32> to vector<16x32xbf16>
    %cst_145 = arith.constant dense<0.000000e+00> : vector<16x32xf32>
    %257 = tpu.matmul %256, %225, %cst_145 {dimension_numbers = #tpu.dot_dimension_numbers<[1], [0], [0], [1], [0, 0, 1, 1], [], []>} : vector<16x32xbf16>, vector<32x32xbf16>, vector<16x32xf32> -> vector<16x32xf32>
    %258 = vector.broadcast %237 : vector<1x32xf32> to vector<16x32xf32>
    %259 = arith.addf %257, %258 : vector<16x32xf32>
    %cst_146 = arith.constant dense<0.000000e+00> : vector<16x32xf32>
    %260 = tpu.matmul %256, %227, %cst_146 {dimension_numbers = #tpu.dot_dimension_numbers<[1], [0], [0], [1], [0, 0, 1, 1], [], []>} : vector<16x32xbf16>, vector<32x32xbf16>, vector<16x32xf32> -> vector<16x32xf32>
    %261 = vector.broadcast %239 : vector<1x32xf32> to vector<16x32xf32>
    %262 = arith.addf %260, %261 : vector<16x32xf32>
    %cst_147 = arith.constant dense<0.000000e+00> : vector<16x32xf32>
    %263 = tpu.matmul %256, %229, %cst_147 {dimension_numbers = #tpu.dot_dimension_numbers<[1], [0], [0], [1], [0, 0, 1, 1], [], []>} : vector<16x32xbf16>, vector<32x32xbf16>, vector<16x32xf32> -> vector<16x32xf32>
    %264 = vector.broadcast %241 : vector<1x32xf32> to vector<16x32xf32>
    %265 = arith.addf %263, %264 : vector<16x32xf32>
    %266 = vector.extract_strided_slice %259 {offsets = [0, 0], sizes = [16, 8], strides = [1, 1]} : vector<16x32xf32> to vector<16x8xf32>
    %267 = vector.shape_cast %266 : vector<16x8xf32> to vector<2x8x8xf32>
    %268 = arith.truncf %267 : vector<2x8x8xf32> to vector<2x8x8xbf16>
    %269 = vector.extract_strided_slice %262 {offsets = [0, 0], sizes = [16, 8], strides = [1, 1]} : vector<16x32xf32> to vector<16x8xf32>
    %270 = vector.shape_cast %269 : vector<16x8xf32> to vector<2x8x8xf32>
    %271 = arith.truncf %270 : vector<2x8x8xf32> to vector<2x8x8xbf16>
    %272 = vector.extract_strided_slice %265 {offsets = [0, 0], sizes = [16, 8], strides = [1, 1]} : vector<16x32xf32> to vector<16x8xf32>
    %273 = vector.shape_cast %272 : vector<16x8xf32> to vector<2x8x8xf32>
    %274 = arith.truncf %273 : vector<2x8x8xf32> to vector<2x8x8xbf16>
    "tpu.trace_start"() <{level = 10 : i32, message = "bld,bmd->blm"}> : () -> ()
    %cst_148 = arith.constant dense<0.000000e+00> : vector<2x8x8xf32>
    %275 = tpu.matmul %268, %271, %cst_148 {dimension_numbers = #tpu.dot_dimension_numbers<[2], [2], [1], [1], [0, 0, 0, 1, 1, 1], [0], [0]>} : vector<2x8x8xbf16>, vector<2x8x8xbf16>, vector<2x8x8xf32> -> vector<2x8x8xf32>
    "tpu.trace_stop"() : () -> ()
    %cst_149 = arith.constant 0.353553385 : f32
    %276 = vector.broadcast %cst_149 : f32 to vector<2x8x8xf32>
    %277 = arith.mulf %275, %276 : vector<2x8x8xf32>
    %cst_150 = arith.constant dense<0xFF800000> : vector<2x8xf32>
    %278 = vector.multi_reduction <maximumf>, %277, %cst_150 [2] : vector<2x8x8xf32> to vector<2x8xf32>
    %279 = vector.shape_cast %278 : vector<2x8xf32> to vector<2x8x1xf32>
    %280 = vector.broadcast %279 : vector<2x8x1xf32> to vector<2x8x8xf32>
    %281 = arith.subf %277, %280 : vector<2x8x8xf32>
    %282 = math.exp %281 : vector<2x8x8xf32>
    %cst_151 = arith.constant dense<0.000000e+00> : vector<2x8xf32>
    %283 = vector.multi_reduction <add>, %282, %cst_151 [2] : vector<2x8x8xf32> to vector<2x8xf32>
    %284 = vector.shape_cast %283 : vector<2x8xf32> to vector<2x8x1xf32>
    %285 = tpu.reciprocal %284 {approx = true} : vector<2x8x1xf32> -> vector<2x8x1xf32>
    %286 = vector.broadcast %285 : vector<2x8x1xf32> to vector<2x8x8xf32>
    %287 = arith.mulf %282, %286 : vector<2x8x8xf32>
    %288 = arith.truncf %287 : vector<2x8x8xf32> to vector<2x8x8xbf16>
    "tpu.trace_start"() <{level = 10 : i32, message = "blm,bmd->bld"}> : () -> ()
    %cst_152 = arith.constant dense<0.000000e+00> : vector<2x8x8xf32>
    %289 = tpu.matmul %288, %274, %cst_152 {dimension_numbers = #tpu.dot_dimension_numbers<[2], [1], [1], [2], [0, 0, 0, 1, 1, 2], [0], [0]>} : vector<2x8x8xbf16>, vector<2x8x8xbf16>, vector<2x8x8xf32> -> vector<2x8x8xf32>
    "tpu.trace_stop"() : () -> ()
    %290 = vector.shape_cast %289 : vector<2x8x8xf32> to vector<16x8xf32>
    %c0_153 = arith.constant 0 : index
    %c0_154 = arith.constant 0 : index
    %291 = vector.load %arg18[%c0_153, %c0_154] : memref<16x32xf32, #tpu.memory_space<vmem>>, vector<16x8xf32>
    tpu.vector_store %arg18[%c0_153, %c0_154], %290 {strides = array<i32>} : memref<16x32xf32, #tpu.memory_space<vmem>>, vector<16x8xf32>,
    %292 = vector.extract_strided_slice %259 {offsets = [0, 8], sizes = [16, 8], strides = [1, 1]} : vector<16x32xf32> to vector<16x8xf32>
    %293 = vector.shape_cast %292 : vector<16x8xf32> to vector<2x8x8xf32>
    %294 = arith.truncf %293 : vector<2x8x8xf32> to vector<2x8x8xbf16>
    %295 = vector.extract_strided_slice %262 {offsets = [0, 8], sizes = [16, 8], strides = [1, 1]} : vector<16x32xf32> to vector<16x8xf32>
    %296 = vector.shape_cast %295 : vector<16x8xf32> to vector<2x8x8xf32>
    %297 = arith.truncf %296 : vector<2x8x8xf32> to vector<2x8x8xbf16>
    %298 = vector.extract_strided_slice %265 {offsets = [0, 8], sizes = [16, 8], strides = [1, 1]} : vector<16x32xf32> to vector<16x8xf32>
    %299 = vector.shape_cast %298 : vector<16x8xf32> to vector<2x8x8xf32>
    %300 = arith.truncf %299 : vector<2x8x8xf32> to vector<2x8x8xbf16>
    "tpu.trace_start"() <{level = 10 : i32, message = "bld,bmd->blm"}> : () -> ()
    %cst_155 = arith.constant dense<0.000000e+00> : vector<2x8x8xf32>
    %301 = tpu.matmul %294, %297, %cst_155 {dimension_numbers = #tpu.dot_dimension_numbers<[2], [2], [1], [1], [0, 0, 0, 1, 1, 1], [0], [0]>} : vector<2x8x8xbf16>, vector<2x8x8xbf16>, vector<2x8x8xf32> -> vector<2x8x8xf32>
    "tpu.trace_stop"() : () -> ()
    %cst_156 = arith.constant 0.353553385 : f32
    %302 = vector.broadcast %cst_156 : f32 to vector<2x8x8xf32>
    %303 = arith.mulf %301, %302 : vector<2x8x8xf32>
    %cst_157 = arith.constant dense<0xFF800000> : vector<2x8xf32>
    %304 = vector.multi_reduction <maximumf>, %303, %cst_157 [2] : vector<2x8x8xf32> to vector<2x8xf32>
    %305 = vector.shape_cast %304 : vector<2x8xf32> to vector<2x8x1xf32>
    %306 = vector.broadcast %305 : vector<2x8x1xf32> to vector<2x8x8xf32>
    %307 = arith.subf %303, %306 : vector<2x8x8xf32>
    %308 = math.exp %307 : vector<2x8x8xf32>
    %cst_158 = arith.constant dense<0.000000e+00> : vector<2x8xf32>
    %309 = vector.multi_reduction <add>, %308, %cst_158 [2] : vector<2x8x8xf32> to vector<2x8xf32>
    %310 = vector.shape_cast %309 : vector<2x8xf32> to vector<2x8x1xf32>
    %311 = tpu.reciprocal %310 {approx = true} : vector<2x8x1xf32> -> vector<2x8x1xf32>
    %312 = vector.broadcast %311 : vector<2x8x1xf32> to vector<2x8x8xf32>
    %313 = arith.mulf %308, %312 : vector<2x8x8xf32>
    %314 = arith.truncf %313 : vector<2x8x8xf32> to vector<2x8x8xbf16>
    "tpu.trace_start"() <{level = 10 : i32, message = "blm,bmd->bld"}> : () -> ()
    %cst_159 = arith.constant dense<0.000000e+00> : vector<2x8x8xf32>
    %315 = tpu.matmul %314, %300, %cst_159 {dimension_numbers = #tpu.dot_dimension_numbers<[2], [1], [1], [2], [0, 0, 0, 1, 1, 2], [0], [0]>} : vector<2x8x8xbf16>, vector<2x8x8xbf16>, vector<2x8x8xf32> -> vector<2x8x8xf32>
    "tpu.trace_stop"() : () -> ()
    %316 = vector.shape_cast %315 : vector<2x8x8xf32> to vector<16x8xf32>
    %c0_160 = arith.constant 0 : index
    %c8_161 = arith.constant 8 : index
    %317 = vector.load %arg18[%c0_160, %c8_161] : memref<16x32xf32, #tpu.memory_space<vmem>>, vector<16x8xf32>
    tpu.vector_store %arg18[%c0_160, %c8_161], %316 {strides = array<i32>} : memref<16x32xf32, #tpu.memory_space<vmem>>, vector<16x8xf32>,
    %318 = vector.extract_strided_slice %259 {offsets = [0, 16], sizes = [16, 8], strides = [1, 1]} : vector<16x32xf32> to vector<16x8xf32>
    %319 = vector.shape_cast %318 : vector<16x8xf32> to vector<2x8x8xf32>
    %320 = arith.truncf %319 : vector<2x8x8xf32> to vector<2x8x8xbf16>
    %321 = vector.extract_strided_slice %262 {offsets = [0, 16], sizes = [16, 8], strides = [1, 1]} : vector<16x32xf32> to vector<16x8xf32>
    %322 = vector.shape_cast %321 : vector<16x8xf32> to vector<2x8x8xf32>
    %323 = arith.truncf %322 : vector<2x8x8xf32> to vector<2x8x8xbf16>
    %324 = vector.extract_strided_slice %265 {offsets = [0, 16], sizes = [16, 8], strides = [1, 1]} : vector<16x32xf32> to vector<16x8xf32>
    %325 = vector.shape_cast %324 : vector<16x8xf32> to vector<2x8x8xf32>
    %326 = arith.truncf %325 : vector<2x8x8xf32> to vector<2x8x8xbf16>
    "tpu.trace_start"() <{level = 10 : i32, message = "bld,bmd->blm"}> : () -> ()
    %cst_162 = arith.constant dense<0.000000e+00> : vector<2x8x8xf32>
    %327 = tpu.matmul %320, %323, %cst_162 {dimension_numbers = #tpu.dot_dimension_numbers<[2], [2], [1], [1], [0, 0, 0, 1, 1, 1], [0], [0]>} : vector<2x8x8xbf16>, vector<2x8x8xbf16>, vector<2x8x8xf32> -> vector<2x8x8xf32>
    "tpu.trace_stop"() : () -> ()
    %cst_163 = arith.constant 0.353553385 : f32
    %328 = vector.broadcast %cst_163 : f32 to vector<2x8x8xf32>
    %329 = arith.mulf %327, %328 : vector<2x8x8xf32>
    %cst_164 = arith.constant dense<0xFF800000> : vector<2x8xf32>
    %330 = vector.multi_reduction <maximumf>, %329, %cst_164 [2] : vector<2x8x8xf32> to vector<2x8xf32>
    %331 = vector.shape_cast %330 : vector<2x8xf32> to vector<2x8x1xf32>
    %332 = vector.broadcast %331 : vector<2x8x1xf32> to vector<2x8x8xf32>
    %333 = arith.subf %329, %332 : vector<2x8x8xf32>
    %334 = math.exp %333 : vector<2x8x8xf32>
    %cst_165 = arith.constant dense<0.000000e+00> : vector<2x8xf32>
    %335 = vector.multi_reduction <add>, %334, %cst_165 [2] : vector<2x8x8xf32> to vector<2x8xf32>
    %336 = vector.shape_cast %335 : vector<2x8xf32> to vector<2x8x1xf32>
    %337 = tpu.reciprocal %336 {approx = true} : vector<2x8x1xf32> -> vector<2x8x1xf32>
    %338 = vector.broadcast %337 : vector<2x8x1xf32> to vector<2x8x8xf32>
    %339 = arith.mulf %334, %338 : vector<2x8x8xf32>
    %340 = arith.truncf %339 : vector<2x8x8xf32> to vector<2x8x8xbf16>
    "tpu.trace_start"() <{level = 10 : i32, message = "blm,bmd->bld"}> : () -> ()
    %cst_166 = arith.constant dense<0.000000e+00> : vector<2x8x8xf32>
    %341 = tpu.matmul %340, %326, %cst_166 {dimension_numbers = #tpu.dot_dimension_numbers<[2], [1], [1], [2], [0, 0, 0, 1, 1, 2], [0], [0]>} : vector<2x8x8xbf16>, vector<2x8x8xbf16>, vector<2x8x8xf32> -> vector<2x8x8xf32>
    "tpu.trace_stop"() : () -> ()
    %342 = vector.shape_cast %341 : vector<2x8x8xf32> to vector<16x8xf32>
    %c0_167 = arith.constant 0 : index
    %c16_168 = arith.constant 16 : index
    %343 = vector.load %arg18[%c0_167, %c16_168] : memref<16x32xf32, #tpu.memory_space<vmem>>, vector<16x8xf32>
    tpu.vector_store %arg18[%c0_167, %c16_168], %342 {strides = array<i32>} : memref<16x32xf32, #tpu.memory_space<vmem>>, vector<16x8xf32>,
    %344 = vector.extract_strided_slice %259 {offsets = [0, 24], sizes = [16, 8], strides = [1, 1]} : vector<16x32xf32> to vector<16x8xf32>
    %345 = vector.shape_cast %344 : vector<16x8xf32> to vector<2x8x8xf32>
    %346 = arith.truncf %345 : vector<2x8x8xf32> to vector<2x8x8xbf16>
    %347 = vector.extract_strided_slice %262 {offsets = [0, 24], sizes = [16, 8], strides = [1, 1]} : vector<16x32xf32> to vector<16x8xf32>
    %348 = vector.shape_cast %347 : vector<16x8xf32> to vector<2x8x8xf32>
    %349 = arith.truncf %348 : vector<2x8x8xf32> to vector<2x8x8xbf16>
    %350 = vector.extract_strided_slice %265 {offsets = [0, 24], sizes = [16, 8], strides = [1, 1]} : vector<16x32xf32> to vector<16x8xf32>
    %351 = vector.shape_cast %350 : vector<16x8xf32> to vector<2x8x8xf32>
    %352 = arith.truncf %351 : vector<2x8x8xf32> to vector<2x8x8xbf16>
    "tpu.trace_start"() <{level = 10 : i32, message = "bld,bmd->blm"}> : () -> ()
    %cst_169 = arith.constant dense<0.000000e+00> : vector<2x8x8xf32>
    %353 = tpu.matmul %346, %349, %cst_169 {dimension_numbers = #tpu.dot_dimension_numbers<[2], [2], [1], [1], [0, 0, 0, 1, 1, 1], [0], [0]>} : vector<2x8x8xbf16>, vector<2x8x8xbf16>, vector<2x8x8xf32> -> vector<2x8x8xf32>
    "tpu.trace_stop"() : () -> ()
    %cst_170 = arith.constant 0.353553385 : f32
    %354 = vector.broadcast %cst_170 : f32 to vector<2x8x8xf32>
    %355 = arith.mulf %353, %354 : vector<2x8x8xf32>
    %cst_171 = arith.constant dense<0xFF800000> : vector<2x8xf32>
    %356 = vector.multi_reduction <maximumf>, %355, %cst_171 [2] : vector<2x8x8xf32> to vector<2x8xf32>
    %357 = vector.shape_cast %356 : vector<2x8xf32> to vector<2x8x1xf32>
    %358 = vector.broadcast %357 : vector<2x8x1xf32> to vector<2x8x8xf32>
    %359 = arith.subf %355, %358 : vector<2x8x8xf32>
    %360 = math.exp %359 : vector<2x8x8xf32>
    %cst_172 = arith.constant dense<0.000000e+00> : vector<2x8xf32>
    %361 = vector.multi_reduction <add>, %360, %cst_172 [2] : vector<2x8x8xf32> to vector<2x8xf32>
    %362 = vector.shape_cast %361 : vector<2x8xf32> to vector<2x8x1xf32>
    %363 = tpu.reciprocal %362 {approx = true} : vector<2x8x1xf32> -> vector<2x8x1xf32>
    %364 = vector.broadcast %363 : vector<2x8x1xf32> to vector<2x8x8xf32>
    %365 = arith.mulf %360, %364 : vector<2x8x8xf32>
    %366 = arith.truncf %365 : vector<2x8x8xf32> to vector<2x8x8xbf16>
    "tpu.trace_start"() <{level = 10 : i32, message = "blm,bmd->bld"}> : () -> ()
    %cst_173 = arith.constant dense<0.000000e+00> : vector<2x8x8xf32>
    %367 = tpu.matmul %366, %352, %cst_173 {dimension_numbers = #tpu.dot_dimension_numbers<[2], [1], [1], [2], [0, 0, 0, 1, 1, 2], [0], [0]>} : vector<2x8x8xbf16>, vector<2x8x8xbf16>, vector<2x8x8xf32> -> vector<2x8x8xf32>
    "tpu.trace_stop"() : () -> ()
    %368 = vector.shape_cast %367 : vector<2x8x8xf32> to vector<16x8xf32>
    %c0_174 = arith.constant 0 : index
    %c24_175 = arith.constant 24 : index
    %369 = vector.load %arg18[%c0_174, %c24_175] : memref<16x32xf32, #tpu.memory_space<vmem>>, vector<16x8xf32>
    tpu.vector_store %arg18[%c0_174, %c24_175], %368 {strides = array<i32>} : memref<16x32xf32, #tpu.memory_space<vmem>>, vector<16x8xf32>,
    %c0_176 = arith.constant 0 : index
    %c0_177 = arith.constant 0 : index
    %370 = vector.load %arg18[%c0_176, %c0_177] : memref<16x32xf32, #tpu.memory_space<vmem>>, vector<16x32xf32>
    %371 = arith.truncf %370 : vector<16x32xf32> to vector<16x32xbf16>
    %cst_178 = arith.constant dense<0.000000e+00> : vector<16x32xf32>
    %372 = tpu.matmul %371, %231, %cst_178 {dimension_numbers = #tpu.dot_dimension_numbers<[1], [0], [0], [1], [0, 0, 1, 1], [], []>} : vector<16x32xbf16>, vector<32x32xbf16>, vector<16x32xf32> -> vector<16x32xf32>
    %373 = vector.broadcast %243 : vector<1x32xf32> to vector<16x32xf32>
    %374 = arith.addf %372, %373 : vector<16x32xf32>
    %375 = arith.addf %223, %374 : vector<16x32xf32>
    %cst_179 = arith.constant dense<0.000000e+00> : vector<32xf32>
    %376 = vector.multi_reduction <add>, %375, %cst_179 [0] : vector<16x32xf32> to vector<32xf32>
    %377 = vector.shape_cast %376 : vector<32xf32> to vector<1x32xf32>
    %378 = arith.mulf %375, %375 : vector<16x32xf32>
    %cst_180 = arith.constant dense<0.000000e+00> : vector<32xf32>
    %379 = vector.multi_reduction <add>, %378, %cst_180 [0] : vector<16x32xf32> to vector<32xf32>
    %380 = vector.shape_cast %379 : vector<32xf32> to vector<1x32xf32>
    %cst_181 = arith.constant 6.250000e-02 : f32
    %381 = vector.broadcast %cst_181 : f32 to vector<1x32xf32>
    %382 = arith.mulf %377, %381 : vector<1x32xf32>
    %cst_182 = arith.constant 6.250000e-02 : f32
    %383 = vector.broadcast %cst_182 : f32 to vector<1x32xf32>
    %384 = arith.mulf %380, %383 : vector<1x32xf32>
    %385 = arith.mulf %382, %382 : vector<1x32xf32>
    %386 = arith.subf %384, %385 : vector<1x32xf32>
    %cst_183 = arith.constant 0.000000e+00 : f32
    %387 = vector.broadcast %cst_183 : f32 to vector<1x32xf32>
    %388 = arith.maximumf %386, %387 : vector<1x32xf32>
    %389 = vector.broadcast %382 : vector<1x32xf32> to vector<16x32xf32>
    %390 = arith.subf %375, %389 : vector<16x32xf32>
    %cst_184 = arith.constant 9.99999974E-6 : f32
    %391 = vector.broadcast %cst_184 : f32 to vector<1x32xf32>
    %392 = arith.addf %388, %391 : vector<1x32xf32>
    %393 = math.rsqrt %392 : vector<1x32xf32>
    %394 = vector.broadcast %393 : vector<1x32xf32> to vector<16x32xf32>
    %395 = arith.mulf %390, %394 : vector<16x32xf32>
    %396 = vector.broadcast %249 : vector<1x32xf32> to vector<16x32xf32>
    %397 = arith.mulf %395, %396 : vector<16x32xf32>
    %398 = vector.broadcast %251 : vector<1x32xf32> to vector<16x32xf32>
    %399 = arith.addf %397, %398 : vector<16x32xf32>
    %400 = arith.truncf %399 : vector<16x32xf32> to vector<16x32xbf16>
    %cst_185 = arith.constant dense<0.000000e+00> : vector<16x64xf32>
    %401 = tpu.matmul %400, %233, %cst_185 {dimension_numbers = #tpu.dot_dimension_numbers<[1], [0], [0], [1], [0, 0, 1, 1], [], []>} : vector<16x32xbf16>, vector<32x64xbf16>, vector<16x64xf32> -> vector<16x64xf32>
    %402 = vector.broadcast %245 : vector<1x64xf32> to vector<16x64xf32>
    %403 = arith.addf %401, %402 : vector<16x64xf32>
    %404 = arith.mulf %403, %403 : vector<16x64xf32>
    %405 = arith.mulf %403, %404 : vector<16x64xf32>
    %cst_186 = arith.constant 4.471500e-02 : f32
    %406 = vector.broadcast %cst_186 : f32 to vector<16x64xf32>
    %407 = arith.mulf %406, %405 : vector<16x64xf32>
    %408 = arith.addf %403, %407 : vector<16x64xf32>
    %cst_187 = arith.constant 0.797884583 : f32
    %409 = vector.broadcast %cst_187 : f32 to vector<16x64xf32>
    %410 = arith.mulf %409, %408 : vector<16x64xf32>
    %411 = math.tanh %410 : vector<16x64xf32>
    %cst_188 = arith.constant 1.000000e+00 : f32
    %412 = vector.broadcast %cst_188 : f32 to vector<16x64xf32>
    %413 = arith.addf %412, %411 : vector<16x64xf32>
    %cst_189 = arith.constant 5.000000e-01 : f32
    %414 = vector.broadcast %cst_189 : f32 to vector<16x64xf32>
    %415 = arith.mulf %414, %413 : vector<16x64xf32>
    %416 = arith.mulf %403, %415 : vector<16x64xf32>
    %417 = arith.truncf %416 : vector<16x64xf32> to vector<16x64xbf16>
    %cst_190 = arith.constant dense<0.000000e+00> : vector<16x32xf32>
    %418 = tpu.matmul %417, %235, %cst_190 {dimension_numbers = #tpu.dot_dimension_numbers<[1], [0], [0], [1], [0, 0, 1, 1], [], []>} : vector<16x64xbf16>, vector<64x32xbf16>, vector<16x32xf32> -> vector<16x32xf32>
    %419 = vector.broadcast %247 : vector<1x32xf32> to vector<16x32xf32>
    %420 = arith.addf %418, %419 : vector<16x32xf32>
    %421 = arith.addf %399, %420 : vector<16x32xf32>
    %cst_191 = arith.constant dense<0.000000e+00> : vector<32xf32>
    %422 = vector.multi_reduction <add>, %421, %cst_191 [0] : vector<16x32xf32> to vector<32xf32>
    %423 = vector.shape_cast %422 : vector<32xf32> to vector<1x32xf32>
    %424 = arith.mulf %421, %421 : vector<16x32xf32>
    %cst_192 = arith.constant dense<0.000000e+00> : vector<32xf32>
    %425 = vector.multi_reduction <add>, %424, %cst_192 [0] : vector<16x32xf32> to vector<32xf32>
    %426 = vector.shape_cast %425 : vector<32xf32> to vector<1x32xf32>
    %cst_193 = arith.constant 6.250000e-02 : f32
    %427 = vector.broadcast %cst_193 : f32 to vector<1x32xf32>
    %428 = arith.mulf %423, %427 : vector<1x32xf32>
    %cst_194 = arith.constant 6.250000e-02 : f32
    %429 = vector.broadcast %cst_194 : f32 to vector<1x32xf32>
    %430 = arith.mulf %426, %429 : vector<1x32xf32>
    %431 = arith.mulf %428, %428 : vector<1x32xf32>
    %432 = arith.subf %430, %431 : vector<1x32xf32>
    %cst_195 = arith.constant 0.000000e+00 : f32
    %433 = vector.broadcast %cst_195 : f32 to vector<1x32xf32>
    %434 = arith.maximumf %432, %433 : vector<1x32xf32>
    %435 = vector.broadcast %428 : vector<1x32xf32> to vector<16x32xf32>
    %436 = arith.subf %421, %435 : vector<16x32xf32>
    %cst_196 = arith.constant 9.99999974E-6 : f32
    %437 = vector.broadcast %cst_196 : f32 to vector<1x32xf32>
    %438 = arith.addf %434, %437 : vector<1x32xf32>
    %439 = math.rsqrt %438 : vector<1x32xf32>
    %440 = vector.broadcast %439 : vector<1x32xf32> to vector<16x32xf32>
    %441 = arith.mulf %436, %440 : vector<16x32xf32>
    %442 = vector.broadcast %253 : vector<1x32xf32> to vector<16x32xf32>
    %443 = arith.mulf %441, %442 : vector<16x32xf32>
    %444 = vector.broadcast %255 : vector<1x32xf32> to vector<16x32xf32>
    %445 = arith.addf %443, %444 : vector<16x32xf32>
    %446 = vector.shape_cast %445 : vector<16x32xf32> to vector<2x8x32xf32>
    %c0_197 = arith.constant 0 : index
    %c0_198 = arith.constant 0 : index
    %c0_199 = arith.constant 0 : index
    %447 = vector.load %arg17[%c0_197, %c0_198, %c0_199] : memref<2x8x32xf32, #tpu.memory_space<vmem>>, vector<2x8x32xf32>
    tpu.vector_store %arg17[%c0_197, %c0_198, %c0_199], %446 {strides = array<i32>} : memref<2x8x32xf32, #tpu.memory_space<vmem>>, vector<2x8x32xf32>,
    return
  }
}

</mosaic_0001>

<llo_original>
// kernel: tpu_custom_call.1
$region0: #{tpu_custom_call.1}
  #allocation0 [shape = 'u32[]', space=smem, size = 0x4, offset = 0x4, fixed_abs, tag = 'smem constant byte address 0x4 - core index']
  #allocation1 [shape = 'u32[144,128]{1,0:T(1,128)}', space=vmem, size = 0x12000, scoped, tag = 'internal scratch']
  #allocation2 [shape = 'f32[16,32]{1,0:T(8,128)}', space=vmem, size = 0x2000, scoped, tag = 'scratch operand']
  %s0 = inlined_call_operand.hbm [shape: f32[2,8,32], index: 0, kind: input, shape index: {}]
  %s1 = inlined_call_operand.vmem [shape: bf16[2,32,32], index: 1, kind: input, shape index: {}]
  %s2 = inlined_call_operand.vmem [shape: f32[2,1,32], index: 2, kind: input, shape index: {}]
  %s3 = inlined_call_operand.vmem [shape: bf16[2,32,32], index: 3, kind: input, shape index: {}]
  %s4 = inlined_call_operand.vmem [shape: f32[2,1,32], index: 4, kind: input, shape index: {}]
  %s5 = inlined_call_operand.vmem [shape: bf16[2,32,32], index: 5, kind: input, shape index: {}]
  %s6 = inlined_call_operand.vmem [shape: f32[2,1,32], index: 6, kind: input, shape index: {}]
  %s7 = inlined_call_operand.hbm [shape: bf16[2,32,32], index: 7, kind: input, shape index: {}]
  %s8 = inlined_call_operand.vmem [shape: f32[2,1,32], index: 8, kind: input, shape index: {}]
  %s9 = inlined_call_operand.hbm [shape: bf16[2,32,64], index: 9, kind: input, shape index: {}]
  %s10 = inlined_call_operand.vmem [shape: f32[2,1,64], index: 10, kind: input, shape index: {}]
  %s11 = inlined_call_operand.vmem [shape: bf16[2,64,32], index: 11, kind: input, shape index: {}]
  %s12 = inlined_call_operand.vmem [shape: f32[2,1,32], index: 12, kind: input, shape index: {}]
  %s13 = inlined_call_operand.vmem [shape: f32[2,1,32], index: 13, kind: input, shape index: {}]
  %s14 = inlined_call_operand.vmem [shape: f32[2,1,32], index: 14, kind: input, shape index: {}]
  %s15 = inlined_call_operand.vmem [shape: f32[2,1,32], index: 15, kind: input, shape index: {}]
  %s16 = inlined_call_operand.vmem [shape: f32[2,1,32], index: 16, kind: input, shape index: {}]
  %s17 = inlined_call_operand.hbm [shape: f32[2,8,32], index: 17, kind: output, shape index: {}]
  %s18 = sld [smem:[#allocation0]]
  $region90: #{tpu_custom_call.1} parent=0
    _
  %s20 = ssub.s32 1, %s18
  %s21 = scalar_select 0, %s20, %s18
  $region1: #{tpu_custom_call.1} parent=0
    #allocation3 [shape = 'u8[8192]{0}', space=vmem, size = 0x2000, scoped, tag = 'input window, operand 0, single buffered']
    #allocation4 [shape = 's32[1]{0}', space=sflag, size = 0x4, scoped, tag = 'scoped memory for tpu_custom_call.1']
    #allocation5 [shape = 's32[1]{0}', space=sflag, size = 0x4, scoped, tag = 'scoped memory for tpu_custom_call.1']
    #allocation6 [shape = 'u8[16384]{0}', space=vmem, size = 0x4000, scoped, tag = 'input window, operand 7, single buffered']
    #allocation7 [shape = 's32[1]{0}', space=sflag, size = 0x4, scoped, tag = 'scoped memory for tpu_custom_call.1']
    #allocation8 [shape = 'u8[16384]{0}', space=vmem, size = 0x4000, scoped, tag = 'input window, operand 9, single buffered']
    #allocation9 [shape = 'u8[8192]{0}', space=vmem, size = 0x2000, scoped, tag = 'output window, operand 0, single buffered']
    %22 = vsyncpa [#allocation4], 0
    %23 = vsyncpa [#allocation7], 0
    %24 = vsyncpa [#allocation5], 0
    // Predicated region
    $region2: #{tpu_custom_call.1} parent=1 // pred_check
      _
    $region3: #{tpu_custom_call.1} parent=1 // pred_check_branch
      %26 = sbr.rel (0) target = $region5
    $region4: #{tpu_custom_call.1} parent=1 // pred_region
      %s28 = ssub.s32 256, 256
      %29 = vsyncadd [#allocation4], %s28
      %s30 = sshll.u32 [#allocation3], 4
      %s31 = int_to_ptr.vmem [resolvable:$true] %s30
      %36 = dma.hbm_to_vmem [thread:$0]  %s0, 256, %s31, [#allocation4], 128, 128, 8
    $region5: #{tpu_custom_call.1} parent=1 // pred_fallthru
      _
    // Predicated region
    $region6: #{tpu_custom_call.1} parent=1 // pred_check
      _
    $region7: #{tpu_custom_call.1} parent=1 // pred_check_branch
      %38 = sbr.rel (0) target = $region9
    $region8: #{tpu_custom_call.1} parent=1 // pred_region
      _
    $region9: #{tpu_custom_call.1} parent=1 // pred_fallthru
      _
    // Predicated region
    $region10: #{tpu_custom_call.1} parent=1 // pred_check
      _
    $region11: #{tpu_custom_call.1} parent=1 // pred_check_branch
      %40 = sbr.rel (0) target = $region13
    $region12: #{tpu_custom_call.1} parent=1 // pred_region
      _
    $region13: #{tpu_custom_call.1} parent=1 // pred_fallthru
      _
    // Predicated region
    $region14: #{tpu_custom_call.1} parent=1 // pred_check
      _
    $region15: #{tpu_custom_call.1} parent=1 // pred_check_branch
      %42 = sbr.rel (0) target = $region17
    $region16: #{tpu_custom_call.1} parent=1 // pred_region
      _
    $region17: #{tpu_custom_call.1} parent=1 // pred_fallthru
      _
    // Predicated region
    $region18: #{tpu_custom_call.1} parent=1 // pred_check
      _
    $region19: #{tpu_custom_call.1} parent=1 // pred_check_branch
      %44 = sbr.rel (0) target = $region21
    $region20: #{tpu_custom_call.1} parent=1 // pred_region
      _
    $region21: #{tpu_custom_call.1} parent=1 // pred_fallthru
      _
    // Predicated region
    $region22: #{tpu_custom_call.1} parent=1 // pred_check
      _
    $region23: #{tpu_custom_call.1} parent=1 // pred_check_branch
      %46 = sbr.rel (0) target = $region25
    $region24: #{tpu_custom_call.1} parent=1 // pred_region
      _
    $region25: #{tpu_custom_call.1} parent=1 // pred_fallthru
      _
    // Predicated region
    $region26: #{tpu_custom_call.1} parent=1 // pred_check
      _
    $region27: #{tpu_custom_call.1} parent=1 // pred_check_branch
      %48 = sbr.rel (0) target = $region29
    $region28: #{tpu_custom_call.1} parent=1 // pred_region
      _
    $region29: #{tpu_custom_call.1} parent=1 // pred_fallthru
      _
    // Predicated region
    $region30: #{tpu_custom_call.1} parent=1 // pred_check
      _
    $region31: #{tpu_custom_call.1} parent=1 // pred_check_branch
      %50 = sbr.rel (0) target = $region33
    $region32: #{tpu_custom_call.1} parent=1 // pred_region
      %s52 = ssub.s32 512, 512
      %53 = vsyncadd [#allocation7], %s52
      %s54 = sshll.u32 [#allocation6], 4
      %s55 = int_to_ptr.vmem [resolvable:$true] %s54
      %60 = dma.hbm_to_vmem [thread:$0]  %s7, 512, %s55, [#allocation7], 64, 64, 4
    $region33: #{tpu_custom_call.1} parent=1 // pred_fallthru
      _
    // Predicated region
    $region34: #{tpu_custom_call.1} parent=1 // pred_check
      _
    $region35: #{tpu_custom_call.1} parent=1 // pred_check_branch
      %62 = sbr.rel (0) target = $region37
    $region36: #{tpu_custom_call.1} parent=1 // pred_region
      _
    $region37: #{tpu_custom_call.1} parent=1 // pred_fallthru
      _
    // Predicated region
    $region38: #{tpu_custom_call.1} parent=1 // pred_check
      _
    $region39: #{tpu_custom_call.1} parent=1 // pred_check_branch
      %64 = sbr.rel (0) target = $region41
    $region40: #{tpu_custom_call.1} parent=1 // pred_region
      %s66 = ssub.s32 512, 512
      %67 = vsyncadd [#allocation7], %s66
      %s68 = sshll.u32 [#allocation8], 4
      %s69 = int_to_ptr.vmem [resolvable:$true] %s68
      %74 = dma.hbm_to_vmem [thread:$0]  %s9, 512, %s69, [#allocation7], 64, 64, 4
    $region41: #{tpu_custom_call.1} parent=1 // pred_fallthru
      _
    // Predicated region
    $region42: #{tpu_custom_call.1} parent=1 // pred_check
      _
    $region43: #{tpu_custom_call.1} parent=1 // pred_check_branch
      %76 = sbr.rel (0) target = $region45
    $region44: #{tpu_custom_call.1} parent=1 // pred_region
      _
    $region45: #{tpu_custom_call.1} parent=1 // pred_fallthru
      _
    // Predicated region
    $region46: #{tpu_custom_call.1} parent=1 // pred_check
      _
    $region47: #{tpu_custom_call.1} parent=1 // pred_check_branch
      %78 = sbr.rel (0) target = $region49
    $region48: #{tpu_custom_call.1} parent=1 // pred_region
      _
    $region49: #{tpu_custom_call.1} parent=1 // pred_fallthru
      _
    // Predicated region
    $region50: #{tpu_custom_call.1} parent=1 // pred_check
      _
    $region51: #{tpu_custom_call.1} parent=1 // pred_check_branch
      %80 = sbr.rel (0) target = $region53
    $region52: #{tpu_custom_call.1} parent=1 // pred_region
      _
    $region53: #{tpu_custom_call.1} parent=1 // pred_fallthru
      _
    // Predicated region
    $region54: #{tpu_custom_call.1} parent=1 // pred_check
      _
    $region55: #{tpu_custom_call.1} parent=1 // pred_check_branch
      %82 = sbr.rel (0) target = $region57
    $region56: #{tpu_custom_call.1} parent=1 // pred_region
      _
    $region57: #{tpu_custom_call.1} parent=1 // pred_fallthru
      _
    // Predicated region
    $region58: #{tpu_custom_call.1} parent=1 // pred_check
      _
    $region59: #{tpu_custom_call.1} parent=1 // pred_check_branch
      %84 = sbr.rel (0) target = $region61
    $region60: #{tpu_custom_call.1} parent=1 // pred_region
      _
    $region61: #{tpu_custom_call.1} parent=1 // pred_fallthru
      _
    // Predicated region
    $region62: #{tpu_custom_call.1} parent=1 // pred_check
      _
    $region63: #{tpu_custom_call.1} parent=1 // pred_check_branch
      %86 = sbr.rel (0) target = $region65
    $region64: #{tpu_custom_call.1} parent=1 // pred_region
      _
    $region65: #{tpu_custom_call.1} parent=1 // pred_fallthru
      _
    // Predicated region
    $region66: #{tpu_custom_call.1} parent=1 // pred_check
      _
    $region67: #{tpu_custom_call.1} parent=1 // pred_check_branch
      %88 = sbr.rel (0) target = $region69
    $region68: #{tpu_custom_call.1} parent=1 // pred_region
      _
    $region69: #{tpu_custom_call.1} parent=1 // pred_fallthru
      _
    // Predicated region
    $region70: #{tpu_custom_call.1} parent=1 // pred_check
      _
    $region71: #{tpu_custom_call.1} parent=1 // pred_check_branch
      %90 = sbr.rel (0) target = $region73
    $region72: #{tpu_custom_call.1} parent=1 // pred_region
      %91 = dma.done [#allocation4], 256
    $region73: #{tpu_custom_call.1} parent=1 // pred_fallthru
      _
    // Predicated region
    $region74: #{tpu_custom_call.1} parent=1 // pred_check
      _
    $region75: #{tpu_custom_call.1} parent=1 // pred_check_branch
      %93 = sbr.rel (0) target = $region77
    $region76: #{tpu_custom_call.1} parent=1 // pred_region
      %94 = dma.done [#allocation7], 512
    $region77: #{tpu_custom_call.1} parent=1 // pred_fallthru
      _
    // Predicated region
    $region78: #{tpu_custom_call.1} parent=1 // pred_check
      _
    $region79: #{tpu_custom_call.1} parent=1 // pred_check_branch
      %96 = sbr.rel (0) target = $region81
    $region80: #{tpu_custom_call.1} parent=1 // pred_region
      %97 = dma.done [#allocation7], 512
    $region81: #{tpu_custom_call.1} parent=1 // pred_fallthru
      _
    %v99 = vld [vmem:[#allocation3] sm:$0xff]
    %v100 = vld [vmem:[#allocation3 + $0x8] sm:$0xff]
    %v101 = vld [vmem:[%s1] sm:$0xf]
    %v102 = vld [vmem:[%s1 + $0x4] sm:$0xf]
    %v103 = vld [vmem:[%s1 + $0x8] sm:$0xf]
    %v104 = vld [vmem:[%s1 + $0xc] sm:$0xf]
    %v105 = vld [vmem:[%s3] sm:$0xf]
    %v106 = vld [vmem:[%s3 + $0x4] sm:$0xf]
    %v107 = vld [vmem:[%s3 + $0x8] sm:$0xf]
    %v108 = vld [vmem:[%s3 + $0xc] sm:$0xf]
    %v109 = vld [vmem:[%s5] sm:$0xf]
    %v110 = vld [vmem:[%s5 + $0x4] sm:$0xf]
    %v111 = vld [vmem:[%s5 + $0x8] sm:$0xf]
    %v112 = vld [vmem:[%s5 + $0xc] sm:$0xf]
    %v113 = vld [vmem:[#allocation6] sm:$0xf]
    %v114 = vld [vmem:[#allocation6 + $0x4] sm:$0xf]
    %v115 = vld [vmem:[#allocation6 + $0x8] sm:$0xf]
    %v116 = vld [vmem:[#allocation6 + $0xc] sm:$0xf]
    %v117 = vld [vmem:[#allocation8] sm:$0xf]
    %v118 = vld [vmem:[#allocation8 + $0x4] sm:$0xf]
    %v119 = vld [vmem:[#allocation8 + $0x8] sm:$0xf]
    %v120 = vld [vmem:[#allocation8 + $0xc] sm:$0xf]
    %v121 = vld [vmem:[%s11] sm:$0xf]
    %v122 = vld [vmem:[%s11 + $0x4] sm:$0xf]
    %v123 = vld [vmem:[%s11 + $0x8] sm:$0xf]
    %v124 = vld [vmem:[%s11 + $0xc] sm:$0xf]
    %v125 = vld [vmem:[%s11 + $0x10] sm:$0xf]
    %v126 = vld [vmem:[%s11 + $0x14] sm:$0xf]
    %v127 = vld [vmem:[%s11 + $0x18] sm:$0xf]
    %v128 = vld [vmem:[%s11 + $0x1c] sm:$0xf]
    %v129 = vld [vmem:[%s2] sm:$0x1]
    %v130 = vld [vmem:[%s4] sm:$0x1]
    %v131 = vld [vmem:[%s6] sm:$0x1]
    %v132 = vld [vmem:[%s8] sm:$0x1]
    %v133 = vld [vmem:[%s10] sm:$0x1]
    %v134 = vld [vmem:[%s12] sm:$0x1]
    %v135 = vld [vmem:[%s13] sm:$0x1]
    %v136 = vld [vmem:[%s14] sm:$0x1]
    %v137 = vld [vmem:[%s15] sm:$0x1]
    %v138 = vld [vmem:[%s16] sm:$0x1]
    %v139 = vpack.c.bf16 %v100, %v99
    %v141 = vlaneseq
    %v142 = vshrl.u32 %v141, 7
    %v143 = vsub.s32 0, %v142
    %v144 = vrot.slane %v129, %v143
    %v150 = vunpack.c.l.b16 %v101
    %v151 = vunpack.c.l.b16 %v102
    %v152 = vunpack.c.l.b16 %v103
    %v153 = vunpack.c.l.b16 %v104
    %v154 = vpack.c.b16 %v151, %v150
    %v155 = vpack.c.b16 %v153, %v152
    %vm158 = vcmask 261120
    %v160 = vsel %vm158, %v139, 0
    %162 = vmatprep.subr.bf16.mxu0 0
    %163 = vmatpush1.bf16.msra.mxu0 0
    %164 = vmatprep.subr.bf16.mxu0 0
    %165 = vmatpush1.bf16.msra.mxu0 0
    %166 = vmatprep.subr.bf16.mxu0 0
    %167 = vmatpush1.bf16.msra.mxu0 0
    %168 = vmatprep.subr.bf16.mxu0 0
    %169 = vmatpush1.bf16.msra.mxu0 0
    %170 = vmatprep.subr.bf16.mxu0 0
    %171 = vmatpush1.bf16.msra.mxu0 0
    %172 = vmatprep.subr.bf16.mxu0 0
    %173 = vmatpush1.bf16.msra.mxu0 0
    %174 = vmatprep.subr.bf16.mxu0 0
    %175 = vmatpush1.bf16.msra.mxu0 %v155
    %176 = vmatprep.subr.bf16.mxu0 0
    %177 = vmatpush1.bf16.msra.mxu0 %v154
    %178 = vmatprep.subr.bf16.mxu0 0
    %179 = vmatpush2.bf16.msra.mxu0 0
    %180 = vmatprep.subr.bf16.mxu0 0
    %181 = vmatpush2.bf16.msra.mxu0 0
    %182 = vmatprep.subr.bf16.mxu0 0
    %183 = vmatpush2.bf16.msra.mxu0 0
    %184 = vmatprep.subr.bf16.mxu0 0
    %185 = vmatpush2.bf16.msra.mxu0 0
    %186 = vmatprep.subr.bf16.mxu0 0
    %187 = vmatpush2.bf16.msra.mxu0 0
    %188 = vmatprep.subr.bf16.mxu0 0
    %189 = vmatpush2.bf16.msra.mxu0 0
    %190 = vmatprep.subr.bf16.mxu0 0
    %191 = vmatpush2.bf16.msra.mxu0 0
    %192 = vmatprep.subr.bf16.mxu0 0
    %193 = vmatpush2.bf16.msra.mxu0 0
    %194 = vmatprep.mubr.bf16.mxu0 0
    %195 = vmatmul.mubr.bf16.gmra.mxu0 %v160
    %v196 = vpop.f32.mrf.mxu0
    %v197 = vadd.f32 %v144, %v196
    %v198 = vpop.f32.mrf.mxu0
    %v199 = vpop.f32.mrf.mxu0
    %v200 = vadd.f32 %v144, %v199
    %v201 = vpop.f32.mrf.mxu0
    %202 = vdwg.mxu0
    %v204 = vlaneseq
    %v205 = vshrl.u32 %v204, 7
    %v206 = vsub.s32 0, %v205
    %v207 = vrot.slane %v130, %v206
    %v213 = vunpack.c.l.b16 %v105
    %v214 = vunpack.c.l.b16 %v106
    %v215 = vunpack.c.l.b16 %v107
    %v216 = vunpack.c.l.b16 %v108
    %v217 = vpack.c.b16 %v214, %v213
    %v218 = vpack.c.b16 %v216, %v215
    %221 = vmatprep.subr.bf16.mxu0 0
    %222 = vmatpush1.bf16.msra.mxu0 0
    %223 = vmatprep.subr.bf16.mxu0 0
    %224 = vmatpush1.bf16.msra.mxu0 0
    %225 = vmatprep.subr.bf16.mxu0 0
    %226 = vmatpush1.bf16.msra.mxu0 0
    %227 = vmatprep.subr.bf16.mxu0 0
    %228 = vmatpush1.bf16.msra.mxu0 0
    %229 = vmatprep.subr.bf16.mxu0 0
    %230 = vmatpush1.bf16.msra.mxu0 0
    %231 = vmatprep.subr.bf16.mxu0 0
    %232 = vmatpush1.bf16.msra.mxu0 0
    %233 = vmatprep.subr.bf16.mxu0 0
    %234 = vmatpush1.bf16.msra.mxu0 %v218
    %235 = vmatprep.subr.bf16.mxu0 0
    %236 = vmatpush1.bf16.msra.mxu0 %v217
    %237 = vmatprep.subr.bf16.mxu0 0
    %238 = vmatpush2.bf16.msra.mxu0 0
    %239 = vmatprep.subr.bf16.mxu0 0
    %240 = vmatpush2.bf16.msra.mxu0 0
    %241 = vmatprep.subr.bf16.mxu0 0
    %242 = vmatpush2.bf16.msra.mxu0 0
    %243 = vmatprep.subr.bf16.mxu0 0
    %244 = vmatpush2.bf16.msra.mxu0 0
    %245 = vmatprep.subr.bf16.mxu0 0
    %246 = vmatpush2.bf16.msra.mxu0 0
    %247 = vmatprep.subr.bf16.mxu0 0
    %248 = vmatpush2.bf16.msra.mxu0 0
    %249 = vmatprep.subr.bf16.mxu0 0
    %250 = vmatpush2.bf16.msra.mxu0 0
    %251 = vmatprep.subr.bf16.mxu0 0
    %252 = vmatpush2.bf16.msra.mxu0 0
    %253 = vmatprep.mubr.bf16.mxu0 0
    %254 = vmatmul.mubr.bf16.gmra.mxu0 %v160
    %v255 = vpop.f32.mrf.mxu0
    %v256 = vadd.f32 %v207, %v255
    %v257 = vpop.f32.mrf.mxu0
    %v258 = vpop.f32.mrf.mxu0
    %v259 = vadd.f32 %v207, %v258
    %v260 = vpop.f32.mrf.mxu0
    %261 = vdwg.mxu0
    %v263 = vlaneseq
    %v264 = vshrl.u32 %v263, 7
    %v265 = vsub.s32 0, %v264
    %v266 = vrot.slane %v131, %v265
    %v272 = vunpack.c.l.b16 %v109
    %v273 = vunpack.c.l.b16 %v110
    %v274 = vunpack.c.l.b16 %v111
    %v275 = vunpack.c.l.b16 %v112
    %v276 = vpack.c.b16 %v273, %v272
    %v277 = vpack.c.b16 %v275, %v274
    %280 = vmatprep.subr.bf16.mxu0 0
    %281 = vmatpush1.bf16.msra.mxu0 0
    %282 = vmatprep.subr.bf16.mxu0 0
    %283 = vmatpush1.bf16.msra.mxu0 0
    %284 = vmatprep.subr.bf16.mxu0 0
    %285 = vmatpush1.bf16.msra.mxu0 0
    %286 = vmatprep.subr.bf16.mxu0 0
    %287 = vmatpush1.bf16.msra.mxu0 0
    %288 = vmatprep.subr.bf16.mxu0 0
    %289 = vmatpush1.bf16.msra.mxu0 0
    %290 = vmatprep.subr.bf16.mxu0 0
    %291 = vmatpush1.bf16.msra.mxu0 0
    %292 = vmatprep.subr.bf16.mxu0 0
    %293 = vmatpush1.bf16.msra.mxu0 %v277
    %294 = vmatprep.subr.bf16.mxu0 0
    %295 = vmatpush1.bf16.msra.mxu0 %v276
    %296 = vmatprep.subr.bf16.mxu0 0
    %297 = vmatpush2.bf16.msra.mxu0 0
    %298 = vmatprep.subr.bf16.mxu0 0
    %299 = vmatpush2.bf16.msra.mxu0 0
    %300 = vmatprep.subr.bf16.mxu0 0
    %301 = vmatpush2.bf16.msra.mxu0 0
    %302 = vmatprep.subr.bf16.mxu0 0
    %303 = vmatpush2.bf16.msra.mxu0 0
    %304 = vmatprep.subr.bf16.mxu0 0
    %305 = vmatpush2.bf16.msra.mxu0 0
    %306 = vmatprep.subr.bf16.mxu0 0
    %307 = vmatpush2.bf16.msra.mxu0 0
    %308 = vmatprep.subr.bf16.mxu0 0
    %309 = vmatpush2.bf16.msra.mxu0 0
    %310 = vmatprep.subr.bf16.mxu0 0
    %311 = vmatpush2.bf16.msra.mxu0 0
    %312 = vmatprep.mubr.bf16.mxu0 0
    %313 = vmatmul.mubr.bf16.gmra.mxu0 %v160
    %v314 = vpop.f32.mrf.mxu0
    %v315 = vadd.f32 %v266, %v314
    %v316 = vpop.f32.mrf.mxu0
    %v317 = vpop.f32.mrf.mxu0
    %v318 = vadd.f32 %v266, %v317
    %v319 = vpop.f32.mrf.mxu0
    %320 = vdwg.mxu0
    %v321 = vpack.c.bf16 %v197, %v197
    %v322 = vpack.c.bf16 %v200, %v200
    %v323 = vpack.c.bf16 %v256, %v256
    %v324 = vpack.c.bf16 %v259, %v259
    %v325 = vpack.c.bf16 %v315, %v315
    %v326 = vpack.c.bf16 %v318, %v318
    %vm327 = vcmask 64512
    %v329 = vsel %vm327, %v321, 0
    %v332 = vsel %vm327, %v323, 0
    %334 = vmatprep.subr.bf16.mxu0 0
    %335 = vmatpush1.bf16.xpose.msra.mxu0 0
    %336 = vmatprep.subr.bf16.mxu0 0
    %337 = vmatpush1.bf16.xpose.msra.mxu0 0
    %338 = vmatprep.subr.bf16.mxu0 0
    %339 = vmatpush1.bf16.xpose.msra.mxu0 0
    %340 = vmatprep.subr.bf16.mxu0 0
    %341 = vmatpush1.bf16.xpose.msra.mxu0 0
    %342 = vmatprep.subr.bf16.mxu0 0
    %343 = vmatpush1.bf16.xpose.msra.mxu0 0
    %344 = vmatprep.subr.bf16.mxu0 0
    %345 = vmatpush1.bf16.xpose.msra.mxu0 0
    %346 = vmatprep.subr.bf16.mxu0 0
    %347 = vmatpush1.bf16.xpose.msra.mxu0 0
    %348 = vmatprep.subr.bf16.mxu0 0
    %349 = vmatpush1.bf16.xpose.msra.mxu0 %v332
    %350 = vmatprep.subr.bf16.mxu0 0
    %351 = vmatpush2.bf16.xpose.msra.mxu0 0
    %352 = vmatprep.subr.bf16.mxu0 0
    %353 = vmatpush2.bf16.xpose.msra.mxu0 0
    %354 = vmatprep.subr.bf16.mxu0 0
    %355 = vmatpush2.bf16.xpose.msra.mxu0 0
    %356 = vmatprep.subr.bf16.mxu0 0
    %357 = vmatpush2.bf16.xpose.msra.mxu0 0
    %358 = vmatprep.subr.bf16.mxu0 0
    %359 = vmatpush2.bf16.xpose.msra.mxu0 0
    %360 = vmatprep.subr.bf16.mxu0 0
    %361 = vmatpush2.bf16.xpose.msra.mxu0 0
    %362 = vmatprep.subr.bf16.mxu0 0
    %363 = vmatpush2.bf16.xpose.msra.mxu0 0
    %364 = vmatprep.subr.bf16.mxu0 0
    %365 = vmatpush2.bf16.xpose.msra.mxu0 0
    %366 = vmatprep.mubr.bf16.mxu0 0
    %367 = vmatmul.mubr.bf16.gmra.mxu0 %v329
    %v368 = vpop.f32.mrf.mxu0
    %v369 = vadd.f32 0.0, %v368
    %v370 = vpop.f32.mrf.mxu0
    %v371 = vpop.f32.mrf.mxu0
    %v372 = vpop.f32.mrf.mxu0
    %373 = vdwg.mxu0
    %v375 = vsel %vm327, %v322, 0
    %v378 = vsel %vm327, %v324, 0
    %380 = vmatprep.subr.bf16.mxu0 0
    %381 = vmatpush1.bf16.xpose.msra.mxu0 0
    %382 = vmatprep.subr.bf16.mxu0 0
    %383 = vmatpush1.bf16.xpose.msra.mxu0 0
    %384 = vmatprep.subr.bf16.mxu0 0
    %385 = vmatpush1.bf16.xpose.msra.mxu0 0
    %386 = vmatprep.subr.bf16.mxu0 0
    %387 = vmatpush1.bf16.xpose.msra.mxu0 0
    %388 = vmatprep.subr.bf16.mxu0 0
    %389 = vmatpush1.bf16.xpose.msra.mxu0 0
    %390 = vmatprep.subr.bf16.mxu0 0
    %391 = vmatpush1.bf16.xpose.msra.mxu0 0
    %392 = vmatprep.subr.bf16.mxu0 0
    %393 = vmatpush1.bf16.xpose.msra.mxu0 0
    %394 = vmatprep.subr.bf16.mxu0 0
    %395 = vmatpush1.bf16.xpose.msra.mxu0 %v378
    %396 = vmatprep.subr.bf16.mxu0 0
    %397 = vmatpush2.bf16.xpose.msra.mxu0 0
    %398 = vmatprep.subr.bf16.mxu0 0
    %399 = vmatpush2.bf16.xpose.msra.mxu0 0
    %400 = vmatprep.subr.bf16.mxu0 0
    %401 = vmatpush2.bf16.xpose.msra.mxu0 0
    %402 = vmatprep.subr.bf16.mxu0 0
    %403 = vmatpush2.bf16.xpose.msra.mxu0 0
    %404 = vmatprep.subr.bf16.mxu0 0
    %405 = vmatpush2.bf16.xpose.msra.mxu0 0
    %406 = vmatprep.subr.bf16.mxu0 0
    %407 = vmatpush2.bf16.xpose.msra.mxu0 0
    %408 = vmatprep.subr.bf16.mxu0 0
    %409 = vmatpush2.bf16.xpose.msra.mxu0 0
    %410 = vmatprep.subr.bf16.mxu0 0
    %411 = vmatpush2.bf16.xpose.msra.mxu0 0
    %412 = vmatprep.mubr.bf16.mxu0 0
    %413 = vmatmul.mubr.bf16.gmra.mxu0 %v375
    %v414 = vpop.f32.mrf.mxu0
    %v415 = vadd.f32 0.0, %v414
    %v416 = vpop.f32.mrf.mxu0
    %v417 = vpop.f32.mrf.mxu0
    %v418 = vpop.f32.mrf.mxu0
    %419 = vdwg.mxu0
    %v420 = vmul.f32 %v369, 0.35355338
    %v421 = vmul.f32 %v415, 0.35355338
    %v422 = vsel %vm327, %v420, -inf
    %423 = vmax.xlane.f32.xlu0 %v422
    %v424 = vpop.xlane.xlu0 %423
    %v425 = vsel %vm327, %v421, -inf
    %426 = vmax.xlane.f32.xlu0 %v425
    %v427 = vpop.xlane.xlu0 %426
    %v428 = vsub.f32 %v420, %v424
    %v429 = vsub.f32 %v421, %v427
    %v430 = vmul.f32 %v428, 1.442695
    %v431 = vpow.pop %v430
    %v432 = vmul.f32 %v429, 1.442695
    %v433 = vpow.pop %v432
    %v434 = vsel %vm327, %v431, 0.0
    %435 = vadd.xlane.f32.xlu0 %v434
    %v436 = vpop.xlane.xlu0 %435
    %v437 = vsel %vm327, %v433, 0.0
    %438 = vadd.xlane.f32.xlu0 %v437
    %v439 = vpop.xlane.xlu0 %438
    %v440 = vrcp.pop %v436
    %v441 = vrcp.pop %v439
    %v442 = vmul.f32 %v431, %v440
    %v443 = vmul.f32 %v433, %v441
    %v444 = vpack.c.bf16 %v442, %v442
    %v445 = vpack.c.bf16 %v443, %v443
    %v447 = vsel %vm327, %v444, 0
    %vm449 = vcmask 1043456
    %v451 = vsel %vm449, %v325, 0
    %453 = vmatprep.subr.bf16.mxu0 0
    %454 = vmatpush1.bf16.msra.mxu0 0
    %455 = vmatprep.subr.bf16.mxu0 0
    %456 = vmatpush1.bf16.msra.mxu0 0
    %457 = vmatprep.subr.bf16.mxu0 0
    %458 = vmatpush1.bf16.msra.mxu0 0
    %459 = vmatprep.subr.bf16.mxu0 0
    %460 = vmatpush1.bf16.msra.mxu0 0
    %461 = vmatprep.subr.bf16.mxu0 0
    %462 = vmatpush1.bf16.msra.mxu0 0
    %463 = vmatprep.subr.bf16.mxu0 0
    %464 = vmatpush1.bf16.msra.mxu0 0
    %465 = vmatprep.subr.bf16.mxu0 0
    %466 = vmatpush1.bf16.msra.mxu0 0
    %467 = vmatprep.subr.bf16.mxu0 0
    %468 = vmatpush1.bf16.msra.mxu0 %v451
    %469 = vmatprep.subr.bf16.mxu0 0
    %470 = vmatpush2.bf16.msra.mxu0 0
    %471 = vmatprep.subr.bf16.mxu0 0
    %472 = vmatpush2.bf16.msra.mxu0 0
    %473 = vmatprep.subr.bf16.mxu0 0
    %474 = vmatpush2.bf16.msra.mxu0 0
    %475 = vmatprep.subr.bf16.mxu0 0
    %476 = vmatpush2.bf16.msra.mxu0 0
    %477 = vmatprep.subr.bf16.mxu0 0
    %478 = vmatpush2.bf16.msra.mxu0 0
    %479 = vmatprep.subr.bf16.mxu0 0
    %480 = vmatpush2.bf16.msra.mxu0 0
    %481 = vmatprep.subr.bf16.mxu0 0
    %482 = vmatpush2.bf16.msra.mxu0 0
    %483 = vmatprep.subr.bf16.mxu0 0
    %484 = vmatpush2.bf16.msra.mxu0 0
    %485 = vmatprep.mubr.bf16.mxu0 0
    %486 = vmatmul.mubr.bf16.gmra.mxu0 %v447
    %v487 = vpop.f32.mrf.mxu0
    %v488 = vadd.f32 0.0, %v487
    %v489 = vpop.f32.mrf.mxu0
    %v490 = vpop.f32.mrf.mxu0
    %v491 = vpop.f32.mrf.mxu0
    %492 = vdwg.mxu0
    %v494 = vsel %vm327, %v445, 0
    %v497 = vsel %vm449, %v326, 0
    %499 = vmatprep.subr.bf16.mxu0 0
    %500 = vmatpush1.bf16.msra.mxu0 0
    %501 = vmatprep.subr.bf16.mxu0 0
    %502 = vmatpush1.bf16.msra.mxu0 0
    %503 = vmatprep.subr.bf16.mxu0 0
    %504 = vmatpush1.bf16.msra.mxu0 0
    %505 = vmatprep.subr.bf16.mxu0 0
    %506 = vmatpush1.bf16.msra.mxu0 0
    %507 = vmatprep.subr.bf16.mxu0 0
    %508 = vmatpush1.bf16.msra.mxu0 0
    %509 = vmatprep.subr.bf16.mxu0 0
    %510 = vmatpush1.bf16.msra.mxu0 0
    %511 = vmatprep.subr.bf16.mxu0 0
    %512 = vmatpush1.bf16.msra.mxu0 0
    %513 = vmatprep.subr.bf16.mxu0 0
    %514 = vmatpush1.bf16.msra.mxu0 %v497
    %515 = vmatprep.subr.bf16.mxu0 0
    %516 = vmatpush2.bf16.msra.mxu0 0
    %517 = vmatprep.subr.bf16.mxu0 0
    %518 = vmatpush2.bf16.msra.mxu0 0
    %519 = vmatprep.subr.bf16.mxu0 0
    %520 = vmatpush2.bf16.msra.mxu0 0
    %521 = vmatprep.subr.bf16.mxu0 0
    %522 = vmatpush2.bf16.msra.mxu0 0
    %523 = vmatprep.subr.bf16.mxu0 0
    %524 = vmatpush2.bf16.msra.mxu0 0
    %525 = vmatprep.subr.bf16.mxu0 0
    %526 = vmatpush2.bf16.msra.mxu0 0
    %527 = vmatprep.subr.bf16.mxu0 0
    %528 = vmatpush2.bf16.msra.mxu0 0
    %529 = vmatprep.subr.bf16.mxu0 0
    %530 = vmatpush2.bf16.msra.mxu0 0
    %531 = vmatprep.mubr.bf16.mxu0 0
    %532 = vmatmul.mubr.bf16.gmra.mxu0 %v494
    %v533 = vpop.f32.mrf.mxu0
    %v534 = vadd.f32 0.0, %v533
    %v535 = vpop.f32.mrf.mxu0
    %v536 = vpop.f32.mrf.mxu0
    %v537 = vpop.f32.mrf.mxu0
    %538 = vdwg.mxu0
    %539 = vst.msk [vmem:[#allocation2] sm:$0xff] %vm327, %v488
    %540 = vst.msk [vmem:[#allocation2 + $0x8] sm:$0xff] %vm327, %v534
    %542 = vrot.lane.b32.xlu0 %v321, 120
    %v543 = vpop.permute.xlu0 %542
    %545 = vrot.lane.b32.xlu0 %v323, 120
    %v546 = vpop.permute.xlu0 %545
    %v548 = vsel %vm327, %v543, 0
    %v551 = vsel %vm327, %v546, 0
    %553 = vmatprep.subr.bf16.mxu0 0
    %554 = vmatpush1.bf16.xpose.msra.mxu0 0
    %555 = vmatprep.subr.bf16.mxu0 0
    %556 = vmatpush1.bf16.xpose.msra.mxu0 0
    %557 = vmatprep.subr.bf16.mxu0 0
    %558 = vmatpush1.bf16.xpose.msra.mxu0 0
    %559 = vmatprep.subr.bf16.mxu0 0
    %560 = vmatpush1.bf16.xpose.msra.mxu0 0
    %561 = vmatprep.subr.bf16.mxu0 0
    %562 = vmatpush1.bf16.xpose.msra.mxu0 0
    %563 = vmatprep.subr.bf16.mxu0 0
    %564 = vmatpush1.bf16.xpose.msra.mxu0 0
    %565 = vmatprep.subr.bf16.mxu0 0
    %566 = vmatpush1.bf16.xpose.msra.mxu0 0
    %567 = vmatprep.subr.bf16.mxu0 0
    %568 = vmatpush1.bf16.xpose.msra.mxu0 %v551
    %569 = vmatprep.subr.bf16.mxu0 0
    %570 = vmatpush2.bf16.xpose.msra.mxu0 0
    %571 = vmatprep.subr.bf16.mxu0 0
    %572 = vmatpush2.bf16.xpose.msra.mxu0 0
    %573 = vmatprep.subr.bf16.mxu0 0
    %574 = vmatpush2.bf16.xpose.msra.mxu0 0
    %575 = vmatprep.subr.bf16.mxu0 0
    %576 = vmatpush2.bf16.xpose.msra.mxu0 0
    %577 = vmatprep.subr.bf16.mxu0 0
    %578 = vmatpush2.bf16.xpose.msra.mxu0 0
    %579 = vmatprep.subr.bf16.mxu0 0
    %580 = vmatpush2.bf16.xpose.msra.mxu0 0
    %581 = vmatprep.subr.bf16.mxu0 0
    %582 = vmatpush2.bf16.xpose.msra.mxu0 0
    %583 = vmatprep.subr.bf16.mxu0 0
    %584 = vmatpush2.bf16.xpose.msra.mxu0 0
    %585 = vmatprep.mubr.bf16.mxu0 0
    %586 = vmatmul.mubr.bf16.gmra.mxu0 %v548
    %v587 = vpop.f32.mrf.mxu0
    %v588 = vadd.f32 0.0, %v587
    %v589 = vpop.f32.mrf.mxu0
    %v590 = vpop.f32.mrf.mxu0
    %v591 = vpop.f32.mrf.mxu0
    %592 = vdwg.mxu0
    %594 = vrot.lane.b32.xlu0 %v322, 120
    %v595 = vpop.permute.xlu0 %594
    %597 = vrot.lane.b32.xlu0 %v324, 120
    %v598 = vpop.permute.xlu0 %597
    %v600 = vsel %vm327, %v595, 0
    %v603 = vsel %vm327, %v598, 0
    %605 = vmatprep.subr.bf16.mxu0 0
    %606 = vmatpush1.bf16.xpose.msra.mxu0 0
    %607 = vmatprep.subr.bf16.mxu0 0
    %608 = vmatpush1.bf16.xpose.msra.mxu0 0
    %609 = vmatprep.subr.bf16.mxu0 0
    %610 = vmatpush1.bf16.xpose.msra.mxu0 0
    %611 = vmatprep.subr.bf16.mxu0 0
    %612 = vmatpush1.bf16.xpose.msra.mxu0 0
    %613 = vmatprep.subr.bf16.mxu0 0
    %614 = vmatpush1.bf16.xpose.msra.mxu0 0
    %615 = vmatprep.subr.bf16.mxu0 0
    %616 = vmatpush1.bf16.xpose.msra.mxu0 0
    %617 = vmatprep.subr.bf16.mxu0 0
    %618 = vmatpush1.bf16.xpose.msra.mxu0 0
    %619 = vmatprep.subr.bf16.mxu0 0
    %620 = vmatpush1.bf16.xpose.msra.mxu0 %v603
    %621 = vmatprep.subr.bf16.mxu0 0
    %622 = vmatpush2.bf16.xpose.msra.mxu0 0
    %623 = vmatprep.subr.bf16.mxu0 0
    %624 = vmatpush2.bf16.xpose.msra.mxu0 0
    %625 = vmatprep.subr.bf16.mxu0 0
    %626 = vmatpush2.bf16.xpose.msra.mxu0 0
    %627 = vmatprep.subr.bf16.mxu0 0
    %628 = vmatpush2.bf16.xpose.msra.mxu0 0
    %629 = vmatprep.subr.bf16.mxu0 0
    %630 = vmatpush2.bf16.xpose.msra.mxu0 0
    %631 = vmatprep.subr.bf16.mxu0 0
    %632 = vmatpush2.bf16.xpose.msra.mxu0 0
    %633 = vmatprep.subr.bf16.mxu0 0
    %634 = vmatpush2.bf16.xpose.msra.mxu0 0
    %635 = vmatprep.subr.bf16.mxu0 0
    %636 = vmatpush2.bf16.xpose.msra.mxu0 0
    %637 = vmatprep.mubr.bf16.mxu0 0
    %638 = vmatmul.mubr.bf16.gmra.mxu0 %v600
    %v639 = vpop.f32.mrf.mxu0
    %v640 = vadd.f32 0.0, %v639
    %v641 = vpop.f32.mrf.mxu0
    %v642 = vpop.f32.mrf.mxu0
    %v643 = vpop.f32.mrf.mxu0
    %644 = vdwg.mxu0
    %v645 = vmul.f32 %v588, 0.35355338
    %v646 = vmul.f32 %v640, 0.35355338
    %v647 = vsel %vm327, %v645, -inf
    %648 = vmax.xlane.f32.xlu0 %v647
    %v649 = vpop.xlane.xlu0 %648
    %v650 = vsel %vm327, %v646, -inf
    %651 = vmax.xlane.f32.xlu0 %v650
    %v652 = vpop.xlane.xlu0 %651
    %v653 = vsub.f32 %v645, %v649
    %v654 = vsub.f32 %v646, %v652
    %v655 = vmul.f32 %v653, 1.442695
    %v656 = vpow.pop %v655
    %v657 = vmul.f32 %v654, 1.442695
    %v658 = vpow.pop %v657
    %v659 = vsel %vm327, %v656, 0.0
    %660 = vadd.xlane.f32.xlu0 %v659
    %v661 = vpop.xlane.xlu0 %660
    %v662 = vsel %vm327, %v658, 0.0
    %663 = vadd.xlane.f32.xlu0 %v662
    %v664 = vpop.xlane.xlu0 %663
    %v665 = vrcp.pop %v661
    %v666 = vrcp.pop %v664
    %v667 = vmul.f32 %v656, %v665
    %v668 = vmul.f32 %v658, %v666
    %v669 = vpack.c.bf16 %v667, %v667
    %v670 = vpack.c.bf16 %v668, %v668
    %672 = vrot.lane.b32.xlu0 %v325, 120
    %v673 = vpop.permute.xlu0 %672
    %v675 = vsel %vm327, %v669, 0
    %v678 = vsel %vm449, %v673, 0
    %680 = vmatprep.subr.bf16.mxu0 0
    %681 = vmatpush1.bf16.msra.mxu0 0
    %682 = vmatprep.subr.bf16.mxu0 0
    %683 = vmatpush1.bf16.msra.mxu0 0
    %684 = vmatprep.subr.bf16.mxu0 0
    %685 = vmatpush1.bf16.msra.mxu0 0
    %686 = vmatprep.subr.bf16.mxu0 0
    %687 = vmatpush1.bf16.msra.mxu0 0
    %688 = vmatprep.subr.bf16.mxu0 0
    %689 = vmatpush1.bf16.msra.mxu0 0
    %690 = vmatprep.subr.bf16.mxu0 0
    %691 = vmatpush1.bf16.msra.mxu0 0
    %692 = vmatprep.subr.bf16.mxu0 0
    %693 = vmatpush1.bf16.msra.mxu0 0
    %694 = vmatprep.subr.bf16.mxu0 0
    %695 = vmatpush1.bf16.msra.mxu0 %v678
    %696 = vmatprep.subr.bf16.mxu0 0
    %697 = vmatpush2.bf16.msra.mxu0 0
    %698 = vmatprep.subr.bf16.mxu0 0
    %699 = vmatpush2.bf16.msra.mxu0 0
    %700 = vmatprep.subr.bf16.mxu0 0
    %701 = vmatpush2.bf16.msra.mxu0 0
    %702 = vmatprep.subr.bf16.mxu0 0
    %703 = vmatpush2.bf16.msra.mxu0 0
    %704 = vmatprep.subr.bf16.mxu0 0
    %705 = vmatpush2.bf16.msra.mxu0 0
    %706 = vmatprep.subr.bf16.mxu0 0
    %707 = vmatpush2.bf16.msra.mxu0 0
    %708 = vmatprep.subr.bf16.mxu0 0
    %709 = vmatpush2.bf16.msra.mxu0 0
    %710 = vmatprep.subr.bf16.mxu0 0
    %711 = vmatpush2.bf16.msra.mxu0 0
    %712 = vmatprep.mubr.bf16.mxu0 0
    %713 = vmatmul.mubr.bf16.gmra.mxu0 %v675
    %v714 = vpop.f32.mrf.mxu0
    %v715 = vadd.f32 0.0, %v714
    %v716 = vpop.f32.mrf.mxu0
    %v717 = vpop.f32.mrf.mxu0
    %v718 = vpop.f32.mrf.mxu0
    %719 = vdwg.mxu0
    %721 = vrot.lane.b32.xlu0 %v326, 120
    %v722 = vpop.permute.xlu0 %721
    %v724 = vsel %vm327, %v670, 0
    %v727 = vsel %vm449, %v722, 0
    %729 = vmatprep.subr.bf16.mxu0 0
    %730 = vmatpush1.bf16.msra.mxu0 0
    %731 = vmatprep.subr.bf16.mxu0 0
    %732 = vmatpush1.bf16.msra.mxu0 0
    %733 = vmatprep.subr.bf16.mxu0 0
    %734 = vmatpush1.bf16.msra.mxu0 0
    %735 = vmatprep.subr.bf16.mxu0 0
    %736 = vmatpush1.bf16.msra.mxu0 0
    %737 = vmatprep.subr.bf16.mxu0 0
    %738 = vmatpush1.bf16.msra.mxu0 0
    %739 = vmatprep.subr.bf16.mxu0 0
    %740 = vmatpush1.bf16.msra.mxu0 0
    %741 = vmatprep.subr.bf16.mxu0 0
    %742 = vmatpush1.bf16.msra.mxu0 0
    %743 = vmatprep.subr.bf16.mxu0 0
    %744 = vmatpush1.bf16.msra.mxu0 %v727
    %745 = vmatprep.subr.bf16.mxu0 0
    %746 = vmatpush2.bf16.msra.mxu0 0
    %747 = vmatprep.subr.bf16.mxu0 0
    %748 = vmatpush2.bf16.msra.mxu0 0
    %749 = vmatprep.subr.bf16.mxu0 0
    %750 = vmatpush2.bf16.msra.mxu0 0
    %751 = vmatprep.subr.bf16.mxu0 0
    %752 = vmatpush2.bf16.msra.mxu0 0
    %753 = vmatprep.subr.bf16.mxu0 0
    %754 = vmatpush2.bf16.msra.mxu0 0
    %755 = vmatprep.subr.bf16.mxu0 0
    %756 = vmatpush2.bf16.msra.mxu0 0
    %757 = vmatprep.subr.bf16.mxu0 0
    %758 = vmatpush2.bf16.msra.mxu0 0
    %759 = vmatprep.subr.bf16.mxu0 0
    %760 = vmatpush2.bf16.msra.mxu0 0
    %761 = vmatprep.mubr.bf16.mxu0 0
    %762 = vmatmul.mubr.bf16.gmra.mxu0 %v724
    %v763 = vpop.f32.mrf.mxu0
    %v764 = vadd.f32 0.0, %v763
    %v765 = vpop.f32.mrf.mxu0
    %v766 = vpop.f32.mrf.mxu0
    %v767 = vpop.f32.mrf.mxu0
    %768 = vdwg.mxu0
    %771 = vrot.lane.b32.xlu0 %v715, 8
    %v772 = vpop.permute.xlu0 %771
    %773 = vrot.lane.b32.xlu0 %v764, 8
    %v774 = vpop.permute.xlu0 %773
    %vm777 = vcmask 130112
    %778 = vst.msk [vmem:[#allocation2] sm:$0xff] %vm777, %v772
    %779 = vst.msk [vmem:[#allocation2 + $0x8] sm:$0xff] %vm777, %v774
    %780 = vrot.lane.b32.xlu0 %v321, 112
    %v781 = vpop.permute.xlu0 %780
    %782 = vrot.lane.b32.xlu0 %v323, 112
    %v783 = vpop.permute.xlu0 %782
    %v785 = vsel %vm327, %v781, 0
    %v788 = vsel %vm327, %v783, 0
    %790 = vmatprep.subr.bf16.mxu0 0
    %791 = vmatpush1.bf16.xpose.msra.mxu0 0
    %792 = vmatprep.subr.bf16.mxu0 0
    %793 = vmatpush1.bf16.xpose.msra.mxu0 0
    %794 = vmatprep.subr.bf16.mxu0 0
    %795 = vmatpush1.bf16.xpose.msra.mxu0 0
    %796 = vmatprep.subr.bf16.mxu0 0
    %797 = vmatpush1.bf16.xpose.msra.mxu0 0
    %798 = vmatprep.subr.bf16.mxu0 0
    %799 = vmatpush1.bf16.xpose.msra.mxu0 0
    %800 = vmatprep.subr.bf16.mxu0 0
    %801 = vmatpush1.bf16.xpose.msra.mxu0 0
    %802 = vmatprep.subr.bf16.mxu0 0
    %803 = vmatpush1.bf16.xpose.msra.mxu0 0
    %804 = vmatprep.subr.bf16.mxu0 0
    %805 = vmatpush1.bf16.xpose.msra.mxu0 %v788
    %806 = vmatprep.subr.bf16.mxu0 0
    %807 = vmatpush2.bf16.xpose.msra.mxu0 0
    %808 = vmatprep.subr.bf16.mxu0 0
    %809 = vmatpush2.bf16.xpose.msra.mxu0 0
    %810 = vmatprep.subr.bf16.mxu0 0
    %811 = vmatpush2.bf16.xpose.msra.mxu0 0
    %812 = vmatprep.subr.bf16.mxu0 0
    %813 = vmatpush2.bf16.xpose.msra.mxu0 0
    %814 = vmatprep.subr.bf16.mxu0 0
    %815 = vmatpush2.bf16.xpose.msra.mxu0 0
    %816 = vmatprep.subr.bf16.mxu0 0
    %817 = vmatpush2.bf16.xpose.msra.mxu0 0
    %818 = vmatprep.subr.bf16.mxu0 0
    %819 = vmatpush2.bf16.xpose.msra.mxu0 0
    %820 = vmatprep.subr.bf16.mxu0 0
    %821 = vmatpush2.bf16.xpose.msra.mxu0 0
    %822 = vmatprep.mubr.bf16.mxu0 0
    %823 = vmatmul.mubr.bf16.gmra.mxu0 %v785
    %v824 = vpop.f32.mrf.mxu0
    %v825 = vadd.f32 0.0, %v824
    %v826 = vpop.f32.mrf.mxu0
    %v827 = vpop.f32.mrf.mxu0
    %v828 = vpop.f32.mrf.mxu0
    %829 = vdwg.mxu0
    %830 = vrot.lane.b32.xlu0 %v322, 112
    %v831 = vpop.permute.xlu0 %830
    %832 = vrot.lane.b32.xlu0 %v324, 112
    %v833 = vpop.permute.xlu0 %832
    %v835 = vsel %vm327, %v831, 0
    %v838 = vsel %vm327, %v833, 0
    %840 = vmatprep.subr.bf16.mxu0 0
    %841 = vmatpush1.bf16.xpose.msra.mxu0 0
    %842 = vmatprep.subr.bf16.mxu0 0
    %843 = vmatpush1.bf16.xpose.msra.mxu0 0
    %844 = vmatprep.subr.bf16.mxu0 0
    %845 = vmatpush1.bf16.xpose.msra.mxu0 0
    %846 = vmatprep.subr.bf16.mxu0 0
    %847 = vmatpush1.bf16.xpose.msra.mxu0 0
    %848 = vmatprep.subr.bf16.mxu0 0
    %849 = vmatpush1.bf16.xpose.msra.mxu0 0
    %850 = vmatprep.subr.bf16.mxu0 0
    %851 = vmatpush1.bf16.xpose.msra.mxu0 0
    %852 = vmatprep.subr.bf16.mxu0 0
    %853 = vmatpush1.bf16.xpose.msra.mxu0 0
    %854 = vmatprep.subr.bf16.mxu0 0
    %855 = vmatpush1.bf16.xpose.msra.mxu0 %v838
    %856 = vmatprep.subr.bf16.mxu0 0
    %857 = vmatpush2.bf16.xpose.msra.mxu0 0
    %858 = vmatprep.subr.bf16.mxu0 0
    %859 = vmatpush2.bf16.xpose.msra.mxu0 0
    %860 = vmatprep.subr.bf16.mxu0 0
    %861 = vmatpush2.bf16.xpose.msra.mxu0 0
    %862 = vmatprep.subr.bf16.mxu0 0
    %863 = vmatpush2.bf16.xpose.msra.mxu0 0
    %864 = vmatprep.subr.bf16.mxu0 0
    %865 = vmatpush2.bf16.xpose.msra.mxu0 0
    %866 = vmatprep.subr.bf16.mxu0 0
    %867 = vmatpush2.bf16.xpose.msra.mxu0 0
    %868 = vmatprep.subr.bf16.mxu0 0
    %869 = vmatpush2.bf16.xpose.msra.mxu0 0
    %870 = vmatprep.subr.bf16.mxu0 0
    %871 = vmatpush2.bf16.xpose.msra.mxu0 0
    %872 = vmatprep.mubr.bf16.mxu0 0
    %873 = vmatmul.mubr.bf16.gmra.mxu0 %v835
    %v874 = vpop.f32.mrf.mxu0
    %v875 = vadd.f32 0.0, %v874
    %v876 = vpop.f32.mrf.mxu0
    %v877 = vpop.f32.mrf.mxu0
    %v878 = vpop.f32.mrf.mxu0
    %879 = vdwg.mxu0
    %v880 = vmul.f32 %v825, 0.35355338
    %v881 = vmul.f32 %v875, 0.35355338
    %v882 = vsel %vm327, %v880, -inf
    %883 = vmax.xlane.f32.xlu0 %v882
    %v884 = vpop.xlane.xlu0 %883
    %v885 = vsel %vm327, %v881, -inf
    %886 = vmax.xlane.f32.xlu0 %v885
    %v887 = vpop.xlane.xlu0 %886
    %v888 = vsub.f32 %v880, %v884
    %v889 = vsub.f32 %v881, %v887
    %v890 = vmul.f32 %v888, 1.442695
    %v891 = vpow.pop %v890
    %v892 = vmul.f32 %v889, 1.442695
    %v893 = vpow.pop %v892
    %v894 = vsel %vm327, %v891, 0.0
    %895 = vadd.xlane.f32.xlu0 %v894
    %v896 = vpop.xlane.xlu0 %895
    %v897 = vsel %vm327, %v893, 0.0
    %898 = vadd.xlane.f32.xlu0 %v897
    %v899 = vpop.xlane.xlu0 %898
    %v900 = vrcp.pop %v896
    %v901 = vrcp.pop %v899
    %v902 = vmul.f32 %v891, %v900
    %v903 = vmul.f32 %v893, %v901
    %v904 = vpack.c.bf16 %v902, %v902
    %v905 = vpack.c.bf16 %v903, %v903
    %906 = vrot.lane.b32.xlu0 %v325, 112
    %v907 = vpop.permute.xlu0 %906
    %v909 = vsel %vm327, %v904, 0
    %v912 = vsel %vm449, %v907, 0
    %914 = vmatprep.subr.bf16.mxu0 0
    %915 = vmatpush1.bf16.msra.mxu0 0
    %916 = vmatprep.subr.bf16.mxu0 0
    %917 = vmatpush1.bf16.msra.mxu0 0
    %918 = vmatprep.subr.bf16.mxu0 0
    %919 = vmatpush1.bf16.msra.mxu0 0
    %920 = vmatprep.subr.bf16.mxu0 0
    %921 = vmatpush1.bf16.msra.mxu0 0
    %922 = vmatprep.subr.bf16.mxu0 0
    %923 = vmatpush1.bf16.msra.mxu0 0
    %924 = vmatprep.subr.bf16.mxu0 0
    %925 = vmatpush1.bf16.msra.mxu0 0
    %926 = vmatprep.subr.bf16.mxu0 0
    %927 = vmatpush1.bf16.msra.mxu0 0
    %928 = vmatprep.subr.bf16.mxu0 0
    %929 = vmatpush1.bf16.msra.mxu0 %v912
    %930 = vmatprep.subr.bf16.mxu0 0
    %931 = vmatpush2.bf16.msra.mxu0 0
    %932 = vmatprep.subr.bf16.mxu0 0
    %933 = vmatpush2.bf16.msra.mxu0 0
    %934 = vmatprep.subr.bf16.mxu0 0
    %935 = vmatpush2.bf16.msra.mxu0 0
    %936 = vmatprep.subr.bf16.mxu0 0
    %937 = vmatpush2.bf16.msra.mxu0 0
    %938 = vmatprep.subr.bf16.mxu0 0
    %939 = vmatpush2.bf16.msra.mxu0 0
    %940 = vmatprep.subr.bf16.mxu0 0
    %941 = vmatpush2.bf16.msra.mxu0 0
    %942 = vmatprep.subr.bf16.mxu0 0
    %943 = vmatpush2.bf16.msra.mxu0 0
    %944 = vmatprep.subr.bf16.mxu0 0
    %945 = vmatpush2.bf16.msra.mxu0 0
    %946 = vmatprep.mubr.bf16.mxu0 0
    %947 = vmatmul.mubr.bf16.gmra.mxu0 %v909
    %v948 = vpop.f32.mrf.mxu0
    %v949 = vadd.f32 0.0, %v948
    %v950 = vpop.f32.mrf.mxu0
    %v951 = vpop.f32.mrf.mxu0
    %v952 = vpop.f32.mrf.mxu0
    %953 = vdwg.mxu0
    %954 = vrot.lane.b32.xlu0 %v326, 112
    %v955 = vpop.permute.xlu0 %954
    %v957 = vsel %vm327, %v905, 0
    %v960 = vsel %vm449, %v955, 0
    %962 = vmatprep.subr.bf16.mxu0 0
    %963 = vmatpush1.bf16.msra.mxu0 0
    %964 = vmatprep.subr.bf16.mxu0 0
    %965 = vmatpush1.bf16.msra.mxu0 0
    %966 = vmatprep.subr.bf16.mxu0 0
    %967 = vmatpush1.bf16.msra.mxu0 0
    %968 = vmatprep.subr.bf16.mxu0 0
    %969 = vmatpush1.bf16.msra.mxu0 0
    %970 = vmatprep.subr.bf16.mxu0 0
    %971 = vmatpush1.bf16.msra.mxu0 0
    %972 = vmatprep.subr.bf16.mxu0 0
    %973 = vmatpush1.bf16.msra.mxu0 0
    %974 = vmatprep.subr.bf16.mxu0 0
    %975 = vmatpush1.bf16.msra.mxu0 0
    %976 = vmatprep.subr.bf16.mxu0 0
    %977 = vmatpush1.bf16.msra.mxu0 %v960
    %978 = vmatprep.subr.bf16.mxu0 0
    %979 = vmatpush2.bf16.msra.mxu0 0
    %980 = vmatprep.subr.bf16.mxu0 0
    %981 = vmatpush2.bf16.msra.mxu0 0
    %982 = vmatprep.subr.bf16.mxu0 0
    %983 = vmatpush2.bf16.msra.mxu0 0
    %984 = vmatprep.subr.bf16.mxu0 0
    %985 = vmatpush2.bf16.msra.mxu0 0
    %986 = vmatprep.subr.bf16.mxu0 0
    %987 = vmatpush2.bf16.msra.mxu0 0
    %988 = vmatprep.subr.bf16.mxu0 0
    %989 = vmatpush2.bf16.msra.mxu0 0
    %990 = vmatprep.subr.bf16.mxu0 0
    %991 = vmatpush2.bf16.msra.mxu0 0
    %992 = vmatprep.subr.bf16.mxu0 0
    %993 = vmatpush2.bf16.msra.mxu0 0
    %994 = vmatprep.mubr.bf16.mxu0 0
    %995 = vmatmul.mubr.bf16.gmra.mxu0 %v957
    %v996 = vpop.f32.mrf.mxu0
    %v997 = vadd.f32 0.0, %v996
    %v998 = vpop.f32.mrf.mxu0
    %v999 = vpop.f32.mrf.mxu0
    %v1000 = vpop.f32.mrf.mxu0
    %1001 = vdwg.mxu0
    %1004 = vrot.lane.b32.xlu0 %v949, 16
    %v1005 = vpop.permute.xlu0 %1004
    %1006 = vrot.lane.b32.xlu0 %v997, 16
    %v1007 = vpop.permute.xlu0 %1006
    %vm1010 = vcmask 195712
    %1011 = vst.msk [vmem:[#allocation2] sm:$0xff] %vm1010, %v1005
    %1012 = vst.msk [vmem:[#allocation2 + $0x8] sm:$0xff] %vm1010, %v1007
    %1013 = vrot.lane.b32.xlu0 %v321, 104
    %v1014 = vpop.permute.xlu0 %1013
    %1015 = vrot.lane.b32.xlu0 %v323, 104
    %v1016 = vpop.permute.xlu0 %1015
    %v1018 = vsel %vm327, %v1014, 0
    %v1021 = vsel %vm327, %v1016, 0
    %1023 = vmatprep.subr.bf16.mxu0 0
    %1024 = vmatpush1.bf16.xpose.msra.mxu0 0
    %1025 = vmatprep.subr.bf16.mxu0 0
    %1026 = vmatpush1.bf16.xpose.msra.mxu0 0
    %1027 = vmatprep.subr.bf16.mxu0 0
    %1028 = vmatpush1.bf16.xpose.msra.mxu0 0
    %1029 = vmatprep.subr.bf16.mxu0 0
    %1030 = vmatpush1.bf16.xpose.msra.mxu0 0
    %1031 = vmatprep.subr.bf16.mxu0 0
    %1032 = vmatpush1.bf16.xpose.msra.mxu0 0
    %1033 = vmatprep.subr.bf16.mxu0 0
    %1034 = vmatpush1.bf16.xpose.msra.mxu0 0
    %1035 = vmatprep.subr.bf16.mxu0 0
    %1036 = vmatpush1.bf16.xpose.msra.mxu0 0
    %1037 = vmatprep.subr.bf16.mxu0 0
    %1038 = vmatpush1.bf16.xpose.msra.mxu0 %v1021
    %1039 = vmatprep.subr.bf16.mxu0 0
    %1040 = vmatpush2.bf16.xpose.msra.mxu0 0
    %1041 = vmatprep.subr.bf16.mxu0 0
    %1042 = vmatpush2.bf16.xpose.msra.mxu0 0
    %1043 = vmatprep.subr.bf16.mxu0 0
    %1044 = vmatpush2.bf16.xpose.msra.mxu0 0
    %1045 = vmatprep.subr.bf16.mxu0 0
    %1046 = vmatpush2.bf16.xpose.msra.mxu0 0
    %1047 = vmatprep.subr.bf16.mxu0 0
    %1048 = vmatpush2.bf16.xpose.msra.mxu0 0
    %1049 = vmatprep.subr.bf16.mxu0 0
    %1050 = vmatpush2.bf16.xpose.msra.mxu0 0
    %1051 = vmatprep.subr.bf16.mxu0 0
    %1052 = vmatpush2.bf16.xpose.msra.mxu0 0
    %1053 = vmatprep.subr.bf16.mxu0 0
    %1054 = vmatpush2.bf16.xpose.msra.mxu0 0
    %1055 = vmatprep.mubr.bf16.mxu0 0
    %1056 = vmatmul.mubr.bf16.gmra.mxu0 %v1018
    %v1057 = vpop.f32.mrf.mxu0
    %v1058 = vadd.f32 0.0, %v1057
    %v1059 = vpop.f32.mrf.mxu0
    %v1060 = vpop.f32.mrf.mxu0
    %v1061 = vpop.f32.mrf.mxu0
    %1062 = vdwg.mxu0
    %1063 = vrot.lane.b32.xlu0 %v322, 104
    %v1064 = vpop.permute.xlu0 %1063
    %1065 = vrot.lane.b32.xlu0 %v324, 104
    %v1066 = vpop.permute.xlu0 %1065
    %v1068 = vsel %vm327, %v1064, 0
    %v1071 = vsel %vm327, %v1066, 0
    %1073 = vmatprep.subr.bf16.mxu0 0
    %1074 = vmatpush1.bf16.xpose.msra.mxu0 0
    %1075 = vmatprep.subr.bf16.mxu0 0
    %1076 = vmatpush1.bf16.xpose.msra.mxu0 0
    %1077 = vmatprep.subr.bf16.mxu0 0
    %1078 = vmatpush1.bf16.xpose.msra.mxu0 0
    %1079 = vmatprep.subr.bf16.mxu0 0
    %1080 = vmatpush1.bf16.xpose.msra.mxu0 0
    %1081 = vmatprep.subr.bf16.mxu0 0
    %1082 = vmatpush1.bf16.xpose.msra.mxu0 0
    %1083 = vmatprep.subr.bf16.mxu0 0
    %1084 = vmatpush1.bf16.xpose.msra.mxu0 0
    %1085 = vmatprep.subr.bf16.mxu0 0
    %1086 = vmatpush1.bf16.xpose.msra.mxu0 0
    %1087 = vmatprep.subr.bf16.mxu0 0
    %1088 = vmatpush1.bf16.xpose.msra.mxu0 %v1071
    %1089 = vmatprep.subr.bf16.mxu0 0
    %1090 = vmatpush2.bf16.xpose.msra.mxu0 0
    %1091 = vmatprep.subr.bf16.mxu0 0
    %1092 = vmatpush2.bf16.xpose.msra.mxu0 0
    %1093 = vmatprep.subr.bf16.mxu0 0
    %1094 = vmatpush2.bf16.xpose.msra.mxu0 0
    %1095 = vmatprep.subr.bf16.mxu0 0
    %1096 = vmatpush2.bf16.xpose.msra.mxu0 0
    %1097 = vmatprep.subr.bf16.mxu0 0
    %1098 = vmatpush2.bf16.xpose.msra.mxu0 0
    %1099 = vmatprep.subr.bf16.mxu0 0
    %1100 = vmatpush2.bf16.xpose.msra.mxu0 0
    %1101 = vmatprep.subr.bf16.mxu0 0
    %1102 = vmatpush2.bf16.xpose.msra.mxu0 0
    %1103 = vmatprep.subr.bf16.mxu0 0
    %1104 = vmatpush2.bf16.xpose.msra.mxu0 0
    %1105 = vmatprep.mubr.bf16.mxu0 0
    %1106 = vmatmul.mubr.bf16.gmra.mxu0 %v1068
    %v1107 = vpop.f32.mrf.mxu0
    %v1108 = vadd.f32 0.0, %v1107
    %v1109 = vpop.f32.mrf.mxu0
    %v1110 = vpop.f32.mrf.mxu0
    %v1111 = vpop.f32.mrf.mxu0
    %1112 = vdwg.mxu0
    %v1113 = vmul.f32 %v1058, 0.35355338
    %v1114 = vmul.f32 %v1108, 0.35355338
    %v1115 = vsel %vm327, %v1113, -inf
    %1116 = vmax.xlane.f32.xlu0 %v1115
    %v1117 = vpop.xlane.xlu0 %1116
    %v1118 = vsel %vm327, %v1114, -inf
    %1119 = vmax.xlane.f32.xlu0 %v1118
    %v1120 = vpop.xlane.xlu0 %1119
    %v1121 = vsub.f32 %v1113, %v1117
    %v1122 = vsub.f32 %v1114, %v1120
    %v1123 = vmul.f32 %v1121, 1.442695
    %v1124 = vpow.pop %v1123
    %v1125 = vmul.f32 %v1122, 1.442695
    %v1126 = vpow.pop %v1125
    %v1127 = vsel %vm327, %v1124, 0.0
    %1128 = vadd.xlane.f32.xlu0 %v1127
    %v1129 = vpop.xlane.xlu0 %1128
    %v1130 = vsel %vm327, %v1126, 0.0
    %1131 = vadd.xlane.f32.xlu0 %v1130
    %v1132 = vpop.xlane.xlu0 %1131
    %v1133 = vrcp.pop %v1129
    %v1134 = vrcp.pop %v1132
    %v1135 = vmul.f32 %v1124, %v1133
    %v1136 = vmul.f32 %v1126, %v1134
    %v1137 = vpack.c.bf16 %v1135, %v1135
    %v1138 = vpack.c.bf16 %v1136, %v1136
    %1139 = vrot.lane.b32.xlu0 %v325, 104
    %v1140 = vpop.permute.xlu0 %1139
    %v1142 = vsel %vm327, %v1137, 0
    %v1145 = vsel %vm449, %v1140, 0
    %1147 = vmatprep.subr.bf16.mxu0 0
    %1148 = vmatpush1.bf16.msra.mxu0 0
    %1149 = vmatprep.subr.bf16.mxu0 0
    %1150 = vmatpush1.bf16.msra.mxu0 0
    %1151 = vmatprep.subr.bf16.mxu0 0
    %1152 = vmatpush1.bf16.msra.mxu0 0
    %1153 = vmatprep.subr.bf16.mxu0 0
    %1154 = vmatpush1.bf16.msra.mxu0 0
    %1155 = vmatprep.subr.bf16.mxu0 0
    %1156 = vmatpush1.bf16.msra.mxu0 0
    %1157 = vmatprep.subr.bf16.mxu0 0
    %1158 = vmatpush1.bf16.msra.mxu0 0
    %1159 = vmatprep.subr.bf16.mxu0 0
    %1160 = vmatpush1.bf16.msra.mxu0 0
    %1161 = vmatprep.subr.bf16.mxu0 0
    %1162 = vmatpush1.bf16.msra.mxu0 %v1145
    %1163 = vmatprep.subr.bf16.mxu0 0
    %1164 = vmatpush2.bf16.msra.mxu0 0
    %1165 = vmatprep.subr.bf16.mxu0 0
    %1166 = vmatpush2.bf16.msra.mxu0 0
    %1167 = vmatprep.subr.bf16.mxu0 0
    %1168 = vmatpush2.bf16.msra.mxu0 0
    %1169 = vmatprep.subr.bf16.mxu0 0
    %1170 = vmatpush2.bf16.msra.mxu0 0
    %1171 = vmatprep.subr.bf16.mxu0 0
    %1172 = vmatpush2.bf16.msra.mxu0 0
    %1173 = vmatprep.subr.bf16.mxu0 0
    %1174 = vmatpush2.bf16.msra.mxu0 0
    %1175 = vmatprep.subr.bf16.mxu0 0
    %1176 = vmatpush2.bf16.msra.mxu0 0
    %1177 = vmatprep.subr.bf16.mxu0 0
    %1178 = vmatpush2.bf16.msra.mxu0 0
    %1179 = vmatprep.mubr.bf16.mxu0 0
    %1180 = vmatmul.mubr.bf16.gmra.mxu0 %v1142
    %v1181 = vpop.f32.mrf.mxu0
    %v1182 = vadd.f32 0.0, %v1181
    %v1183 = vpop.f32.mrf.mxu0
    %v1184 = vpop.f32.mrf.mxu0
    %v1185 = vpop.f32.mrf.mxu0
    %1186 = vdwg.mxu0
    %1187 = vrot.lane.b32.xlu0 %v326, 104
    %v1188 = vpop.permute.xlu0 %1187
    %v1190 = vsel %vm327, %v1138, 0
    %v1193 = vsel %vm449, %v1188, 0
    %1195 = vmatprep.subr.bf16.mxu0 0
    %1196 = vmatpush1.bf16.msra.mxu0 0
    %1197 = vmatprep.subr.bf16.mxu0 0
    %1198 = vmatpush1.bf16.msra.mxu0 0
    %1199 = vmatprep.subr.bf16.mxu0 0
    %1200 = vmatpush1.bf16.msra.mxu0 0
    %1201 = vmatprep.subr.bf16.mxu0 0
    %1202 = vmatpush1.bf16.msra.mxu0 0
    %1203 = vmatprep.subr.bf16.mxu0 0
    %1204 = vmatpush1.bf16.msra.mxu0 0
    %1205 = vmatprep.subr.bf16.mxu0 0
    %1206 = vmatpush1.bf16.msra.mxu0 0
    %1207 = vmatprep.subr.bf16.mxu0 0
    %1208 = vmatpush1.bf16.msra.mxu0 0
    %1209 = vmatprep.subr.bf16.mxu0 0
    %1210 = vmatpush1.bf16.msra.mxu0 %v1193
    %1211 = vmatprep.subr.bf16.mxu0 0
    %1212 = vmatpush2.bf16.msra.mxu0 0
    %1213 = vmatprep.subr.bf16.mxu0 0
    %1214 = vmatpush2.bf16.msra.mxu0 0
    %1215 = vmatprep.subr.bf16.mxu0 0
    %1216 = vmatpush2.bf16.msra.mxu0 0
    %1217 = vmatprep.subr.bf16.mxu0 0
    %1218 = vmatpush2.bf16.msra.mxu0 0
    %1219 = vmatprep.subr.bf16.mxu0 0
    %1220 = vmatpush2.bf16.msra.mxu0 0
    %1221 = vmatprep.subr.bf16.mxu0 0
    %1222 = vmatpush2.bf16.msra.mxu0 0
    %1223 = vmatprep.subr.bf16.mxu0 0
    %1224 = vmatpush2.bf16.msra.mxu0 0
    %1225 = vmatprep.subr.bf16.mxu0 0
    %1226 = vmatpush2.bf16.msra.mxu0 0
    %1227 = vmatprep.mubr.bf16.mxu0 0
    %1228 = vmatmul.mubr.bf16.gmra.mxu0 %v1190
    %v1229 = vpop.f32.mrf.mxu0
    %v1230 = vadd.f32 0.0, %v1229
    %v1231 = vpop.f32.mrf.mxu0
    %v1232 = vpop.f32.mrf.mxu0
    %v1233 = vpop.f32.mrf.mxu0
    %1234 = vdwg.mxu0
    %1237 = vrot.lane.b32.xlu0 %v1182, 24
    %v1238 = vpop.permute.xlu0 %1237
    %1239 = vrot.lane.b32.xlu0 %v1230, 24
    %v1240 = vpop.permute.xlu0 %1239
    %vm1243 = vcmask 261312
    %1244 = vst.msk [vmem:[#allocation2] sm:$0xff] %vm1243, %v1238
    %1245 = vst.msk [vmem:[#allocation2 + $0x8] sm:$0xff] %vm1243, %v1240
    %v1246 = vld [vmem:[#allocation2] sm:$0xff]
    %v1247 = vld [vmem:[#allocation2 + $0x8] sm:$0xff]
    %v1248 = vpack.c.bf16 %v1247, %v1246
    %v1250 = vlaneseq
    %v1251 = vshrl.u32 %v1250, 7
    %v1252 = vsub.s32 0, %v1251
    %v1253 = vrot.slane %v132, %v1252
    %v1259 = vunpack.c.l.b16 %v113
    %v1260 = vunpack.c.l.b16 %v114
    %v1261 = vunpack.c.l.b16 %v115
    %v1262 = vunpack.c.l.b16 %v116
    %v1263 = vpack.c.b16 %v1260, %v1259
    %v1264 = vpack.c.b16 %v1262, %v1261
    %v1268 = vsel %vm158, %v1248, 0
    %1270 = vmatprep.subr.bf16.mxu0 0
    %1271 = vmatpush1.bf16.msra.mxu0 0
    %1272 = vmatprep.subr.bf16.mxu0 0
    %1273 = vmatpush1.bf16.msra.mxu0 0
    %1274 = vmatprep.subr.bf16.mxu0 0
    %1275 = vmatpush1.bf16.msra.mxu0 0
    %1276 = vmatprep.subr.bf16.mxu0 0
    %1277 = vmatpush1.bf16.msra.mxu0 0
    %1278 = vmatprep.subr.bf16.mxu0 0
    %1279 = vmatpush1.bf16.msra.mxu0 0
    %1280 = vmatprep.subr.bf16.mxu0 0
    %1281 = vmatpush1.bf16.msra.mxu0 0
    %1282 = vmatprep.subr.bf16.mxu0 0
    %1283 = vmatpush1.bf16.msra.mxu0 %v1264
    %1284 = vmatprep.subr.bf16.mxu0 0
    %1285 = vmatpush1.bf16.msra.mxu0 %v1263
    %1286 = vmatprep.subr.bf16.mxu0 0
    %1287 = vmatpush2.bf16.msra.mxu0 0
    %1288 = vmatprep.subr.bf16.mxu0 0
    %1289 = vmatpush2.bf16.msra.mxu0 0
    %1290 = vmatprep.subr.bf16.mxu0 0
    %1291 = vmatpush2.bf16.msra.mxu0 0
    %1292 = vmatprep.subr.bf16.mxu0 0
    %1293 = vmatpush2.bf16.msra.mxu0 0
    %1294 = vmatprep.subr.bf16.mxu0 0
    %1295 = vmatpush2.bf16.msra.mxu0 0
    %1296 = vmatprep.subr.bf16.mxu0 0
    %1297 = vmatpush2.bf16.msra.mxu0 0
    %1298 = vmatprep.subr.bf16.mxu0 0
    %1299 = vmatpush2.bf16.msra.mxu0 0
    %1300 = vmatprep.subr.bf16.mxu0 0
    %1301 = vmatpush2.bf16.msra.mxu0 0
    %1302 = vmatprep.mubr.bf16.mxu0 0
    %1303 = vmatmul.mubr.bf16.gmra.mxu0 %v1268
    %v1304 = vpop.f32.mrf.mxu0
    %v1305 = vadd.f32 %v1253, %v1304
    %v1306 = vpop.f32.mrf.mxu0
    %v1307 = vpop.f32.mrf.mxu0
    %v1308 = vadd.f32 %v1253, %v1307
    %v1309 = vpop.f32.mrf.mxu0
    %1310 = vdwg.mxu0
    %v1311 = vadd.f32 %v99, %v1305
    %v1312 = vadd.f32 %v100, %v1308
    %v1313 = vsel %vm158, %v1311, 0.0
    %v1314 = vsel %vm158, %v1312, 0.0
    %v1315 = vadd.f32 %v1313, %v1314
    %v1316 = vrot.slane %v1315, 4
    %v1317 = vadd.f32 %v1315, %v1316
    %v1318 = vrot.slane %v1317, 2
    %v1319 = vadd.f32 %v1317, %v1318
    %v1320 = vrot.slane %v1319, 1
    %v1321 = vadd.f32 %v1319, %v1320
    %v1322 = vmul.f32 %v1311, %v1311
    %v1323 = vmul.f32 %v1312, %v1312
    %v1324 = vsel %vm158, %v1322, 0.0
    %v1325 = vsel %vm158, %v1323, 0.0
    %v1326 = vadd.f32 %v1324, %v1325
    %v1327 = vrot.slane %v1326, 4
    %v1328 = vadd.f32 %v1326, %v1327
    %v1329 = vrot.slane %v1328, 2
    %v1330 = vadd.f32 %v1328, %v1329
    %v1331 = vrot.slane %v1330, 1
    %v1332 = vadd.f32 %v1330, %v1331
    %v1333 = vmul.f32 %v1321, 0.0625
    %v1334 = vmul.f32 %v1332, 0.0625
    %v1335 = vmul.f32 %v1333, %v1333
    %v1336 = vsub.f32 %v1334, %v1335
    %v1337 = vmax.f32 %v1336, 0.0
    %v1338 = vsub.f32 %v1311, %v1333
    %v1339 = vsub.f32 %v1312, %v1333
    %v1340 = vadd.f32 %v1337, 1e-05
    %v1341 = vrsqrt.pop %v1340
    %v1342 = vmul.f32 %v1338, %v1341
    %v1343 = vmul.f32 %v1339, %v1341
    %v1345 = vlaneseq
    %v1346 = vshrl.u32 %v1345, 7
    %v1347 = vsub.s32 0, %v1346
    %v1348 = vrot.slane %v135, %v1347
    %v1350 = vmul.f32 %v1342, %v1348
    %v1351 = vmul.f32 %v1343, %v1348
    %v1353 = vlaneseq
    %v1354 = vshrl.u32 %v1353, 7
    %v1355 = vsub.s32 0, %v1354
    %v1356 = vrot.slane %v136, %v1355
    %v1358 = vadd.f32 %v1350, %v1356
    %v1359 = vadd.f32 %v1351, %v1356
    %v1360 = vpack.c.bf16 %v1359, %v1358
    %v1362 = vlaneseq
    %v1363 = vshrl.u32 %v1362, 7
    %v1364 = vsub.s32 0, %v1363
    %v1365 = vrot.slane %v133, %v1364
    %v1371 = vunpack.c.l.b16 %v117
    %v1372 = vunpack.c.l.b16 %v118
    %v1373 = vunpack.c.l.b16 %v119
    %v1374 = vunpack.c.l.b16 %v120
    %v1375 = vpack.c.b16 %v1372, %v1371
    %v1376 = vpack.c.b16 %v1374, %v1373
    %v1380 = vsel %vm158, %v1360, 0
    %1382 = vmatprep.subr.bf16.mxu0 0
    %1383 = vmatpush1.bf16.msra.mxu0 0
    %1384 = vmatprep.subr.bf16.mxu0 0
    %1385 = vmatpush1.bf16.msra.mxu0 0
    %1386 = vmatprep.subr.bf16.mxu0 0
    %1387 = vmatpush1.bf16.msra.mxu0 0
    %1388 = vmatprep.subr.bf16.mxu0 0
    %1389 = vmatpush1.bf16.msra.mxu0 0
    %1390 = vmatprep.subr.bf16.mxu0 0
    %1391 = vmatpush1.bf16.msra.mxu0 0
    %1392 = vmatprep.subr.bf16.mxu0 0
    %1393 = vmatpush1.bf16.msra.mxu0 0
    %1394 = vmatprep.subr.bf16.mxu0 0
    %1395 = vmatpush1.bf16.msra.mxu0 %v1376
    %1396 = vmatprep.subr.bf16.mxu0 0
    %1397 = vmatpush1.bf16.msra.mxu0 %v1375
    %1398 = vmatprep.subr.bf16.mxu0 0
    %1399 = vmatpush2.bf16.msra.mxu0 0
    %1400 = vmatprep.subr.bf16.mxu0 0
    %1401 = vmatpush2.bf16.msra.mxu0 0
    %1402 = vmatprep.subr.bf16.mxu0 0
    %1403 = vmatpush2.bf16.msra.mxu0 0
    %1404 = vmatprep.subr.bf16.mxu0 0
    %1405 = vmatpush2.bf16.msra.mxu0 0
    %1406 = vmatprep.subr.bf16.mxu0 0
    %1407 = vmatpush2.bf16.msra.mxu0 0
    %1408 = vmatprep.subr.bf16.mxu0 0
    %1409 = vmatpush2.bf16.msra.mxu0 0
    %1410 = vmatprep.subr.bf16.mxu0 0
    %1411 = vmatpush2.bf16.msra.mxu0 0
    %1412 = vmatprep.subr.bf16.mxu0 0
    %1413 = vmatpush2.bf16.msra.mxu0 0
    %1414 = vmatprep.mubr.bf16.mxu0 0
    %1415 = vmatmul.mubr.bf16.gmra.mxu0 %v1380
    %v1416 = vpop.f32.mrf.mxu0
    %v1417 = vadd.f32 %v1365, %v1416
    %v1418 = vpop.f32.mrf.mxu0
    %v1419 = vpop.f32.mrf.mxu0
    %v1420 = vadd.f32 %v1365, %v1419
    %v1421 = vpop.f32.mrf.mxu0
    %1422 = vdwg.mxu0
    %v1423 = vmul.f32 %v1417, %v1417
    %v1424 = vmul.f32 %v1420, %v1420
    %v1425 = vmul.f32 %v1417, %v1423
    %v1426 = vmul.f32 %v1420, %v1424
    %v1427 = vmul.f32 %v1425, 0.044715
    %v1428 = vmul.f32 %v1426, 0.044715
    %v1429 = vadd.f32 %v1417, %v1427
    %v1430 = vadd.f32 %v1420, %v1428
    %v1431 = vmul.f32 %v1429, 0.7978846
    %v1432 = vmul.f32 %v1430, 0.7978846
    %v1433 = vtanh.pop %v1431
    %v1434 = vtanh.pop %v1432
    %v1435 = vadd.f32 %v1433, 1.0
    %v1436 = vadd.f32 %v1434, 1.0
    %v1437 = vmul.f32 %v1435, 0.5
    %v1438 = vmul.f32 %v1436, 0.5
    %v1439 = vmul.f32 %v1417, %v1437
    %v1440 = vmul.f32 %v1420, %v1438
    %v1441 = vpack.c.bf16 %v1440, %v1439
    %v1443 = vlaneseq
    %v1444 = vshrl.u32 %v1443, 7
    %v1445 = vsub.s32 0, %v1444
    %v1446 = vrot.slane %v134, %v1445
    %v1456 = vunpack.c.l.b16 %v121
    %v1457 = vunpack.c.l.b16 %v122
    %v1458 = vunpack.c.l.b16 %v123
    %v1459 = vunpack.c.l.b16 %v124
    %v1460 = vunpack.c.l.b16 %v125
    %v1461 = vunpack.c.l.b16 %v126
    %v1462 = vunpack.c.l.b16 %v127
    %v1463 = vunpack.c.l.b16 %v128
    %v1464 = vpack.c.b16 %v1457, %v1456
    %v1465 = vpack.c.b16 %v1459, %v1458
    %v1466 = vpack.c.b16 %v1461, %v1460
    %v1467 = vpack.c.b16 %v1463, %v1462
    %vm1472 = vcmask 523264
    %v1474 = vsel %vm1472, %v1441, 0
    %1476 = vmatprep.subr.bf16.mxu0 0
    %1477 = vmatpush1.bf16.msra.mxu0 0
    %1478 = vmatprep.subr.bf16.mxu0 0
    %1479 = vmatpush1.bf16.msra.mxu0 0
    %1480 = vmatprep.subr.bf16.mxu0 0
    %1481 = vmatpush1.bf16.msra.mxu0 0
    %1482 = vmatprep.subr.bf16.mxu0 0
    %1483 = vmatpush1.bf16.msra.mxu0 0
    %1484 = vmatprep.subr.bf16.mxu0 0
    %1485 = vmatpush1.bf16.msra.mxu0 %v1467
    %1486 = vmatprep.subr.bf16.mxu0 0
    %1487 = vmatpush1.bf16.msra.mxu0 %v1466
    %1488 = vmatprep.subr.bf16.mxu0 0
    %1489 = vmatpush1.bf16.msra.mxu0 %v1465
    %1490 = vmatprep.subr.bf16.mxu0 0
    %1491 = vmatpush1.bf16.msra.mxu0 %v1464
    %1492 = vmatprep.subr.bf16.mxu0 0
    %1493 = vmatpush2.bf16.msra.mxu0 0
    %1494 = vmatprep.subr.bf16.mxu0 0
    %1495 = vmatpush2.bf16.msra.mxu0 0
    %1496 = vmatprep.subr.bf16.mxu0 0
    %1497 = vmatpush2.bf16.msra.mxu0 0
    %1498 = vmatprep.subr.bf16.mxu0 0
    %1499 = vmatpush2.bf16.msra.mxu0 0
    %1500 = vmatprep.subr.bf16.mxu0 0
    %1501 = vmatpush2.bf16.msra.mxu0 0
    %1502 = vmatprep.subr.bf16.mxu0 0
    %1503 = vmatpush2.bf16.msra.mxu0 0
    %1504 = vmatprep.subr.bf16.mxu0 0
    %1505 = vmatpush2.bf16.msra.mxu0 0
    %1506 = vmatprep.subr.bf16.mxu0 0
    %1507 = vmatpush2.bf16.msra.mxu0 0
    %1508 = vmatprep.mubr.bf16.mxu0 0
    %1509 = vmatmul.mubr.bf16.gmra.mxu0 %v1474
    %v1510 = vpop.f32.mrf.mxu0
    %v1511 = vadd.f32 %v1446, %v1510
    %v1512 = vpop.f32.mrf.mxu0
    %v1513 = vpop.f32.mrf.mxu0
    %v1514 = vadd.f32 %v1446, %v1513
    %v1515 = vpop.f32.mrf.mxu0
    %1516 = vdwg.mxu0
    %v1517 = vadd.f32 %v1358, %v1511
    %v1518 = vadd.f32 %v1359, %v1514
    %v1519 = vsel %vm158, %v1517, 0.0
    %v1520 = vsel %vm158, %v1518, 0.0
    %v1521 = vadd.f32 %v1519, %v1520
    %v1522 = vrot.slane %v1521, 4
    %v1523 = vadd.f32 %v1521, %v1522
    %v1524 = vrot.slane %v1523, 2
    %v1525 = vadd.f32 %v1523, %v1524
    %v1526 = vrot.slane %v1525, 1
    %v1527 = vadd.f32 %v1525, %v1526
    %v1528 = vmul.f32 %v1517, %v1517
    %v1529 = vmul.f32 %v1518, %v1518
    %v1530 = vsel %vm158, %v1528, 0.0
    %v1531 = vsel %vm158, %v1529, 0.0
    %v1532 = vadd.f32 %v1530, %v1531
    %v1533 = vrot.slane %v1532, 4
    %v1534 = vadd.f32 %v1532, %v1533
    %v1535 = vrot.slane %v1534, 2
    %v1536 = vadd.f32 %v1534, %v1535
    %v1537 = vrot.slane %v1536, 1
    %v1538 = vadd.f32 %v1536, %v1537
    %v1539 = vmul.f32 %v1527, 0.0625
    %v1540 = vmul.f32 %v1538, 0.0625
    %v1541 = vmul.f32 %v1539, %v1539
    %v1542 = vsub.f32 %v1540, %v1541
    %v1543 = vmax.f32 %v1542, 0.0
    %v1544 = vsub.f32 %v1517, %v1539
    %v1545 = vsub.f32 %v1518, %v1539
    %v1546 = vadd.f32 %v1543, 1e-05
    %v1547 = vrsqrt.pop %v1546
    %v1548 = vmul.f32 %v1544, %v1547
    %v1549 = vmul.f32 %v1545, %v1547
    %v1551 = vlaneseq
    %v1552 = vshrl.u32 %v1551, 7
    %v1553 = vsub.s32 0, %v1552
    %v1554 = vrot.slane %v137, %v1553
    %v1556 = vmul.f32 %v1548, %v1554
    %v1557 = vmul.f32 %v1549, %v1554
    %v1559 = vlaneseq
    %v1560 = vshrl.u32 %v1559, 7
    %v1561 = vsub.s32 0, %v1560
    %v1562 = vrot.slane %v138, %v1561
    %v1564 = vadd.f32 %v1556, %v1562
    %v1565 = vadd.f32 %v1557, %v1562
    %s1566 = scalar_lea.vmem %s1, 16
    %v1567 = vld [vmem:[%s1566] sm:$0xf]
    %v1568 = vld [vmem:[%s1566 + $0x4] sm:$0xf]
    %v1569 = vld [vmem:[%s1566 + $0x8] sm:$0xf]
    %v1570 = vld [vmem:[%s1566 + $0xc] sm:$0xf]
    %s1571 = scalar_lea.vmem %s3, 16
    %v1572 = vld [vmem:[%s1571] sm:$0xf]
    %v1573 = vld [vmem:[%s1571 + $0x4] sm:$0xf]
    %v1574 = vld [vmem:[%s1571 + $0x8] sm:$0xf]
    %v1575 = vld [vmem:[%s1571 + $0xc] sm:$0xf]
    %s1576 = scalar_lea.vmem %s5, 16
    %v1577 = vld [vmem:[%s1576] sm:$0xf]
    %v1578 = vld [vmem:[%s1576 + $0x4] sm:$0xf]
    %v1579 = vld [vmem:[%s1576 + $0x8] sm:$0xf]
    %v1580 = vld [vmem:[%s1576 + $0xc] sm:$0xf]
    %s1581 = scalar_lea.vmem [#allocation6], 16
    %v1582 = vld [vmem:[%s1581] sm:$0xf]
    %v1583 = vld [vmem:[%s1581 + $0x4] sm:$0xf]
    %v1584 = vld [vmem:[%s1581 + $0x8] sm:$0xf]
    %v1585 = vld [vmem:[%s1581 + $0xc] sm:$0xf]
    %s1586 = scalar_lea.vmem [#allocation8], 16
    %v1587 = vld [vmem:[%s1586] sm:$0xf]
    %v1588 = vld [vmem:[%s1586 + $0x4] sm:$0xf]
    %v1589 = vld [vmem:[%s1586 + $0x8] sm:$0xf]
    %v1590 = vld [vmem:[%s1586 + $0xc] sm:$0xf]
    %s1591 = scalar_lea.vmem %s11, 32
    %v1592 = vld [vmem:[%s1591] sm:$0xf]
    %v1593 = vld [vmem:[%s1591 + $0x4] sm:$0xf]
    %v1594 = vld [vmem:[%s1591 + $0x8] sm:$0xf]
    %v1595 = vld [vmem:[%s1591 + $0xc] sm:$0xf]
    %v1596 = vld [vmem:[%s1591 + $0x10] sm:$0xf]
    %v1597 = vld [vmem:[%s1591 + $0x14] sm:$0xf]
    %v1598 = vld [vmem:[%s1591 + $0x18] sm:$0xf]
    %v1599 = vld [vmem:[%s1591 + $0x1c] sm:$0xf]
    %s1600 = scalar_lea.vmem %s2, 1
    %v1601 = vld [vmem:[%s1600] sm:$0x1]
    %s1602 = scalar_lea.vmem %s4, 1
    %v1603 = vld [vmem:[%s1602] sm:$0x1]
    %s1604 = scalar_lea.vmem %s6, 1
    %v1605 = vld [vmem:[%s1604] sm:$0x1]
    %s1606 = scalar_lea.vmem %s8, 1
    %v1607 = vld [vmem:[%s1606] sm:$0x1]
    %s1608 = scalar_lea.vmem %s10, 1
    %v1609 = vld [vmem:[%s1608] sm:$0x1]
    %s1610 = scalar_lea.vmem %s12, 1
    %v1611 = vld [vmem:[%s1610] sm:$0x1]
    %s1612 = scalar_lea.vmem %s13, 1
    %v1613 = vld [vmem:[%s1612] sm:$0x1]
    %s1614 = scalar_lea.vmem %s14, 1
    %v1615 = vld [vmem:[%s1614] sm:$0x1]
    %s1616 = scalar_lea.vmem %s15, 1
    %v1617 = vld [vmem:[%s1616] sm:$0x1]
    %s1618 = scalar_lea.vmem %s16, 1
    %v1619 = vld [vmem:[%s1618] sm:$0x1]
    %v1620 = vpack.c.bf16 %v1565, %v1564
    %v1622 = vlaneseq
    %v1623 = vshrl.u32 %v1622, 7
    %v1624 = vsub.s32 0, %v1623
    %v1625 = vrot.slane %v1601, %v1624
    %v1631 = vunpack.c.l.b16 %v1567
    %v1632 = vunpack.c.l.b16 %v1568
    %v1633 = vunpack.c.l.b16 %v1569
    %v1634 = vunpack.c.l.b16 %v1570
    %v1635 = vpack.c.b16 %v1632, %v1631
    %v1636 = vpack.c.b16 %v1634, %v1633
    %v1640 = vsel %vm158, %v1620, 0
    %1642 = vmatprep.subr.bf16.mxu0 0
    %1643 = vmatpush1.bf16.msra.mxu0 0
    %1644 = vmatprep.subr.bf16.mxu0 0
    %1645 = vmatpush1.bf16.msra.mxu0 0
    %1646 = vmatprep.subr.bf16.mxu0 0
    %1647 = vmatpush1.bf16.msra.mxu0 0
    %1648 = vmatprep.subr.bf16.mxu0 0
    %1649 = vmatpush1.bf16.msra.mxu0 0
    %1650 = vmatprep.subr.bf16.mxu0 0
    %1651 = vmatpush1.bf16.msra.mxu0 0
    %1652 = vmatprep.subr.bf16.mxu0 0
    %1653 = vmatpush1.bf16.msra.mxu0 0
    %1654 = vmatprep.subr.bf16.mxu0 0
    %1655 = vmatpush1.bf16.msra.mxu0 %v1636
    %1656 = vmatprep.subr.bf16.mxu0 0
    %1657 = vmatpush1.bf16.msra.mxu0 %v1635
    %1658 = vmatprep.subr.bf16.mxu0 0
    %1659 = vmatpush2.bf16.msra.mxu0 0
    %1660 = vmatprep.subr.bf16.mxu0 0
    %1661 = vmatpush2.bf16.msra.mxu0 0
    %1662 = vmatprep.subr.bf16.mxu0 0
    %1663 = vmatpush2.bf16.msra.mxu0 0
    %1664 = vmatprep.subr.bf16.mxu0 0
    %1665 = vmatpush2.bf16.msra.mxu0 0
    %1666 = vmatprep.subr.bf16.mxu0 0
    %1667 = vmatpush2.bf16.msra.mxu0 0
    %1668 = vmatprep.subr.bf16.mxu0 0
    %1669 = vmatpush2.bf16.msra.mxu0 0
    %1670 = vmatprep.subr.bf16.mxu0 0
    %1671 = vmatpush2.bf16.msra.mxu0 0
    %1672 = vmatprep.subr.bf16.mxu0 0
    %1673 = vmatpush2.bf16.msra.mxu0 0
    %1674 = vmatprep.mubr.bf16.mxu0 0
    %1675 = vmatmul.mubr.bf16.gmra.mxu0 %v1640
    %v1676 = vpop.f32.mrf.mxu0
    %v1677 = vadd.f32 %v1625, %v1676
    %v1678 = vpop.f32.mrf.mxu0
    %v1679 = vpop.f32.mrf.mxu0
    %v1680 = vadd.f32 %v1625, %v1679
    %v1681 = vpop.f32.mrf.mxu0
    %1682 = vdwg.mxu0
    %v1684 = vlaneseq
    %v1685 = vshrl.u32 %v1684, 7
    %v1686 = vsub.s32 0, %v1685
    %v1687 = vrot.slane %v1603, %v1686
    %v1693 = vunpack.c.l.b16 %v1572
    %v1694 = vunpack.c.l.b16 %v1573
    %v1695 = vunpack.c.l.b16 %v1574
    %v1696 = vunpack.c.l.b16 %v1575
    %v1697 = vpack.c.b16 %v1694, %v1693
    %v1698 = vpack.c.b16 %v1696, %v1695
    %1701 = vmatprep.subr.bf16.mxu0 0
    %1702 = vmatpush1.bf16.msra.mxu0 0
    %1703 = vmatprep.subr.bf16.mxu0 0
    %1704 = vmatpush1.bf16.msra.mxu0 0
    %1705 = vmatprep.subr.bf16.mxu0 0
    %1706 = vmatpush1.bf16.msra.mxu0 0
    %1707 = vmatprep.subr.bf16.mxu0 0
    %1708 = vmatpush1.bf16.msra.mxu0 0
    %1709 = vmatprep.subr.bf16.mxu0 0
    %1710 = vmatpush1.bf16.msra.mxu0 0
    %1711 = vmatprep.subr.bf16.mxu0 0
    %1712 = vmatpush1.bf16.msra.mxu0 0
    %1713 = vmatprep.subr.bf16.mxu0 0
    %1714 = vmatpush1.bf16.msra.mxu0 %v1698
    %1715 = vmatprep.subr.bf16.mxu0 0
    %1716 = vmatpush1.bf16.msra.mxu0 %v1697
    %1717 = vmatprep.subr.bf16.mxu0 0
    %1718 = vmatpush2.bf16.msra.mxu0 0
    %1719 = vmatprep.subr.bf16.mxu0 0
    %1720 = vmatpush2.bf16.msra.mxu0 0
    %1721 = vmatprep.subr.bf16.mxu0 0
    %1722 = vmatpush2.bf16.msra.mxu0 0
    %1723 = vmatprep.subr.bf16.mxu0 0
    %1724 = vmatpush2.bf16.msra.mxu0 0
    %1725 = vmatprep.subr.bf16.mxu0 0
    %1726 = vmatpush2.bf16.msra.mxu0 0
    %1727 = vmatprep.subr.bf16.mxu0 0
    %1728 = vmatpush2.bf16.msra.mxu0 0
    %1729 = vmatprep.subr.bf16.mxu0 0
    %1730 = vmatpush2.bf16.msra.mxu0 0
    %1731 = vmatprep.subr.bf16.mxu0 0
    %1732 = vmatpush2.bf16.msra.mxu0 0
    %1733 = vmatprep.mubr.bf16.mxu0 0
    %1734 = vmatmul.mubr.bf16.gmra.mxu0 %v1640
    %v1735 = vpop.f32.mrf.mxu0
    %v1736 = vadd.f32 %v1687, %v1735
    %v1737 = vpop.f32.mrf.mxu0
    %v1738 = vpop.f32.mrf.mxu0
    %v1739 = vadd.f32 %v1687, %v1738
    %v1740 = vpop.f32.mrf.mxu0
    %1741 = vdwg.mxu0
    %v1743 = vlaneseq
    %v1744 = vshrl.u32 %v1743, 7
    %v1745 = vsub.s32 0, %v1744
    %v1746 = vrot.slane %v1605, %v1745
    %v1752 = vunpack.c.l.b16 %v1577
    %v1753 = vunpack.c.l.b16 %v1578
    %v1754 = vunpack.c.l.b16 %v1579
    %v1755 = vunpack.c.l.b16 %v1580
    %v1756 = vpack.c.b16 %v1753, %v1752
    %v1757 = vpack.c.b16 %v1755, %v1754
    %1760 = vmatprep.subr.bf16.mxu0 0
    %1761 = vmatpush1.bf16.msra.mxu0 0
    %1762 = vmatprep.subr.bf16.mxu0 0
    %1763 = vmatpush1.bf16.msra.mxu0 0
    %1764 = vmatprep.subr.bf16.mxu0 0
    %1765 = vmatpush1.bf16.msra.mxu0 0
    %1766 = vmatprep.subr.bf16.mxu0 0
    %1767 = vmatpush1.bf16.msra.mxu0 0
    %1768 = vmatprep.subr.bf16.mxu0 0
    %1769 = vmatpush1.bf16.msra.mxu0 0
    %1770 = vmatprep.subr.bf16.mxu0 0
    %1771 = vmatpush1.bf16.msra.mxu0 0
    %1772 = vmatprep.subr.bf16.mxu0 0
    %1773 = vmatpush1.bf16.msra.mxu0 %v1757
    %1774 = vmatprep.subr.bf16.mxu0 0
    %1775 = vmatpush1.bf16.msra.mxu0 %v1756
    %1776 = vmatprep.subr.bf16.mxu0 0
    %1777 = vmatpush2.bf16.msra.mxu0 0
    %1778 = vmatprep.subr.bf16.mxu0 0
    %1779 = vmatpush2.bf16.msra.mxu0 0
    %1780 = vmatprep.subr.bf16.mxu0 0
    %1781 = vmatpush2.bf16.msra.mxu0 0
    %1782 = vmatprep.subr.bf16.mxu0 0
    %1783 = vmatpush2.bf16.msra.mxu0 0
    %1784 = vmatprep.subr.bf16.mxu0 0
    %1785 = vmatpush2.bf16.msra.mxu0 0
    %1786 = vmatprep.subr.bf16.mxu0 0
    %1787 = vmatpush2.bf16.msra.mxu0 0
    %1788 = vmatprep.subr.bf16.mxu0 0
    %1789 = vmatpush2.bf16.msra.mxu0 0
    %1790 = vmatprep.subr.bf16.mxu0 0
    %1791 = vmatpush2.bf16.msra.mxu0 0
    %1792 = vmatprep.mubr.bf16.mxu0 0
    %1793 = vmatmul.mubr.bf16.gmra.mxu0 %v1640
    %v1794 = vpop.f32.mrf.mxu0
    %v1795 = vadd.f32 %v1746, %v1794
    %v1796 = vpop.f32.mrf.mxu0
    %v1797 = vpop.f32.mrf.mxu0
    %v1798 = vadd.f32 %v1746, %v1797
    %v1799 = vpop.f32.mrf.mxu0
    %1800 = vdwg.mxu0
    %v1801 = vpack.c.bf16 %v1677, %v1677
    %v1802 = vpack.c.bf16 %v1680, %v1680
    %v1803 = vpack.c.bf16 %v1736, %v1736
    %v1804 = vpack.c.bf16 %v1739, %v1739
    %v1805 = vpack.c.bf16 %v1795, %v1795
    %v1806 = vpack.c.bf16 %v1798, %v1798
    %v1808 = vsel %vm327, %v1801, 0
    %v1811 = vsel %vm327, %v1803, 0
    %1813 = vmatprep.subr.bf16.mxu0 0
    %1814 = vmatpush1.bf16.xpose.msra.mxu0 0
    %1815 = vmatprep.subr.bf16.mxu0 0
    %1816 = vmatpush1.bf16.xpose.msra.mxu0 0
    %1817 = vmatprep.subr.bf16.mxu0 0
    %1818 = vmatpush1.bf16.xpose.msra.mxu0 0
    %1819 = vmatprep.subr.bf16.mxu0 0
    %1820 = vmatpush1.bf16.xpose.msra.mxu0 0
    %1821 = vmatprep.subr.bf16.mxu0 0
    %1822 = vmatpush1.bf16.xpose.msra.mxu0 0
    %1823 = vmatprep.subr.bf16.mxu0 0
    %1824 = vmatpush1.bf16.xpose.msra.mxu0 0
    %1825 = vmatprep.subr.bf16.mxu0 0
    %1826 = vmatpush1.bf16.xpose.msra.mxu0 0
    %1827 = vmatprep.subr.bf16.mxu0 0
    %1828 = vmatpush1.bf16.xpose.msra.mxu0 %v1811
    %1829 = vmatprep.subr.bf16.mxu0 0
    %1830 = vmatpush2.bf16.xpose.msra.mxu0 0
    %1831 = vmatprep.subr.bf16.mxu0 0
    %1832 = vmatpush2.bf16.xpose.msra.mxu0 0
    %1833 = vmatprep.subr.bf16.mxu0 0
    %1834 = vmatpush2.bf16.xpose.msra.mxu0 0
    %1835 = vmatprep.subr.bf16.mxu0 0
    %1836 = vmatpush2.bf16.xpose.msra.mxu0 0
    %1837 = vmatprep.subr.bf16.mxu0 0
    %1838 = vmatpush2.bf16.xpose.msra.mxu0 0
    %1839 = vmatprep.subr.bf16.mxu0 0
    %1840 = vmatpush2.bf16.xpose.msra.mxu0 0
    %1841 = vmatprep.subr.bf16.mxu0 0
    %1842 = vmatpush2.bf16.xpose.msra.mxu0 0
    %1843 = vmatprep.subr.bf16.mxu0 0
    %1844 = vmatpush2.bf16.xpose.msra.mxu0 0
    %1845 = vmatprep.mubr.bf16.mxu0 0
    %1846 = vmatmul.mubr.bf16.gmra.mxu0 %v1808
    %v1847 = vpop.f32.mrf.mxu0
    %v1848 = vadd.f32 0.0, %v1847
    %v1849 = vpop.f32.mrf.mxu0
    %v1850 = vpop.f32.mrf.mxu0
    %v1851 = vpop.f32.mrf.mxu0
    %1852 = vdwg.mxu0
    %v1854 = vsel %vm327, %v1802, 0
    %v1857 = vsel %vm327, %v1804, 0
    %1859 = vmatprep.subr.bf16.mxu0 0
    %1860 = vmatpush1.bf16.xpose.msra.mxu0 0
    %1861 = vmatprep.subr.bf16.mxu0 0
    %1862 = vmatpush1.bf16.xpose.msra.mxu0 0
    %1863 = vmatprep.subr.bf16.mxu0 0
    %1864 = vmatpush1.bf16.xpose.msra.mxu0 0
    %1865 = vmatprep.subr.bf16.mxu0 0
    %1866 = vmatpush1.bf16.xpose.msra.mxu0 0
    %1867 = vmatprep.subr.bf16.mxu0 0
    %1868 = vmatpush1.bf16.xpose.msra.mxu0 0
    %1869 = vmatprep.subr.bf16.mxu0 0
    %1870 = vmatpush1.bf16.xpose.msra.mxu0 0
    %1871 = vmatprep.subr.bf16.mxu0 0
    %1872 = vmatpush1.bf16.xpose.msra.mxu0 0
    %1873 = vmatprep.subr.bf16.mxu0 0
    %1874 = vmatpush1.bf16.xpose.msra.mxu0 %v1857
    %1875 = vmatprep.subr.bf16.mxu0 0
    %1876 = vmatpush2.bf16.xpose.msra.mxu0 0
    %1877 = vmatprep.subr.bf16.mxu0 0
    %1878 = vmatpush2.bf16.xpose.msra.mxu0 0
    %1879 = vmatprep.subr.bf16.mxu0 0
    %1880 = vmatpush2.bf16.xpose.msra.mxu0 0
    %1881 = vmatprep.subr.bf16.mxu0 0
    %1882 = vmatpush2.bf16.xpose.msra.mxu0 0
    %1883 = vmatprep.subr.bf16.mxu0 0
    %1884 = vmatpush2.bf16.xpose.msra.mxu0 0
    %1885 = vmatprep.subr.bf16.mxu0 0
    %1886 = vmatpush2.bf16.xpose.msra.mxu0 0
    %1887 = vmatprep.subr.bf16.mxu0 0
    %1888 = vmatpush2.bf16.xpose.msra.mxu0 0
    %1889 = vmatprep.subr.bf16.mxu0 0
    %1890 = vmatpush2.bf16.xpose.msra.mxu0 0
    %1891 = vmatprep.mubr.bf16.mxu0 0
    %1892 = vmatmul.mubr.bf16.gmra.mxu0 %v1854
    %v1893 = vpop.f32.mrf.mxu0
    %v1894 = vadd.f32 0.0, %v1893
    %v1895 = vpop.f32.mrf.mxu0
    %v1896 = vpop.f32.mrf.mxu0
    %v1897 = vpop.f32.mrf.mxu0
    %1898 = vdwg.mxu0
    %v1899 = vmul.f32 %v1848, 0.35355338
    %v1900 = vmul.f32 %v1894, 0.35355338
    %v1901 = vsel %vm327, %v1899, -inf
    %1902 = vmax.xlane.f32.xlu0 %v1901
    %v1903 = vpop.xlane.xlu0 %1902
    %v1904 = vsel %vm327, %v1900, -inf
    %1905 = vmax.xlane.f32.xlu0 %v1904
    %v1906 = vpop.xlane.xlu0 %1905
    %v1907 = vsub.f32 %v1899, %v1903
    %v1908 = vsub.f32 %v1900, %v1906
    %v1909 = vmul.f32 %v1907, 1.442695
    %v1910 = vpow.pop %v1909
    %v1911 = vmul.f32 %v1908, 1.442695
    %v1912 = vpow.pop %v1911
    %v1913 = vsel %vm327, %v1910, 0.0
    %1914 = vadd.xlane.f32.xlu0 %v1913
    %v1915 = vpop.xlane.xlu0 %1914
    %v1916 = vsel %vm327, %v1912, 0.0
    %1917 = vadd.xlane.f32.xlu0 %v1916
    %v1918 = vpop.xlane.xlu0 %1917
    %v1919 = vrcp.pop %v1915
    %v1920 = vrcp.pop %v1918
    %v1921 = vmul.f32 %v1910, %v1919
    %v1922 = vmul.f32 %v1912, %v1920
    %v1923 = vpack.c.bf16 %v1921, %v1921
    %v1924 = vpack.c.bf16 %v1922, %v1922
    %v1926 = vsel %vm327, %v1923, 0
    %v1929 = vsel %vm449, %v1805, 0
    %1931 = vmatprep.subr.bf16.mxu0 0
    %1932 = vmatpush1.bf16.msra.mxu0 0
    %1933 = vmatprep.subr.bf16.mxu0 0
    %1934 = vmatpush1.bf16.msra.mxu0 0
    %1935 = vmatprep.subr.bf16.mxu0 0
    %1936 = vmatpush1.bf16.msra.mxu0 0
    %1937 = vmatprep.subr.bf16.mxu0 0
    %1938 = vmatpush1.bf16.msra.mxu0 0
    %1939 = vmatprep.subr.bf16.mxu0 0
    %1940 = vmatpush1.bf16.msra.mxu0 0
    %1941 = vmatprep.subr.bf16.mxu0 0
    %1942 = vmatpush1.bf16.msra.mxu0 0
    %1943 = vmatprep.subr.bf16.mxu0 0
    %1944 = vmatpush1.bf16.msra.mxu0 0
    %1945 = vmatprep.subr.bf16.mxu0 0
    %1946 = vmatpush1.bf16.msra.mxu0 %v1929
    %1947 = vmatprep.subr.bf16.mxu0 0
    %1948 = vmatpush2.bf16.msra.mxu0 0
    %1949 = vmatprep.subr.bf16.mxu0 0
    %1950 = vmatpush2.bf16.msra.mxu0 0
    %1951 = vmatprep.subr.bf16.mxu0 0
    %1952 = vmatpush2.bf16.msra.mxu0 0
    %1953 = vmatprep.subr.bf16.mxu0 0
    %1954 = vmatpush2.bf16.msra.mxu0 0
    %1955 = vmatprep.subr.bf16.mxu0 0
    %1956 = vmatpush2.bf16.msra.mxu0 0
    %1957 = vmatprep.subr.bf16.mxu0 0
    %1958 = vmatpush2.bf16.msra.mxu0 0
    %1959 = vmatprep.subr.bf16.mxu0 0
    %1960 = vmatpush2.bf16.msra.mxu0 0
    %1961 = vmatprep.subr.bf16.mxu0 0
    %1962 = vmatpush2.bf16.msra.mxu0 0
    %1963 = vmatprep.mubr.bf16.mxu0 0
    %1964 = vmatmul.mubr.bf16.gmra.mxu0 %v1926
    %v1965 = vpop.f32.mrf.mxu0
    %v1966 = vadd.f32 0.0, %v1965
    %v1967 = vpop.f32.mrf.mxu0
    %v1968 = vpop.f32.mrf.mxu0
    %v1969 = vpop.f32.mrf.mxu0
    %1970 = vdwg.mxu0
    %v1972 = vsel %vm327, %v1924, 0
    %v1975 = vsel %vm449, %v1806, 0
    %1977 = vmatprep.subr.bf16.mxu0 0
    %1978 = vmatpush1.bf16.msra.mxu0 0
    %1979 = vmatprep.subr.bf16.mxu0 0
    %1980 = vmatpush1.bf16.msra.mxu0 0
    %1981 = vmatprep.subr.bf16.mxu0 0
    %1982 = vmatpush1.bf16.msra.mxu0 0
    %1983 = vmatprep.subr.bf16.mxu0 0
    %1984 = vmatpush1.bf16.msra.mxu0 0
    %1985 = vmatprep.subr.bf16.mxu0 0
    %1986 = vmatpush1.bf16.msra.mxu0 0
    %1987 = vmatprep.subr.bf16.mxu0 0
    %1988 = vmatpush1.bf16.msra.mxu0 0
    %1989 = vmatprep.subr.bf16.mxu0 0
    %1990 = vmatpush1.bf16.msra.mxu0 0
    %1991 = vmatprep.subr.bf16.mxu0 0
    %1992 = vmatpush1.bf16.msra.mxu0 %v1975
    %1993 = vmatprep.subr.bf16.mxu0 0
    %1994 = vmatpush2.bf16.msra.mxu0 0
    %1995 = vmatprep.subr.bf16.mxu0 0
    %1996 = vmatpush2.bf16.msra.mxu0 0
    %1997 = vmatprep.subr.bf16.mxu0 0
    %1998 = vmatpush2.bf16.msra.mxu0 0
    %1999 = vmatprep.subr.bf16.mxu0 0
    %2000 = vmatpush2.bf16.msra.mxu0 0
    %2001 = vmatprep.subr.bf16.mxu0 0
    %2002 = vmatpush2.bf16.msra.mxu0 0
    %2003 = vmatprep.subr.bf16.mxu0 0
    %2004 = vmatpush2.bf16.msra.mxu0 0
    %2005 = vmatprep.subr.bf16.mxu0 0
    %2006 = vmatpush2.bf16.msra.mxu0 0
    %2007 = vmatprep.subr.bf16.mxu0 0
    %2008 = vmatpush2.bf16.msra.mxu0 0
    %2009 = vmatprep.mubr.bf16.mxu0 0
    %2010 = vmatmul.mubr.bf16.gmra.mxu0 %v1972
    %v2011 = vpop.f32.mrf.mxu0
    %v2012 = vadd.f32 0.0, %v2011
    %v2013 = vpop.f32.mrf.mxu0
    %v2014 = vpop.f32.mrf.mxu0
    %v2015 = vpop.f32.mrf.mxu0
    %2016 = vdwg.mxu0
    %2017 = vst.msk [vmem:[#allocation2] sm:$0xff] %vm327, %v1966
    %2018 = vst.msk [vmem:[#allocation2 + $0x8] sm:$0xff] %vm327, %v2012
    %2020 = vrot.lane.b32.xlu0 %v1801, 120
    %v2021 = vpop.permute.xlu0 %2020
    %2023 = vrot.lane.b32.xlu0 %v1803, 120
    %v2024 = vpop.permute.xlu0 %2023
    %v2026 = vsel %vm327, %v2021, 0
    %v2029 = vsel %vm327, %v2024, 0
    %2031 = vmatprep.subr.bf16.mxu0 0
    %2032 = vmatpush1.bf16.xpose.msra.mxu0 0
    %2033 = vmatprep.subr.bf16.mxu0 0
    %2034 = vmatpush1.bf16.xpose.msra.mxu0 0
    %2035 = vmatprep.subr.bf16.mxu0 0
    %2036 = vmatpush1.bf16.xpose.msra.mxu0 0
    %2037 = vmatprep.subr.bf16.mxu0 0
    %2038 = vmatpush1.bf16.xpose.msra.mxu0 0
    %2039 = vmatprep.subr.bf16.mxu0 0
    %2040 = vmatpush1.bf16.xpose.msra.mxu0 0
    %2041 = vmatprep.subr.bf16.mxu0 0
    %2042 = vmatpush1.bf16.xpose.msra.mxu0 0
    %2043 = vmatprep.subr.bf16.mxu0 0
    %2044 = vmatpush1.bf16.xpose.msra.mxu0 0
    %2045 = vmatprep.subr.bf16.mxu0 0
    %2046 = vmatpush1.bf16.xpose.msra.mxu0 %v2029
    %2047 = vmatprep.subr.bf16.mxu0 0
    %2048 = vmatpush2.bf16.xpose.msra.mxu0 0
    %2049 = vmatprep.subr.bf16.mxu0 0
    %2050 = vmatpush2.bf16.xpose.msra.mxu0 0
    %2051 = vmatprep.subr.bf16.mxu0 0
    %2052 = vmatpush2.bf16.xpose.msra.mxu0 0
    %2053 = vmatprep.subr.bf16.mxu0 0
    %2054 = vmatpush2.bf16.xpose.msra.mxu0 0
    %2055 = vmatprep.subr.bf16.mxu0 0
    %2056 = vmatpush2.bf16.xpose.msra.mxu0 0
    %2057 = vmatprep.subr.bf16.mxu0 0
    %2058 = vmatpush2.bf16.xpose.msra.mxu0 0
    %2059 = vmatprep.subr.bf16.mxu0 0
    %2060 = vmatpush2.bf16.xpose.msra.mxu0 0
    %2061 = vmatprep.subr.bf16.mxu0 0
    %2062 = vmatpush2.bf16.xpose.msra.mxu0 0
    %2063 = vmatprep.mubr.bf16.mxu0 0
    %2064 = vmatmul.mubr.bf16.gmra.mxu0 %v2026
    %v2065 = vpop.f32.mrf.mxu0
    %v2066 = vadd.f32 0.0, %v2065
    %v2067 = vpop.f32.mrf.mxu0
    %v2068 = vpop.f32.mrf.mxu0
    %v2069 = vpop.f32.mrf.mxu0
    %2070 = vdwg.mxu0
    %2072 = vrot.lane.b32.xlu0 %v1802, 120
    %v2073 = vpop.permute.xlu0 %2072
    %2075 = vrot.lane.b32.xlu0 %v1804, 120
    %v2076 = vpop.permute.xlu0 %2075
    %v2078 = vsel %vm327, %v2073, 0
    %v2081 = vsel %vm327, %v2076, 0
    %2083 = vmatprep.subr.bf16.mxu0 0
    %2084 = vmatpush1.bf16.xpose.msra.mxu0 0
    %2085 = vmatprep.subr.bf16.mxu0 0
    %2086 = vmatpush1.bf16.xpose.msra.mxu0 0
    %2087 = vmatprep.subr.bf16.mxu0 0
    %2088 = vmatpush1.bf16.xpose.msra.mxu0 0
    %2089 = vmatprep.subr.bf16.mxu0 0
    %2090 = vmatpush1.bf16.xpose.msra.mxu0 0
    %2091 = vmatprep.subr.bf16.mxu0 0
    %2092 = vmatpush1.bf16.xpose.msra.mxu0 0
    %2093 = vmatprep.subr.bf16.mxu0 0
    %2094 = vmatpush1.bf16.xpose.msra.mxu0 0
    %2095 = vmatprep.subr.bf16.mxu0 0
    %2096 = vmatpush1.bf16.xpose.msra.mxu0 0
    %2097 = vmatprep.subr.bf16.mxu0 0
    %2098 = vmatpush1.bf16.xpose.msra.mxu0 %v2081
    %2099 = vmatprep.subr.bf16.mxu0 0
    %2100 = vmatpush2.bf16.xpose.msra.mxu0 0
    %2101 = vmatprep.subr.bf16.mxu0 0
    %2102 = vmatpush2.bf16.xpose.msra.mxu0 0
    %2103 = vmatprep.subr.bf16.mxu0 0
    %2104 = vmatpush2.bf16.xpose.msra.mxu0 0
    %2105 = vmatprep.subr.bf16.mxu0 0
    %2106 = vmatpush2.bf16.xpose.msra.mxu0 0
    %2107 = vmatprep.subr.bf16.mxu0 0
    %2108 = vmatpush2.bf16.xpose.msra.mxu0 0
    %2109 = vmatprep.subr.bf16.mxu0 0
    %2110 = vmatpush2.bf16.xpose.msra.mxu0 0
    %2111 = vmatprep.subr.bf16.mxu0 0
    %2112 = vmatpush2.bf16.xpose.msra.mxu0 0
    %2113 = vmatprep.subr.bf16.mxu0 0
    %2114 = vmatpush2.bf16.xpose.msra.mxu0 0
    %2115 = vmatprep.mubr.bf16.mxu0 0
    %2116 = vmatmul.mubr.bf16.gmra.mxu0 %v2078
    %v2117 = vpop.f32.mrf.mxu0
    %v2118 = vadd.f32 0.0, %v2117
    %v2119 = vpop.f32.mrf.mxu0
    %v2120 = vpop.f32.mrf.mxu0
    %v2121 = vpop.f32.mrf.mxu0
    %2122 = vdwg.mxu0
    %v2123 = vmul.f32 %v2066, 0.35355338
    %v2124 = vmul.f32 %v2118, 0.35355338
    %v2125 = vsel %vm327, %v2123, -inf
    %2126 = vmax.xlane.f32.xlu0 %v2125
    %v2127 = vpop.xlane.xlu0 %2126
    %v2128 = vsel %vm327, %v2124, -inf
    %2129 = vmax.xlane.f32.xlu0 %v2128
    %v2130 = vpop.xlane.xlu0 %2129
    %v2131 = vsub.f32 %v2123, %v2127
    %v2132 = vsub.f32 %v2124, %v2130
    %v2133 = vmul.f32 %v2131, 1.442695
    %v2134 = vpow.pop %v2133
    %v2135 = vmul.f32 %v2132, 1.442695
    %v2136 = vpow.pop %v2135
    %v2137 = vsel %vm327, %v2134, 0.0
    %2138 = vadd.xlane.f32.xlu0 %v2137
    %v2139 = vpop.xlane.xlu0 %2138
    %v2140 = vsel %vm327, %v2136, 0.0
    %2141 = vadd.xlane.f32.xlu0 %v2140
    %v2142 = vpop.xlane.xlu0 %2141
    %v2143 = vrcp.pop %v2139
    %v2144 = vrcp.pop %v2142
    %v2145 = vmul.f32 %v2134, %v2143
    %v2146 = vmul.f32 %v2136, %v2144
    %v2147 = vpack.c.bf16 %v2145, %v2145
    %v2148 = vpack.c.bf16 %v2146, %v2146
    %2150 = vrot.lane.b32.xlu0 %v1805, 120
    %v2151 = vpop.permute.xlu0 %2150
    %v2153 = vsel %vm327, %v2147, 0
    %v2156 = vsel %vm449, %v2151, 0
    %2158 = vmatprep.subr.bf16.mxu0 0
    %2159 = vmatpush1.bf16.msra.mxu0 0
    %2160 = vmatprep.subr.bf16.mxu0 0
    %2161 = vmatpush1.bf16.msra.mxu0 0
    %2162 = vmatprep.subr.bf16.mxu0 0
    %2163 = vmatpush1.bf16.msra.mxu0 0
    %2164 = vmatprep.subr.bf16.mxu0 0
    %2165 = vmatpush1.bf16.msra.mxu0 0
    %2166 = vmatprep.subr.bf16.mxu0 0
    %2167 = vmatpush1.bf16.msra.mxu0 0
    %2168 = vmatprep.subr.bf16.mxu0 0
    %2169 = vmatpush1.bf16.msra.mxu0 0
    %2170 = vmatprep.subr.bf16.mxu0 0
    %2171 = vmatpush1.bf16.msra.mxu0 0
    %2172 = vmatprep.subr.bf16.mxu0 0
    %2173 = vmatpush1.bf16.msra.mxu0 %v2156
    %2174 = vmatprep.subr.bf16.mxu0 0
    %2175 = vmatpush2.bf16.msra.mxu0 0
    %2176 = vmatprep.subr.bf16.mxu0 0
    %2177 = vmatpush2.bf16.msra.mxu0 0
    %2178 = vmatprep.subr.bf16.mxu0 0
    %2179 = vmatpush2.bf16.msra.mxu0 0
    %2180 = vmatprep.subr.bf16.mxu0 0
    %2181 = vmatpush2.bf16.msra.mxu0 0
    %2182 = vmatprep.subr.bf16.mxu0 0
    %2183 = vmatpush2.bf16.msra.mxu0 0
    %2184 = vmatprep.subr.bf16.mxu0 0
    %2185 = vmatpush2.bf16.msra.mxu0 0
    %2186 = vmatprep.subr.bf16.mxu0 0
    %2187 = vmatpush2.bf16.msra.mxu0 0
    %2188 = vmatprep.subr.bf16.mxu0 0
    %2189 = vmatpush2.bf16.msra.mxu0 0
    %2190 = vmatprep.mubr.bf16.mxu0 0
    %2191 = vmatmul.mubr.bf16.gmra.mxu0 %v2153
    %v2192 = vpop.f32.mrf.mxu0
    %v2193 = vadd.f32 0.0, %v2192
    %v2194 = vpop.f32.mrf.mxu0
    %v2195 = vpop.f32.mrf.mxu0
    %v2196 = vpop.f32.mrf.mxu0
    %2197 = vdwg.mxu0
    %2199 = vrot.lane.b32.xlu0 %v1806, 120
    %v2200 = vpop.permute.xlu0 %2199
    %v2202 = vsel %vm327, %v2148, 0
    %v2205 = vsel %vm449, %v2200, 0
    %2207 = vmatprep.subr.bf16.mxu0 0
    %2208 = vmatpush1.bf16.msra.mxu0 0
    %2209 = vmatprep.subr.bf16.mxu0 0
    %2210 = vmatpush1.bf16.msra.mxu0 0
    %2211 = vmatprep.subr.bf16.mxu0 0
    %2212 = vmatpush1.bf16.msra.mxu0 0
    %2213 = vmatprep.subr.bf16.mxu0 0
    %2214 = vmatpush1.bf16.msra.mxu0 0
    %2215 = vmatprep.subr.bf16.mxu0 0
    %2216 = vmatpush1.bf16.msra.mxu0 0
    %2217 = vmatprep.subr.bf16.mxu0 0
    %2218 = vmatpush1.bf16.msra.mxu0 0
    %2219 = vmatprep.subr.bf16.mxu0 0
    %2220 = vmatpush1.bf16.msra.mxu0 0
    %2221 = vmatprep.subr.bf16.mxu0 0
    %2222 = vmatpush1.bf16.msra.mxu0 %v2205
    %2223 = vmatprep.subr.bf16.mxu0 0
    %2224 = vmatpush2.bf16.msra.mxu0 0
    %2225 = vmatprep.subr.bf16.mxu0 0
    %2226 = vmatpush2.bf16.msra.mxu0 0
    %2227 = vmatprep.subr.bf16.mxu0 0
    %2228 = vmatpush2.bf16.msra.mxu0 0
    %2229 = vmatprep.subr.bf16.mxu0 0
    %2230 = vmatpush2.bf16.msra.mxu0 0
    %2231 = vmatprep.subr.bf16.mxu0 0
    %2232 = vmatpush2.bf16.msra.mxu0 0
    %2233 = vmatprep.subr.bf16.mxu0 0
    %2234 = vmatpush2.bf16.msra.mxu0 0
    %2235 = vmatprep.subr.bf16.mxu0 0
    %2236 = vmatpush2.bf16.msra.mxu0 0
    %2237 = vmatprep.subr.bf16.mxu0 0
    %2238 = vmatpush2.bf16.msra.mxu0 0
    %2239 = vmatprep.mubr.bf16.mxu0 0
    %2240 = vmatmul.mubr.bf16.gmra.mxu0 %v2202
    %v2241 = vpop.f32.mrf.mxu0
    %v2242 = vadd.f32 0.0, %v2241
    %v2243 = vpop.f32.mrf.mxu0
    %v2244 = vpop.f32.mrf.mxu0
    %v2245 = vpop.f32.mrf.mxu0
    %2246 = vdwg.mxu0
    %2249 = vrot.lane.b32.xlu0 %v2193, 8
    %v2250 = vpop.permute.xlu0 %2249
    %2251 = vrot.lane.b32.xlu0 %v2242, 8
    %v2252 = vpop.permute.xlu0 %2251
    %2255 = vst.msk [vmem:[#allocation2] sm:$0xff] %vm777, %v2250
    %2256 = vst.msk [vmem:[#allocation2 + $0x8] sm:$0xff] %vm777, %v2252
    %2257 = vrot.lane.b32.xlu0 %v1801, 112
    %v2258 = vpop.permute.xlu0 %2257
    %2259 = vrot.lane.b32.xlu0 %v1803, 112
    %v2260 = vpop.permute.xlu0 %2259
    %v2262 = vsel %vm327, %v2258, 0
    %v2265 = vsel %vm327, %v2260, 0
    %2267 = vmatprep.subr.bf16.mxu0 0
    %2268 = vmatpush1.bf16.xpose.msra.mxu0 0
    %2269 = vmatprep.subr.bf16.mxu0 0
    %2270 = vmatpush1.bf16.xpose.msra.mxu0 0
    %2271 = vmatprep.subr.bf16.mxu0 0
    %2272 = vmatpush1.bf16.xpose.msra.mxu0 0
    %2273 = vmatprep.subr.bf16.mxu0 0
    %2274 = vmatpush1.bf16.xpose.msra.mxu0 0
    %2275 = vmatprep.subr.bf16.mxu0 0
    %2276 = vmatpush1.bf16.xpose.msra.mxu0 0
    %2277 = vmatprep.subr.bf16.mxu0 0
    %2278 = vmatpush1.bf16.xpose.msra.mxu0 0
    %2279 = vmatprep.subr.bf16.mxu0 0
    %2280 = vmatpush1.bf16.xpose.msra.mxu0 0
    %2281 = vmatprep.subr.bf16.mxu0 0
    %2282 = vmatpush1.bf16.xpose.msra.mxu0 %v2265
    %2283 = vmatprep.subr.bf16.mxu0 0
    %2284 = vmatpush2.bf16.xpose.msra.mxu0 0
    %2285 = vmatprep.subr.bf16.mxu0 0
    %2286 = vmatpush2.bf16.xpose.msra.mxu0 0
    %2287 = vmatprep.subr.bf16.mxu0 0
    %2288 = vmatpush2.bf16.xpose.msra.mxu0 0
    %2289 = vmatprep.subr.bf16.mxu0 0
    %2290 = vmatpush2.bf16.xpose.msra.mxu0 0
    %2291 = vmatprep.subr.bf16.mxu0 0
    %2292 = vmatpush2.bf16.xpose.msra.mxu0 0
    %2293 = vmatprep.subr.bf16.mxu0 0
    %2294 = vmatpush2.bf16.xpose.msra.mxu0 0
    %2295 = vmatprep.subr.bf16.mxu0 0
    %2296 = vmatpush2.bf16.xpose.msra.mxu0 0
    %2297 = vmatprep.subr.bf16.mxu0 0
    %2298 = vmatpush2.bf16.xpose.msra.mxu0 0
    %2299 = vmatprep.mubr.bf16.mxu0 0
    %2300 = vmatmul.mubr.bf16.gmra.mxu0 %v2262
    %v2301 = vpop.f32.mrf.mxu0
    %v2302 = vadd.f32 0.0, %v2301
    %v2303 = vpop.f32.mrf.mxu0
    %v2304 = vpop.f32.mrf.mxu0
    %v2305 = vpop.f32.mrf.mxu0
    %2306 = vdwg.mxu0
    %2307 = vrot.lane.b32.xlu0 %v1802, 112
    %v2308 = vpop.permute.xlu0 %2307
    %2309 = vrot.lane.b32.xlu0 %v1804, 112
    %v2310 = vpop.permute.xlu0 %2309
    %v2312 = vsel %vm327, %v2308, 0
    %v2315 = vsel %vm327, %v2310, 0
    %2317 = vmatprep.subr.bf16.mxu0 0
    %2318 = vmatpush1.bf16.xpose.msra.mxu0 0
    %2319 = vmatprep.subr.bf16.mxu0 0
    %2320 = vmatpush1.bf16.xpose.msra.mxu0 0
    %2321 = vmatprep.subr.bf16.mxu0 0
    %2322 = vmatpush1.bf16.xpose.msra.mxu0 0
    %2323 = vmatprep.subr.bf16.mxu0 0
    %2324 = vmatpush1.bf16.xpose.msra.mxu0 0
    %2325 = vmatprep.subr.bf16.mxu0 0
    %2326 = vmatpush1.bf16.xpose.msra.mxu0 0
    %2327 = vmatprep.subr.bf16.mxu0 0
    %2328 = vmatpush1.bf16.xpose.msra.mxu0 0
    %2329 = vmatprep.subr.bf16.mxu0 0
    %2330 = vmatpush1.bf16.xpose.msra.mxu0 0
    %2331 = vmatprep.subr.bf16.mxu0 0
    %2332 = vmatpush1.bf16.xpose.msra.mxu0 %v2315
    %2333 = vmatprep.subr.bf16.mxu0 0
    %2334 = vmatpush2.bf16.xpose.msra.mxu0 0
    %2335 = vmatprep.subr.bf16.mxu0 0
    %2336 = vmatpush2.bf16.xpose.msra.mxu0 0
    %2337 = vmatprep.subr.bf16.mxu0 0
    %2338 = vmatpush2.bf16.xpose.msra.mxu0 0
    %2339 = vmatprep.subr.bf16.mxu0 0
    %2340 = vmatpush2.bf16.xpose.msra.mxu0 0
    %2341 = vmatprep.subr.bf16.mxu0 0
    %2342 = vmatpush2.bf16.xpose.msra.mxu0 0
    %2343 = vmatprep.subr.bf16.mxu0 0
    %2344 = vmatpush2.bf16.xpose.msra.mxu0 0
    %2345 = vmatprep.subr.bf16.mxu0 0
    %2346 = vmatpush2.bf16.xpose.msra.mxu0 0
    %2347 = vmatprep.subr.bf16.mxu0 0
    %2348 = vmatpush2.bf16.xpose.msra.mxu0 0
    %2349 = vmatprep.mubr.bf16.mxu0 0
    %2350 = vmatmul.mubr.bf16.gmra.mxu0 %v2312
    %v2351 = vpop.f32.mrf.mxu0
    %v2352 = vadd.f32 0.0, %v2351
    %v2353 = vpop.f32.mrf.mxu0
    %v2354 = vpop.f32.mrf.mxu0
    %v2355 = vpop.f32.mrf.mxu0
    %2356 = vdwg.mxu0
    %v2357 = vmul.f32 %v2302, 0.35355338
    %v2358 = vmul.f32 %v2352, 0.35355338
    %v2359 = vsel %vm327, %v2357, -inf
    %2360 = vmax.xlane.f32.xlu0 %v2359
    %v2361 = vpop.xlane.xlu0 %2360
    %v2362 = vsel %vm327, %v2358, -inf
    %2363 = vmax.xlane.f32.xlu0 %v2362
    %v2364 = vpop.xlane.xlu0 %2363
    %v2365 = vsub.f32 %v2357, %v2361
    %v2366 = vsub.f32 %v2358, %v2364
    %v2367 = vmul.f32 %v2365, 1.442695
    %v2368 = vpow.pop %v2367
    %v2369 = vmul.f32 %v2366, 1.442695
    %v2370 = vpow.pop %v2369
    %v2371 = vsel %vm327, %v2368, 0.0
    %2372 = vadd.xlane.f32.xlu0 %v2371
    %v2373 = vpop.xlane.xlu0 %2372
    %v2374 = vsel %vm327, %v2370, 0.0
    %2375 = vadd.xlane.f32.xlu0 %v2374
    %v2376 = vpop.xlane.xlu0 %2375
    %v2377 = vrcp.pop %v2373
    %v2378 = vrcp.pop %v2376
    %v2379 = vmul.f32 %v2368, %v2377
    %v2380 = vmul.f32 %v2370, %v2378
    %v2381 = vpack.c.bf16 %v2379, %v2379
    %v2382 = vpack.c.bf16 %v2380, %v2380
    %2383 = vrot.lane.b32.xlu0 %v1805, 112
    %v2384 = vpop.permute.xlu0 %2383
    %v2386 = vsel %vm327, %v2381, 0
    %v2389 = vsel %vm449, %v2384, 0
    %2391 = vmatprep.subr.bf16.mxu0 0
    %2392 = vmatpush1.bf16.msra.mxu0 0
    %2393 = vmatprep.subr.bf16.mxu0 0
    %2394 = vmatpush1.bf16.msra.mxu0 0
    %2395 = vmatprep.subr.bf16.mxu0 0
    %2396 = vmatpush1.bf16.msra.mxu0 0
    %2397 = vmatprep.subr.bf16.mxu0 0
    %2398 = vmatpush1.bf16.msra.mxu0 0
    %2399 = vmatprep.subr.bf16.mxu0 0
    %2400 = vmatpush1.bf16.msra.mxu0 0
    %2401 = vmatprep.subr.bf16.mxu0 0
    %2402 = vmatpush1.bf16.msra.mxu0 0
    %2403 = vmatprep.subr.bf16.mxu0 0
    %2404 = vmatpush1.bf16.msra.mxu0 0
    %2405 = vmatprep.subr.bf16.mxu0 0
    %2406 = vmatpush1.bf16.msra.mxu0 %v2389
    %2407 = vmatprep.subr.bf16.mxu0 0
    %2408 = vmatpush2.bf16.msra.mxu0 0
    %2409 = vmatprep.subr.bf16.mxu0 0
    %2410 = vmatpush2.bf16.msra.mxu0 0
    %2411 = vmatprep.subr.bf16.mxu0 0
    %2412 = vmatpush2.bf16.msra.mxu0 0
    %2413 = vmatprep.subr.bf16.mxu0 0
    %2414 = vmatpush2.bf16.msra.mxu0 0
    %2415 = vmatprep.subr.bf16.mxu0 0
    %2416 = vmatpush2.bf16.msra.mxu0 0
    %2417 = vmatprep.subr.bf16.mxu0 0
    %2418 = vmatpush2.bf16.msra.mxu0 0
    %2419 = vmatprep.subr.bf16.mxu0 0
    %2420 = vmatpush2.bf16.msra.mxu0 0
    %2421 = vmatprep.subr.bf16.mxu0 0
    %2422 = vmatpush2.bf16.msra.mxu0 0
    %2423 = vmatprep.mubr.bf16.mxu0 0
    %2424 = vmatmul.mubr.bf16.gmra.mxu0 %v2386
    %v2425 = vpop.f32.mrf.mxu0
    %v2426 = vadd.f32 0.0, %v2425
    %v2427 = vpop.f32.mrf.mxu0
    %v2428 = vpop.f32.mrf.mxu0
    %v2429 = vpop.f32.mrf.mxu0
    %2430 = vdwg.mxu0
    %2431 = vrot.lane.b32.xlu0 %v1806, 112
    %v2432 = vpop.permute.xlu0 %2431
    %v2434 = vsel %vm327, %v2382, 0
    %v2437 = vsel %vm449, %v2432, 0
    %2439 = vmatprep.subr.bf16.mxu0 0
    %2440 = vmatpush1.bf16.msra.mxu0 0
    %2441 = vmatprep.subr.bf16.mxu0 0
    %2442 = vmatpush1.bf16.msra.mxu0 0
    %2443 = vmatprep.subr.bf16.mxu0 0
    %2444 = vmatpush1.bf16.msra.mxu0 0
    %2445 = vmatprep.subr.bf16.mxu0 0
    %2446 = vmatpush1.bf16.msra.mxu0 0
    %2447 = vmatprep.subr.bf16.mxu0 0
    %2448 = vmatpush1.bf16.msra.mxu0 0
    %2449 = vmatprep.subr.bf16.mxu0 0
    %2450 = vmatpush1.bf16.msra.mxu0 0
    %2451 = vmatprep.subr.bf16.mxu0 0
    %2452 = vmatpush1.bf16.msra.mxu0 0
    %2453 = vmatprep.subr.bf16.mxu0 0
    %2454 = vmatpush1.bf16.msra.mxu0 %v2437
    %2455 = vmatprep.subr.bf16.mxu0 0
    %2456 = vmatpush2.bf16.msra.mxu0 0
    %2457 = vmatprep.subr.bf16.mxu0 0
    %2458 = vmatpush2.bf16.msra.mxu0 0
    %2459 = vmatprep.subr.bf16.mxu0 0
    %2460 = vmatpush2.bf16.msra.mxu0 0
    %2461 = vmatprep.subr.bf16.mxu0 0
    %2462 = vmatpush2.bf16.msra.mxu0 0
    %2463 = vmatprep.subr.bf16.mxu0 0
    %2464 = vmatpush2.bf16.msra.mxu0 0
    %2465 = vmatprep.subr.bf16.mxu0 0
    %2466 = vmatpush2.bf16.msra.mxu0 0
    %2467 = vmatprep.subr.bf16.mxu0 0
    %2468 = vmatpush2.bf16.msra.mxu0 0
    %2469 = vmatprep.subr.bf16.mxu0 0
    %2470 = vmatpush2.bf16.msra.mxu0 0
    %2471 = vmatprep.mubr.bf16.mxu0 0
    %2472 = vmatmul.mubr.bf16.gmra.mxu0 %v2434
    %v2473 = vpop.f32.mrf.mxu0
    %v2474 = vadd.f32 0.0, %v2473
    %v2475 = vpop.f32.mrf.mxu0
    %v2476 = vpop.f32.mrf.mxu0
    %v2477 = vpop.f32.mrf.mxu0
    %2478 = vdwg.mxu0
    %2481 = vrot.lane.b32.xlu0 %v2426, 16
    %v2482 = vpop.permute.xlu0 %2481
    %2483 = vrot.lane.b32.xlu0 %v2474, 16
    %v2484 = vpop.permute.xlu0 %2483
    %2487 = vst.msk [vmem:[#allocation2] sm:$0xff] %vm1010, %v2482
    %2488 = vst.msk [vmem:[#allocation2 + $0x8] sm:$0xff] %vm1010, %v2484
    %2489 = vrot.lane.b32.xlu0 %v1801, 104
    %v2490 = vpop.permute.xlu0 %2489
    %2491 = vrot.lane.b32.xlu0 %v1803, 104
    %v2492 = vpop.permute.xlu0 %2491
    %v2494 = vsel %vm327, %v2490, 0
    %v2497 = vsel %vm327, %v2492, 0
    %2499 = vmatprep.subr.bf16.mxu0 0
    %2500 = vmatpush1.bf16.xpose.msra.mxu0 0
    %2501 = vmatprep.subr.bf16.mxu0 0
    %2502 = vmatpush1.bf16.xpose.msra.mxu0 0
    %2503 = vmatprep.subr.bf16.mxu0 0
    %2504 = vmatpush1.bf16.xpose.msra.mxu0 0
    %2505 = vmatprep.subr.bf16.mxu0 0
    %2506 = vmatpush1.bf16.xpose.msra.mxu0 0
    %2507 = vmatprep.subr.bf16.mxu0 0
    %2508 = vmatpush1.bf16.xpose.msra.mxu0 0
    %2509 = vmatprep.subr.bf16.mxu0 0
    %2510 = vmatpush1.bf16.xpose.msra.mxu0 0
    %2511 = vmatprep.subr.bf16.mxu0 0
    %2512 = vmatpush1.bf16.xpose.msra.mxu0 0
    %2513 = vmatprep.subr.bf16.mxu0 0
    %2514 = vmatpush1.bf16.xpose.msra.mxu0 %v2497
    %2515 = vmatprep.subr.bf16.mxu0 0
    %2516 = vmatpush2.bf16.xpose.msra.mxu0 0
    %2517 = vmatprep.subr.bf16.mxu0 0
    %2518 = vmatpush2.bf16.xpose.msra.mxu0 0
    %2519 = vmatprep.subr.bf16.mxu0 0
    %2520 = vmatpush2.bf16.xpose.msra.mxu0 0
    %2521 = vmatprep.subr.bf16.mxu0 0
    %2522 = vmatpush2.bf16.xpose.msra.mxu0 0
    %2523 = vmatprep.subr.bf16.mxu0 0
    %2524 = vmatpush2.bf16.xpose.msra.mxu0 0
    %2525 = vmatprep.subr.bf16.mxu0 0
    %2526 = vmatpush2.bf16.xpose.msra.mxu0 0
    %2527 = vmatprep.subr.bf16.mxu0 0
    %2528 = vmatpush2.bf16.xpose.msra.mxu0 0
    %2529 = vmatprep.subr.bf16.mxu0 0
    %2530 = vmatpush2.bf16.xpose.msra.mxu0 0
    %2531 = vmatprep.mubr.bf16.mxu0 0
    %2532 = vmatmul.mubr.bf16.gmra.mxu0 %v2494
    %v2533 = vpop.f32.mrf.mxu0
    %v2534 = vadd.f32 0.0, %v2533
    %v2535 = vpop.f32.mrf.mxu0
    %v2536 = vpop.f32.mrf.mxu0
    %v2537 = vpop.f32.mrf.mxu0
    %2538 = vdwg.mxu0
    %2539 = vrot.lane.b32.xlu0 %v1802, 104
    %v2540 = vpop.permute.xlu0 %2539
    %2541 = vrot.lane.b32.xlu0 %v1804, 104
    %v2542 = vpop.permute.xlu0 %2541
    %v2544 = vsel %vm327, %v2540, 0
    %v2547 = vsel %vm327, %v2542, 0
    %2549 = vmatprep.subr.bf16.mxu0 0
    %2550 = vmatpush1.bf16.xpose.msra.mxu0 0
    %2551 = vmatprep.subr.bf16.mxu0 0
    %2552 = vmatpush1.bf16.xpose.msra.mxu0 0
    %2553 = vmatprep.subr.bf16.mxu0 0
    %2554 = vmatpush1.bf16.xpose.msra.mxu0 0
    %2555 = vmatprep.subr.bf16.mxu0 0
    %2556 = vmatpush1.bf16.xpose.msra.mxu0 0
    %2557 = vmatprep.subr.bf16.mxu0 0
    %2558 = vmatpush1.bf16.xpose.msra.mxu0 0
    %2559 = vmatprep.subr.bf16.mxu0 0
    %2560 = vmatpush1.bf16.xpose.msra.mxu0 0
    %2561 = vmatprep.subr.bf16.mxu0 0
    %2562 = vmatpush1.bf16.xpose.msra.mxu0 0
    %2563 = vmatprep.subr.bf16.mxu0 0
    %2564 = vmatpush1.bf16.xpose.msra.mxu0 %v2547
    %2565 = vmatprep.subr.bf16.mxu0 0
    %2566 = vmatpush2.bf16.xpose.msra.mxu0 0
    %2567 = vmatprep.subr.bf16.mxu0 0
    %2568 = vmatpush2.bf16.xpose.msra.mxu0 0
    %2569 = vmatprep.subr.bf16.mxu0 0
    %2570 = vmatpush2.bf16.xpose.msra.mxu0 0
    %2571 = vmatprep.subr.bf16.mxu0 0
    %2572 = vmatpush2.bf16.xpose.msra.mxu0 0
    %2573 = vmatprep.subr.bf16.mxu0 0
    %2574 = vmatpush2.bf16.xpose.msra.mxu0 0
    %2575 = vmatprep.subr.bf16.mxu0 0
    %2576 = vmatpush2.bf16.xpose.msra.mxu0 0
    %2577 = vmatprep.subr.bf16.mxu0 0
    %2578 = vmatpush2.bf16.xpose.msra.mxu0 0
    %2579 = vmatprep.subr.bf16.mxu0 0
    %2580 = vmatpush2.bf16.xpose.msra.mxu0 0
    %2581 = vmatprep.mubr.bf16.mxu0 0
    %2582 = vmatmul.mubr.bf16.gmra.mxu0 %v2544
    %v2583 = vpop.f32.mrf.mxu0
    %v2584 = vadd.f32 0.0, %v2583
    %v2585 = vpop.f32.mrf.mxu0
    %v2586 = vpop.f32.mrf.mxu0
    %v2587 = vpop.f32.mrf.mxu0
    %2588 = vdwg.mxu0
    %v2589 = vmul.f32 %v2534, 0.35355338
    %v2590 = vmul.f32 %v2584, 0.35355338
    %v2591 = vsel %vm327, %v2589, -inf
    %2592 = vmax.xlane.f32.xlu0 %v2591
    %v2593 = vpop.xlane.xlu0 %2592
    %v2594 = vsel %vm327, %v2590, -inf
    %2595 = vmax.xlane.f32.xlu0 %v2594
    %v2596 = vpop.xlane.xlu0 %2595
    %v2597 = vsub.f32 %v2589, %v2593
    %v2598 = vsub.f32 %v2590, %v2596
    %v2599 = vmul.f32 %v2597, 1.442695
    %v2600 = vpow.pop %v2599
    %v2601 = vmul.f32 %v2598, 1.442695
    %v2602 = vpow.pop %v2601
    %v2603 = vsel %vm327, %v2600, 0.0
    %2604 = vadd.xlane.f32.xlu0 %v2603
    %v2605 = vpop.xlane.xlu0 %2604
    %v2606 = vsel %vm327, %v2602, 0.0
    %2607 = vadd.xlane.f32.xlu0 %v2606
    %v2608 = vpop.xlane.xlu0 %2607
    %v2609 = vrcp.pop %v2605
    %v2610 = vrcp.pop %v2608
    %v2611 = vmul.f32 %v2600, %v2609
    %v2612 = vmul.f32 %v2602, %v2610
    %v2613 = vpack.c.bf16 %v2611, %v2611
    %v2614 = vpack.c.bf16 %v2612, %v2612
    %2615 = vrot.lane.b32.xlu0 %v1805, 104
    %v2616 = vpop.permute.xlu0 %2615
    %v2618 = vsel %vm327, %v2613, 0
    %v2621 = vsel %vm449, %v2616, 0
    %2623 = vmatprep.subr.bf16.mxu0 0
    %2624 = vmatpush1.bf16.msra.mxu0 0
    %2625 = vmatprep.subr.bf16.mxu0 0
    %2626 = vmatpush1.bf16.msra.mxu0 0
    %2627 = vmatprep.subr.bf16.mxu0 0
    %2628 = vmatpush1.bf16.msra.mxu0 0
    %2629 = vmatprep.subr.bf16.mxu0 0
    %2630 = vmatpush1.bf16.msra.mxu0 0
    %2631 = vmatprep.subr.bf16.mxu0 0
    %2632 = vmatpush1.bf16.msra.mxu0 0
    %2633 = vmatprep.subr.bf16.mxu0 0
    %2634 = vmatpush1.bf16.msra.mxu0 0
    %2635 = vmatprep.subr.bf16.mxu0 0
    %2636 = vmatpush1.bf16.msra.mxu0 0
    %2637 = vmatprep.subr.bf16.mxu0 0
    %2638 = vmatpush1.bf16.msra.mxu0 %v2621
    %2639 = vmatprep.subr.bf16.mxu0 0
    %2640 = vmatpush2.bf16.msra.mxu0 0
    %2641 = vmatprep.subr.bf16.mxu0 0
    %2642 = vmatpush2.bf16.msra.mxu0 0
    %2643 = vmatprep.subr.bf16.mxu0 0
    %2644 = vmatpush2.bf16.msra.mxu0 0
    %2645 = vmatprep.subr.bf16.mxu0 0
    %2646 = vmatpush2.bf16.msra.mxu0 0
    %2647 = vmatprep.subr.bf16.mxu0 0
    %2648 = vmatpush2.bf16.msra.mxu0 0
    %2649 = vmatprep.subr.bf16.mxu0 0
    %2650 = vmatpush2.bf16.msra.mxu0 0
    %2651 = vmatprep.subr.bf16.mxu0 0
    %2652 = vmatpush2.bf16.msra.mxu0 0
    %2653 = vmatprep.subr.bf16.mxu0 0
    %2654 = vmatpush2.bf16.msra.mxu0 0
    %2655 = vmatprep.mubr.bf16.mxu0 0
    %2656 = vmatmul.mubr.bf16.gmra.mxu0 %v2618
    %v2657 = vpop.f32.mrf.mxu0
    %v2658 = vadd.f32 0.0, %v2657
    %v2659 = vpop.f32.mrf.mxu0
    %v2660 = vpop.f32.mrf.mxu0
    %v2661 = vpop.f32.mrf.mxu0
    %2662 = vdwg.mxu0
    %2663 = vrot.lane.b32.xlu0 %v1806, 104
    %v2664 = vpop.permute.xlu0 %2663
    %v2666 = vsel %vm327, %v2614, 0
    %v2669 = vsel %vm449, %v2664, 0
    %2671 = vmatprep.subr.bf16.mxu0 0
    %2672 = vmatpush1.bf16.msra.mxu0 0
    %2673 = vmatprep.subr.bf16.mxu0 0
    %2674 = vmatpush1.bf16.msra.mxu0 0
    %2675 = vmatprep.subr.bf16.mxu0 0
    %2676 = vmatpush1.bf16.msra.mxu0 0
    %2677 = vmatprep.subr.bf16.mxu0 0
    %2678 = vmatpush1.bf16.msra.mxu0 0
    %2679 = vmatprep.subr.bf16.mxu0 0
    %2680 = vmatpush1.bf16.msra.mxu0 0
    %2681 = vmatprep.subr.bf16.mxu0 0
    %2682 = vmatpush1.bf16.msra.mxu0 0
    %2683 = vmatprep.subr.bf16.mxu0 0
    %2684 = vmatpush1.bf16.msra.mxu0 0
    %2685 = vmatprep.subr.bf16.mxu0 0
    %2686 = vmatpush1.bf16.msra.mxu0 %v2669
    %2687 = vmatprep.subr.bf16.mxu0 0
    %2688 = vmatpush2.bf16.msra.mxu0 0
    %2689 = vmatprep.subr.bf16.mxu0 0
    %2690 = vmatpush2.bf16.msra.mxu0 0
    %2691 = vmatprep.subr.bf16.mxu0 0
    %2692 = vmatpush2.bf16.msra.mxu0 0
    %2693 = vmatprep.subr.bf16.mxu0 0
    %2694 = vmatpush2.bf16.msra.mxu0 0
    %2695 = vmatprep.subr.bf16.mxu0 0
    %2696 = vmatpush2.bf16.msra.mxu0 0
    %2697 = vmatprep.subr.bf16.mxu0 0
    %2698 = vmatpush2.bf16.msra.mxu0 0
    %2699 = vmatprep.subr.bf16.mxu0 0
    %2700 = vmatpush2.bf16.msra.mxu0 0
    %2701 = vmatprep.subr.bf16.mxu0 0
    %2702 = vmatpush2.bf16.msra.mxu0 0
    %2703 = vmatprep.mubr.bf16.mxu0 0
    %2704 = vmatmul.mubr.bf16.gmra.mxu0 %v2666
    %v2705 = vpop.f32.mrf.mxu0
    %v2706 = vadd.f32 0.0, %v2705
    %v2707 = vpop.f32.mrf.mxu0
    %v2708 = vpop.f32.mrf.mxu0
    %v2709 = vpop.f32.mrf.mxu0
    %2710 = vdwg.mxu0
    %2713 = vrot.lane.b32.xlu0 %v2658, 24
    %v2714 = vpop.permute.xlu0 %2713
    %2715 = vrot.lane.b32.xlu0 %v2706, 24
    %v2716 = vpop.permute.xlu0 %2715
    %2719 = vst.msk [vmem:[#allocation2] sm:$0xff] %vm1243, %v2714
    %2720 = vst.msk [vmem:[#allocation2 + $0x8] sm:$0xff] %vm1243, %v2716
    %v2721 = vld [vmem:[#allocation2] sm:$0xff]
    %v2722 = vld [vmem:[#allocation2 + $0x8] sm:$0xff]
    %v2723 = vpack.c.bf16 %v2722, %v2721
    %v2725 = vlaneseq
    %v2726 = vshrl.u32 %v2725, 7
    %v2727 = vsub.s32 0, %v2726
    %v2728 = vrot.slane %v1607, %v2727
    %v2734 = vunpack.c.l.b16 %v1582
    %v2735 = vunpack.c.l.b16 %v1583
    %v2736 = vunpack.c.l.b16 %v1584
    %v2737 = vunpack.c.l.b16 %v1585
    %v2738 = vpack.c.b16 %v2735, %v2734
    %v2739 = vpack.c.b16 %v2737, %v2736
    %v2743 = vsel %vm158, %v2723, 0
    %2745 = vmatprep.subr.bf16.mxu0 0
    %2746 = vmatpush1.bf16.msra.mxu0 0
    %2747 = vmatprep.subr.bf16.mxu0 0
    %2748 = vmatpush1.bf16.msra.mxu0 0
    %2749 = vmatprep.subr.bf16.mxu0 0
    %2750 = vmatpush1.bf16.msra.mxu0 0
    %2751 = vmatprep.subr.bf16.mxu0 0
    %2752 = vmatpush1.bf16.msra.mxu0 0
    %2753 = vmatprep.subr.bf16.mxu0 0
    %2754 = vmatpush1.bf16.msra.mxu0 0
    %2755 = vmatprep.subr.bf16.mxu0 0
    %2756 = vmatpush1.bf16.msra.mxu0 0
    %2757 = vmatprep.subr.bf16.mxu0 0
    %2758 = vmatpush1.bf16.msra.mxu0 %v2739
    %2759 = vmatprep.subr.bf16.mxu0 0
    %2760 = vmatpush1.bf16.msra.mxu0 %v2738
    %2761 = vmatprep.subr.bf16.mxu0 0
    %2762 = vmatpush2.bf16.msra.mxu0 0
    %2763 = vmatprep.subr.bf16.mxu0 0
    %2764 = vmatpush2.bf16.msra.mxu0 0
    %2765 = vmatprep.subr.bf16.mxu0 0
    %2766 = vmatpush2.bf16.msra.mxu0 0
    %2767 = vmatprep.subr.bf16.mxu0 0
    %2768 = vmatpush2.bf16.msra.mxu0 0
    %2769 = vmatprep.subr.bf16.mxu0 0
    %2770 = vmatpush2.bf16.msra.mxu0 0
    %2771 = vmatprep.subr.bf16.mxu0 0
    %2772 = vmatpush2.bf16.msra.mxu0 0
    %2773 = vmatprep.subr.bf16.mxu0 0
    %2774 = vmatpush2.bf16.msra.mxu0 0
    %2775 = vmatprep.subr.bf16.mxu0 0
    %2776 = vmatpush2.bf16.msra.mxu0 0
    %2777 = vmatprep.mubr.bf16.mxu0 0
    %2778 = vmatmul.mubr.bf16.gmra.mxu0 %v2743
    %v2779 = vpop.f32.mrf.mxu0
    %v2780 = vadd.f32 %v2728, %v2779
    %v2781 = vpop.f32.mrf.mxu0
    %v2782 = vpop.f32.mrf.mxu0
    %v2783 = vadd.f32 %v2728, %v2782
    %v2784 = vpop.f32.mrf.mxu0
    %2785 = vdwg.mxu0
    %v2786 = vadd.f32 %v1564, %v2780
    %v2787 = vadd.f32 %v1565, %v2783
    %v2788 = vsel %vm158, %v2786, 0.0
    %v2789 = vsel %vm158, %v2787, 0.0
    %v2790 = vadd.f32 %v2788, %v2789
    %v2791 = vrot.slane %v2790, 4
    %v2792 = vadd.f32 %v2790, %v2791
    %v2793 = vrot.slane %v2792, 2
    %v2794 = vadd.f32 %v2792, %v2793
    %v2795 = vrot.slane %v2794, 1
    %v2796 = vadd.f32 %v2794, %v2795
    %v2797 = vmul.f32 %v2786, %v2786
    %v2798 = vmul.f32 %v2787, %v2787
    %v2799 = vsel %vm158, %v2797, 0.0
    %v2800 = vsel %vm158, %v2798, 0.0
    %v2801 = vadd.f32 %v2799, %v2800
    %v2802 = vrot.slane %v2801, 4
    %v2803 = vadd.f32 %v2801, %v2802
    %v2804 = vrot.slane %v2803, 2
    %v2805 = vadd.f32 %v2803, %v2804
    %v2806 = vrot.slane %v2805, 1
    %v2807 = vadd.f32 %v2805, %v2806
    %v2808 = vmul.f32 %v2796, 0.0625
    %v2809 = vmul.f32 %v2807, 0.0625
    %v2810 = vmul.f32 %v2808, %v2808
    %v2811 = vsub.f32 %v2809, %v2810
    %v2812 = vmax.f32 %v2811, 0.0
    %v2813 = vsub.f32 %v2786, %v2808
    %v2814 = vsub.f32 %v2787, %v2808
    %v2815 = vadd.f32 %v2812, 1e-05
    %v2816 = vrsqrt.pop %v2815
    %v2817 = vmul.f32 %v2813, %v2816
    %v2818 = vmul.f32 %v2814, %v2816
    %v2820 = vlaneseq
    %v2821 = vshrl.u32 %v2820, 7
    %v2822 = vsub.s32 0, %v2821
    %v2823 = vrot.slane %v1613, %v2822
    %v2825 = vmul.f32 %v2817, %v2823
    %v2826 = vmul.f32 %v2818, %v2823
    %v2828 = vlaneseq
    %v2829 = vshrl.u32 %v2828, 7
    %v2830 = vsub.s32 0, %v2829
    %v2831 = vrot.slane %v1615, %v2830
    %v2833 = vadd.f32 %v2825, %v2831
    %v2834 = vadd.f32 %v2826, %v2831
    %v2835 = vpack.c.bf16 %v2834, %v2833
    %v2837 = vlaneseq
    %v2838 = vshrl.u32 %v2837, 7
    %v2839 = vsub.s32 0, %v2838
    %v2840 = vrot.slane %v1609, %v2839
    %v2846 = vunpack.c.l.b16 %v1587
    %v2847 = vunpack.c.l.b16 %v1588
    %v2848 = vunpack.c.l.b16 %v1589
    %v2849 = vunpack.c.l.b16 %v1590
    %v2850 = vpack.c.b16 %v2847, %v2846
    %v2851 = vpack.c.b16 %v2849, %v2848
    %v2855 = vsel %vm158, %v2835, 0
    %2857 = vmatprep.subr.bf16.mxu0 0
    %2858 = vmatpush1.bf16.msra.mxu0 0
    %2859 = vmatprep.subr.bf16.mxu0 0
    %2860 = vmatpush1.bf16.msra.mxu0 0
    %2861 = vmatprep.subr.bf16.mxu0 0
    %2862 = vmatpush1.bf16.msra.mxu0 0
    %2863 = vmatprep.subr.bf16.mxu0 0
    %2864 = vmatpush1.bf16.msra.mxu0 0
    %2865 = vmatprep.subr.bf16.mxu0 0
    %2866 = vmatpush1.bf16.msra.mxu0 0
    %2867 = vmatprep.subr.bf16.mxu0 0
    %2868 = vmatpush1.bf16.msra.mxu0 0
    %2869 = vmatprep.subr.bf16.mxu0 0
    %2870 = vmatpush1.bf16.msra.mxu0 %v2851
    %2871 = vmatprep.subr.bf16.mxu0 0
    %2872 = vmatpush1.bf16.msra.mxu0 %v2850
    %2873 = vmatprep.subr.bf16.mxu0 0
    %2874 = vmatpush2.bf16.msra.mxu0 0
    %2875 = vmatprep.subr.bf16.mxu0 0
    %2876 = vmatpush2.bf16.msra.mxu0 0
    %2877 = vmatprep.subr.bf16.mxu0 0
    %2878 = vmatpush2.bf16.msra.mxu0 0
    %2879 = vmatprep.subr.bf16.mxu0 0
    %2880 = vmatpush2.bf16.msra.mxu0 0
    %2881 = vmatprep.subr.bf16.mxu0 0
    %2882 = vmatpush2.bf16.msra.mxu0 0
    %2883 = vmatprep.subr.bf16.mxu0 0
    %2884 = vmatpush2.bf16.msra.mxu0 0
    %2885 = vmatprep.subr.bf16.mxu0 0
    %2886 = vmatpush2.bf16.msra.mxu0 0
    %2887 = vmatprep.subr.bf16.mxu0 0
    %2888 = vmatpush2.bf16.msra.mxu0 0
    %2889 = vmatprep.mubr.bf16.mxu0 0
    %2890 = vmatmul.mubr.bf16.gmra.mxu0 %v2855
    %v2891 = vpop.f32.mrf.mxu0
    %v2892 = vadd.f32 %v2840, %v2891
    %v2893 = vpop.f32.mrf.mxu0
    %v2894 = vpop.f32.mrf.mxu0
    %v2895 = vadd.f32 %v2840, %v2894
    %v2896 = vpop.f32.mrf.mxu0
    %2897 = vdwg.mxu0
    %v2898 = vmul.f32 %v2892, %v2892
    %v2899 = vmul.f32 %v2895, %v2895
    %v2900 = vmul.f32 %v2892, %v2898
    %v2901 = vmul.f32 %v2895, %v2899
    %v2902 = vmul.f32 %v2900, 0.044715
    %v2903 = vmul.f32 %v2901, 0.044715
    %v2904 = vadd.f32 %v2892, %v2902
    %v2905 = vadd.f32 %v2895, %v2903
    %v2906 = vmul.f32 %v2904, 0.7978846
    %v2907 = vmul.f32 %v2905, 0.7978846
    %v2908 = vtanh.pop %v2906
    %v2909 = vtanh.pop %v2907
    %v2910 = vadd.f32 %v2908, 1.0
    %v2911 = vadd.f32 %v2909, 1.0
    %v2912 = vmul.f32 %v2910, 0.5
    %v2913 = vmul.f32 %v2911, 0.5
    %v2914 = vmul.f32 %v2892, %v2912
    %v2915 = vmul.f32 %v2895, %v2913
    %v2916 = vpack.c.bf16 %v2915, %v2914
    %v2918 = vlaneseq
    %v2919 = vshrl.u32 %v2918, 7
    %v2920 = vsub.s32 0, %v2919
    %v2921 = vrot.slane %v1611, %v2920
    %v2931 = vunpack.c.l.b16 %v1592
    %v2932 = vunpack.c.l.b16 %v1593
    %v2933 = vunpack.c.l.b16 %v1594
    %v2934 = vunpack.c.l.b16 %v1595
    %v2935 = vunpack.c.l.b16 %v1596
    %v2936 = vunpack.c.l.b16 %v1597
    %v2937 = vunpack.c.l.b16 %v1598
    %v2938 = vunpack.c.l.b16 %v1599
    %v2939 = vpack.c.b16 %v2932, %v2931
    %v2940 = vpack.c.b16 %v2934, %v2933
    %v2941 = vpack.c.b16 %v2936, %v2935
    %v2942 = vpack.c.b16 %v2938, %v2937
    %v2948 = vsel %vm1472, %v2916, 0
    %2950 = vmatprep.subr.bf16.mxu0 0
    %2951 = vmatpush1.bf16.msra.mxu0 0
    %2952 = vmatprep.subr.bf16.mxu0 0
    %2953 = vmatpush1.bf16.msra.mxu0 0
    %2954 = vmatprep.subr.bf16.mxu0 0
    %2955 = vmatpush1.bf16.msra.mxu0 0
    %2956 = vmatprep.subr.bf16.mxu0 0
    %2957 = vmatpush1.bf16.msra.mxu0 0
    %2958 = vmatprep.subr.bf16.mxu0 0
    %2959 = vmatpush1.bf16.msra.mxu0 %v2942
    %2960 = vmatprep.subr.bf16.mxu0 0
    %2961 = vmatpush1.bf16.msra.mxu0 %v2941
    %2962 = vmatprep.subr.bf16.mxu0 0
    %2963 = vmatpush1.bf16.msra.mxu0 %v2940
    %2964 = vmatprep.subr.bf16.mxu0 0
    %2965 = vmatpush1.bf16.msra.mxu0 %v2939
    %2966 = vmatprep.subr.bf16.mxu0 0
    %2967 = vmatpush2.bf16.msra.mxu0 0
    %2968 = vmatprep.subr.bf16.mxu0 0
    %2969 = vmatpush2.bf16.msra.mxu0 0
    %2970 = vmatprep.subr.bf16.mxu0 0
    %2971 = vmatpush2.bf16.msra.mxu0 0
    %2972 = vmatprep.subr.bf16.mxu0 0
    %2973 = vmatpush2.bf16.msra.mxu0 0
    %2974 = vmatprep.subr.bf16.mxu0 0
    %2975 = vmatpush2.bf16.msra.mxu0 0
    %2976 = vmatprep.subr.bf16.mxu0 0
    %2977 = vmatpush2.bf16.msra.mxu0 0
    %2978 = vmatprep.subr.bf16.mxu0 0
    %2979 = vmatpush2.bf16.msra.mxu0 0
    %2980 = vmatprep.subr.bf16.mxu0 0
    %2981 = vmatpush2.bf16.msra.mxu0 0
    %2982 = vmatprep.mubr.bf16.mxu0 0
    %2983 = vmatmul.mubr.bf16.gmra.mxu0 %v2948
    %v2984 = vpop.f32.mrf.mxu0
    %v2985 = vadd.f32 %v2921, %v2984
    %v2986 = vpop.f32.mrf.mxu0
    %v2987 = vpop.f32.mrf.mxu0
    %v2988 = vadd.f32 %v2921, %v2987
    %v2989 = vpop.f32.mrf.mxu0
    %2990 = vdwg.mxu0
    %v2991 = vadd.f32 %v2833, %v2985
    %v2992 = vadd.f32 %v2834, %v2988
    %v2993 = vsel %vm158, %v2991, 0.0
    %v2994 = vsel %vm158, %v2992, 0.0
    %v2995 = vadd.f32 %v2993, %v2994
    %v2996 = vrot.slane %v2995, 4
    %v2997 = vadd.f32 %v2995, %v2996
    %v2998 = vrot.slane %v2997, 2
    %v2999 = vadd.f32 %v2997, %v2998
    %v3000 = vrot.slane %v2999, 1
    %v3001 = vadd.f32 %v2999, %v3000
    %v3002 = vmul.f32 %v2991, %v2991
    %v3003 = vmul.f32 %v2992, %v2992
    %v3004 = vsel %vm158, %v3002, 0.0
    %v3005 = vsel %vm158, %v3003, 0.0
    %v3006 = vadd.f32 %v3004, %v3005
    %v3007 = vrot.slane %v3006, 4
    %v3008 = vadd.f32 %v3006, %v3007
    %v3009 = vrot.slane %v3008, 2
    %v3010 = vadd.f32 %v3008, %v3009
    %v3011 = vrot.slane %v3010, 1
    %v3012 = vadd.f32 %v3010, %v3011
    %v3013 = vmul.f32 %v3001, 0.0625
    %v3014 = vmul.f32 %v3012, 0.0625
    %v3015 = vmul.f32 %v3013, %v3013
    %v3016 = vsub.f32 %v3014, %v3015
    %v3017 = vmax.f32 %v3016, 0.0
    %v3018 = vsub.f32 %v2991, %v3013
    %v3019 = vsub.f32 %v2992, %v3013
    %v3020 = vadd.f32 %v3017, 1e-05
    %v3021 = vrsqrt.pop %v3020
    %v3022 = vmul.f32 %v3018, %v3021
    %v3023 = vmul.f32 %v3019, %v3021
    %v3025 = vlaneseq
    %v3026 = vshrl.u32 %v3025, 7
    %v3027 = vsub.s32 0, %v3026
    %v3028 = vrot.slane %v1617, %v3027
    %v3030 = vmul.f32 %v3022, %v3028
    %v3031 = vmul.f32 %v3023, %v3028
    %v3033 = vlaneseq
    %v3034 = vshrl.u32 %v3033, 7
    %v3035 = vsub.s32 0, %v3034
    %v3036 = vrot.slane %v1619, %v3035
    %v3038 = vadd.f32 %v3030, %v3036
    %v3039 = vadd.f32 %v3031, %v3036
    %3040 = vst.msk [vmem:[#allocation9] sm:$0xff] %vm158, %v3038
    %3041 = vst.msk [vmem:[#allocation9 + $0x8] sm:$0xff] %vm158, %v3039
    // Predicated region
    $region82: #{tpu_custom_call.1} parent=1 // pred_check
      _
    $region83: #{tpu_custom_call.1} parent=1 // pred_check_branch
      %3043 = sbr.rel (0) target = $region85
    $region84: #{tpu_custom_call.1} parent=1 // pred_region
      %s3045 = ssub.s32 256, 256
      %3046 = vsyncadd [#allocation5], %s3045
      %s3047 = sshll.u32 [#allocation9], 4
      %s3048 = int_to_ptr.vmem [resolvable:$true] %s3047
      %3053 = dma.vmem_to_hbm [thread:$0]  %s3048, 256, %s17, [#allocation5], 128, 128, 8
    $region85: #{tpu_custom_call.1} parent=1 // pred_fallthru
      _
    // Predicated region
    $region86: #{tpu_custom_call.1} parent=1 // pred_check
      _
    $region87: #{tpu_custom_call.1} parent=1 // pred_check_branch
      %3055 = sbr.rel (0) target = $region89
    $region88: #{tpu_custom_call.1} parent=1 // pred_region
      %3056 = dma.done [#allocation5], 256
    $region89: #{tpu_custom_call.1} parent=1 // pred_fallthru
      _
    %3057 = vsyncpa [#allocation4], 1
    %3058 = vsyncpa [#allocation7], 1
    %3059 = vsyncpa [#allocation5], 1

</llo_original>
